<compile_context>
chip_gen: v7x
topology: tpu7x:2x2x1
jax: 0.10.0
libtpu: 0.0.40
codegen_flags: <defaults>
</compile_context>

<pallas_src>
from functools import partial

import jax
import jax.numpy as jnp
from jax.experimental import pallas as pl
from jax.experimental.pallas import tpu as pltpu

DIM = 2          # channel count of x (forced by the module structure)
REDUCTION = 1    # so that DIM // REDUCTION >= 1
HID = DIM // REDUCTION
K = 7            # location-attention conv kernel size
PAD = K // 2


# -----------------------------------------------------------------------------
# Fused kernel:  out = locationAttention(featureAttention(x) * x) * (featureAttention(x) * x)
#   x block    : (1, C, H, W) f32 (VMEM)
#   params     : flat 1-D f32 arrays in SMEM
#   pad_ref    : VMEM scratch (2, H + 2*PAD, WP) holding the zero-padded
#                channel-mean / channel-max planes of out1; WP = W rounded up
#                to a multiple of 128 (lane-aligned halo buffer).
#                Data is stored at rows [PAD, PAD+H), cols [0, W); the left
#                halo is realized by a modular lane-roll into the zero columns
#                at the far end of the 128-wide buffer.
# -----------------------------------------------------------------------------
def mrab_kernel(x_ref, w1_ref, b1_ref, w2_ref, b2_ref, wsa_ref, bsa_ref,
                o_ref, pad_ref, *, H, W, WP):
    # ---------------- feature attention:  ca(concat(mean, max)) * x ----------
    xc = [x_ref[0, c] for c in range(DIM)]             # (H, W) f32 each
    avg = (xc[0] + xc[1]) * 0.5                        # channel mean (2 chans)
    mx = jnp.maximum(xc[0], xc[1])                     # channel max (values)
    feats = (avg, mx)

    hid = []                                           # 1x1 conv (2 -> HID) + ReLU
    for o in range(HID):
        a = w1_ref[2 * o] * feats[0] + w1_ref[2 * o + 1] * feats[1] + b1_ref[o]
        hid.append(jnp.maximum(a, 0.0))

    out1 = []                                          # 1x1 conv (HID -> DIM), then * x
    for c in range(DIM):
        a = w2_ref[c * HID] * hid[0]
        for k in range(1, HID):
            a = a + w2_ref[c * HID + k] * hid[k]
        out1.append((a + b2_ref[c]) * xc[c])           # (H, W), kept live for final mul

    # ------- build zero-padded conv input (channel mean/max of out1) in VMEM --
    pad_ref[...] = jnp.zeros_like(pad_ref)             # cheap memset of halo buffer
    m2 = (out1[0] + out1[1]) * 0.5
    x2 = jnp.maximum(out1[0], out1[1])
    pad_ref[0, PAD:PAD + H, 0:W] = m2                  # rows offset by PAD, lanes at 0
    pad_ref[1, PAD:PAD + H, 0:W] = x2

    # ---------------- location attention: 7x7 conv (2 -> 2), then * out1 -----
    acc = [jnp.zeros((H, WP), jnp.float32) for _ in range(2)]
    for ci in range(2):
        plane = pad_ref[ci]                            # (H + 2*PAD, WP)
        for kx in range(K):
            # one lane shift per (ci, kx); reused by all ky and both out-channels.
            # shifted[:, x] = plane[:, (x + kx - PAD) mod WP]; negative indices
            # wrap into the zero columns >= W, realizing the left/right halo.
            s = (PAD - kx) % WP
            sh = plane if s == 0 else pltpu.roll(plane, s, axis=1)
            for ky in range(K):
                rows = sh[ky:ky + H, :]                # sublane slice, lane-dense
                for co in range(2):
                    w = wsa_ref[((co * 2 + ci) * K + ky) * K + kx]
                    acc[co] = acc[co] + w * rows

    for co in range(2):
        att = acc[co][:, :W] + bsa_ref[co]             # bias added once, then slice
        o_ref[0, co] = att * out1[co]


# -----------------------------------------------------------------------------
# Wrapper
# -----------------------------------------------------------------------------
def mrab_forward(x, params):
    B, C, H, W = x.shape
    assert C == DIM
    # lane-aligned halo-buffer width (multiple of 128, >= W + 2*PAD and >= W + 3*PAD)
    WP = max(128, -(-(W + 3 * PAD) // 128) * 128)
    x = x.astype(jnp.float32)

    smem = pl.BlockSpec(memory_space=pltpu.MemorySpace.SMEM)
    flat = lambda a: jnp.asarray(a, jnp.float32).reshape(-1)

    return pl.pallas_call(
        partial(mrab_kernel, H=H, W=W, WP=WP),
        out_shape=jax.ShapeDtypeStruct((B, DIM, H, W), jnp.float32),
        grid=(B,),
        in_specs=[
            pl.BlockSpec((1, C, H, W), lambda b: (b, 0, 0, 0)),
            smem, smem, smem, smem, smem, smem,
        ],
        out_specs=pl.BlockSpec((1, DIM, H, W), lambda b: (b, 0, 0, 0)),
        scratch_shapes=[pltpu.VMEM((2, H + 2 * PAD, WP), jnp.float32)],
        compiler_params=pltpu.CompilerParams(dimension_semantics=("parallel",)),
    )(x, flat(params["w1"]), flat(params["b1"]), flat(params["w2"]),
      flat(params["b2"]), flat(params["w_sa"]), flat(params["b_sa"]))


# -----------------------------------------------------------------------------
# Pure-JAX reference (for correctness check)
# -----------------------------------------------------------------------------
def mrab_reference(x, params):
    avg = jnp.mean(x, axis=1, keepdims=True)
    mx = jnp.max(x, axis=1, keepdims=True)
    cat = jnp.concatenate([avg, mx], axis=1)
    h = jnp.einsum("oc,bchw->bohw", params["w1"], cat) + params["b1"].reshape(1, -1, 1, 1)
    h = jnp.maximum(h, 0.0)
    att = jnp.einsum("oc,bchw->bohw", params["w2"], h) + params["b2"].reshape(1, -1, 1, 1)
    out1 = att * x

    avg2 = jnp.mean(out1, axis=1, keepdims=True)
    mx2 = jnp.max(out1, axis=1, keepdims=True)
    x2 = jnp.concatenate([avg2, mx2], axis=1)
    sa = jax.lax.conv_general_dilated(
        x2, params["w_sa"], window_strides=(1, 1), padding="SAME",
        dimension_numbers=("NCHW", "OIHW", "NCHW"),
    ) + params["b_sa"].reshape(1, -1, 1, 1)
    return sa * out1


if __name__ == "__main__":
    B, C, H, W = 2, DIM, 16, 16

    key = jax.random.PRNGKey(0)
    k = jax.random.split(key, 7)
    params = {
        "w1": jax.random.normal(k[0], (HID, 2), jnp.float32) * 0.5,
        "b1": jax.random.normal(k[1], (HID,), jnp.float32) * 0.1,
        "w2": jax.random.normal(k[2], (DIM, HID), jnp.float32) * 0.5,
        "b2": jax.random.normal(k[3], (DIM,), jnp.float32) * 0.1,
        "w_sa": jax.random.normal(k[4], (2, 2, K, K), jnp.float32) * 0.1,
        "b_sa": jax.random.normal(k[5], (2,), jnp.float32) * 0.1,
    }
    x = jax.random.normal(k[6], (B, C, H, W), jnp.float32)

    out = jax.block_until_ready(mrab_forward(x, params))

    ref = mrab_reference(x, params)
    assert out.shape == (B, DIM, H, W)
    err = float(jnp.max(jnp.abs(out - ref)))
    assert jnp.allclose(out, ref, rtol=1e-4, atol=1e-4), err

    print("KERNEL_OK")
</pallas_src>

<mosaic_0001>
module attributes {stable_mosaic.version = 11 : i64} {
  func.func @mrab_kernel(%arg0: i32, %arg1: memref<1x2x16x16xf32, #tpu.memory_space<vmem>>, %arg2: memref<4xf32, #tpu.memory_space<smem>>, %arg3: memref<2xf32, #tpu.memory_space<smem>>, %arg4: memref<4xf32, #tpu.memory_space<smem>>, %arg5: memref<2xf32, #tpu.memory_space<smem>>, %arg6: memref<196xf32, #tpu.memory_space<smem>>, %arg7: memref<2xf32, #tpu.memory_space<smem>>, %arg8: memref<1x2x16x16xf32, #tpu.memory_space<vmem>>, %arg9: memref<2x22x128xf32, #tpu.memory_space<vmem>>) attributes {dimension_semantics = [#tpu.dimension_semantics<parallel>], iteration_bounds = array<i64: 2>, scalar_prefetch = 0 : i64, scratch_operands = 1 : i64, tpu.core_type = #tpu.core_type<tc>, window_params = [{transform_indices = @transform_0, window_bounds = array<i64: 1, 2, 16, 16>}, {transform_indices = @transform_1, window_bounds = array<i64: 4>}, {transform_indices = @transform_2, window_bounds = array<i64: 2>}, {transform_indices = @transform_3, window_bounds = array<i64: 4>}, {transform_indices = @transform_4, window_bounds = array<i64: 2>}, {transform_indices = @transform_5, window_bounds = array<i64: 196>}, {transform_indices = @transform_6, window_bounds = array<i64: 2>}, {transform_indices = @transform_7, window_bounds = array<i64: 1, 2, 16, 16>}]} {
    %c0 = arith.constant 0 : index
    %c0_0 = arith.constant 0 : index
    %c0_1 = arith.constant 0 : index
    %c0_2 = arith.constant 0 : index
    %0 = vector.load %arg1[%c0, %c0_0, %c0_1, %c0_2] : memref<1x2x16x16xf32, #tpu.memory_space<vmem>>, vector<1x1x16x16xf32>
    %1 = vector.shape_cast %0 : vector<1x1x16x16xf32> to vector<16x16xf32>
    %c0_3 = arith.constant 0 : index
    %c1 = arith.constant 1 : index
    %c0_4 = arith.constant 0 : index
    %c0_5 = arith.constant 0 : index
    %2 = vector.load %arg1[%c0_3, %c1, %c0_4, %c0_5] : memref<1x2x16x16xf32, #tpu.memory_space<vmem>>, vector<1x1x16x16xf32>
    %3 = vector.shape_cast %2 : vector<1x1x16x16xf32> to vector<16x16xf32>
    %4 = arith.addf %1, %3 : vector<16x16xf32>
    %cst = arith.constant 5.000000e-01 : f32
    %5 = vector.broadcast %cst : f32 to vector<16x16xf32>
    %6 = arith.mulf %4, %5 : vector<16x16xf32>
    %7 = arith.maximumf %1, %3 : vector<16x16xf32>
    %c0_6 = arith.constant 0 : index
    %8 = memref.load %arg2[%c0_6] : memref<4xf32, #tpu.memory_space<smem>>
    %9 = vector.broadcast %8 : f32 to vector<16x16xf32>
    %10 = arith.mulf %9, %6 : vector<16x16xf32>
    %c1_7 = arith.constant 1 : index
    %11 = memref.load %arg2[%c1_7] : memref<4xf32, #tpu.memory_space<smem>>
    %12 = vector.broadcast %11 : f32 to vector<16x16xf32>
    %13 = arith.mulf %12, %7 : vector<16x16xf32>
    %14 = arith.addf %10, %13 : vector<16x16xf32>
    %c0_8 = arith.constant 0 : index
    %15 = memref.load %arg3[%c0_8] : memref<2xf32, #tpu.memory_space<smem>>
    %16 = vector.broadcast %15 : f32 to vector<16x16xf32>
    %17 = arith.addf %14, %16 : vector<16x16xf32>
    %cst_9 = arith.constant 0.000000e+00 : f32
    %18 = vector.broadcast %cst_9 : f32 to vector<16x16xf32>
    %19 = arith.maximumf %17, %18 : vector<16x16xf32>
    %c2 = arith.constant 2 : index
    %20 = memref.load %arg2[%c2] : memref<4xf32, #tpu.memory_space<smem>>
    %21 = vector.broadcast %20 : f32 to vector<16x16xf32>
    %22 = arith.mulf %21, %6 : vector<16x16xf32>
    %c3 = arith.constant 3 : index
    %23 = memref.load %arg2[%c3] : memref<4xf32, #tpu.memory_space<smem>>
    %24 = vector.broadcast %23 : f32 to vector<16x16xf32>
    %25 = arith.mulf %24, %7 : vector<16x16xf32>
    %26 = arith.addf %22, %25 : vector<16x16xf32>
    %c1_10 = arith.constant 1 : index
    %27 = memref.load %arg3[%c1_10] : memref<2xf32, #tpu.memory_space<smem>>
    %28 = vector.broadcast %27 : f32 to vector<16x16xf32>
    %29 = arith.addf %26, %28 : vector<16x16xf32>
    %cst_11 = arith.constant 0.000000e+00 : f32
    %30 = vector.broadcast %cst_11 : f32 to vector<16x16xf32>
    %31 = arith.maximumf %29, %30 : vector<16x16xf32>
    %c0_12 = arith.constant 0 : index
    %32 = memref.load %arg4[%c0_12] : memref<4xf32, #tpu.memory_space<smem>>
    %33 = vector.broadcast %32 : f32 to vector<16x16xf32>
    %34 = arith.mulf %33, %19 : vector<16x16xf32>
    %c1_13 = arith.constant 1 : index
    %35 = memref.load %arg4[%c1_13] : memref<4xf32, #tpu.memory_space<smem>>
    %36 = vector.broadcast %35 : f32 to vector<16x16xf32>
    %37 = arith.mulf %36, %31 : vector<16x16xf32>
    %38 = arith.addf %34, %37 : vector<16x16xf32>
    %c0_14 = arith.constant 0 : index
    %39 = memref.load %arg5[%c0_14] : memref<2xf32, #tpu.memory_space<smem>>
    %40 = vector.broadcast %39 : f32 to vector<16x16xf32>
    %41 = arith.addf %38, %40 : vector<16x16xf32>
    %42 = arith.mulf %41, %1 : vector<16x16xf32>
    %c2_15 = arith.constant 2 : index
    %43 = memref.load %arg4[%c2_15] : memref<4xf32, #tpu.memory_space<smem>>
    %44 = vector.broadcast %43 : f32 to vector<16x16xf32>
    %45 = arith.mulf %44, %19 : vector<16x16xf32>
    %c3_16 = arith.constant 3 : index
    %46 = memref.load %arg4[%c3_16] : memref<4xf32, #tpu.memory_space<smem>>
    %47 = vector.broadcast %46 : f32 to vector<16x16xf32>
    %48 = arith.mulf %47, %31 : vector<16x16xf32>
    %49 = arith.addf %45, %48 : vector<16x16xf32>
    %c1_17 = arith.constant 1 : index
    %50 = memref.load %arg5[%c1_17] : memref<2xf32, #tpu.memory_space<smem>>
    %51 = vector.broadcast %50 : f32 to vector<16x16xf32>
    %52 = arith.addf %49, %51 : vector<16x16xf32>
    %53 = arith.mulf %52, %3 : vector<16x16xf32>
    %cst_18 = arith.constant 0.000000e+00 : f32
    %54 = vector.broadcast %cst_18 : f32 to vector<2x22x128xf32>
    %c0_19 = arith.constant 0 : index
    %c0_20 = arith.constant 0 : index
    %c0_21 = arith.constant 0 : index
    %55 = vector.load %arg9[%c0_19, %c0_20, %c0_21] : memref<2x22x128xf32, #tpu.memory_space<vmem>>, vector<2x22x128xf32>
    tpu.vector_store %arg9[%c0_19, %c0_20, %c0_21], %54 {strides = array<i32>} : memref<2x22x128xf32, #tpu.memory_space<vmem>>, vector<2x22x128xf32>,
    %56 = arith.addf %42, %53 : vector<16x16xf32>
    %cst_22 = arith.constant 5.000000e-01 : f32
    %57 = vector.broadcast %cst_22 : f32 to vector<16x16xf32>
    %58 = arith.mulf %56, %57 : vector<16x16xf32>
    %59 = arith.maximumf %42, %53 : vector<16x16xf32>
    %c0_23 = arith.constant 0 : index
    %c3_24 = arith.constant 3 : index
    %c0_25 = arith.constant 0 : index
    %60 = vector.load %arg9[%c0_23, %c3_24, %c0_25] : memref<2x22x128xf32, #tpu.memory_space<vmem>>, vector<1x16x16xf32>
    %61 = vector.shape_cast %60 : vector<1x16x16xf32> to vector<16x16xf32>
    %62 = vector.shape_cast %58 : vector<16x16xf32> to vector<1x16x16xf32>
    tpu.vector_store %arg9[%c0_23, %c3_24, %c0_25], %62 {strides = array<i32>} : memref<2x22x128xf32, #tpu.memory_space<vmem>>, vector<1x16x16xf32>,
    %c1_26 = arith.constant 1 : index
    %c3_27 = arith.constant 3 : index
    %c0_28 = arith.constant 0 : index
    %63 = vector.load %arg9[%c1_26, %c3_27, %c0_28] : memref<2x22x128xf32, #tpu.memory_space<vmem>>, vector<1x16x16xf32>
    %64 = vector.shape_cast %63 : vector<1x16x16xf32> to vector<16x16xf32>
    %65 = vector.shape_cast %59 : vector<16x16xf32> to vector<1x16x16xf32>
    tpu.vector_store %arg9[%c1_26, %c3_27, %c0_28], %65 {strides = array<i32>} : memref<2x22x128xf32, #tpu.memory_space<vmem>>, vector<1x16x16xf32>,
    %cst_29 = arith.constant 0.000000e+00 : f32
    %66 = vector.broadcast %cst_29 : f32 to vector<16x128xf32>
    %cst_30 = arith.constant 0.000000e+00 : f32
    %67 = vector.broadcast %cst_30 : f32 to vector<16x128xf32>
    %c0_31 = arith.constant 0 : index
    %c0_32 = arith.constant 0 : index
    %c0_33 = arith.constant 0 : index
    %68 = vector.load %arg9[%c0_31, %c0_32, %c0_33] : memref<2x22x128xf32, #tpu.memory_space<vmem>>, vector<1x22x128xf32>
    %69 = vector.shape_cast %68 : vector<1x22x128xf32> to vector<22x128xf32>
    %c3_i32 = arith.constant 3 : i32
    %70 = tpu.dynamic_rotate %69 by %c3_i32 dim 1 : vector<22x128xf32>, i32 -> vector<22x128xf32>
    %71 = vector.extract_strided_slice %70 {offsets = [0, 0], sizes = [16, 128], strides = [1, 1]} : vector<22x128xf32> to vector<16x128xf32>
    %c0_34 = arith.constant 0 : index
    %72 = memref.load %arg6[%c0_34] : memref<196xf32, #tpu.memory_space<smem>>
    %73 = vector.broadcast %72 : f32 to vector<16x128xf32>
    %74 = arith.mulf %73, %71 : vector<16x128xf32>
    %75 = arith.addf %66, %74 : vector<16x128xf32>
    %c98 = arith.constant 98 : index
    %76 = memref.load %arg6[%c98] : memref<196xf32, #tpu.memory_space<smem>>
    %77 = vector.broadcast %76 : f32 to vector<16x128xf32>
    %78 = arith.mulf %77, %71 : vector<16x128xf32>
    %79 = arith.addf %67, %78 : vector<16x128xf32>
    %80 = vector.extract_strided_slice %70 {offsets = [1, 0], sizes = [16, 128], strides = [1, 1]} : vector<22x128xf32> to vector<16x128xf32>
    %c7 = arith.constant 7 : index
    %81 = memref.load %arg6[%c7] : memref<196xf32, #tpu.memory_space<smem>>
    %82 = vector.broadcast %81 : f32 to vector<16x128xf32>
    %83 = arith.mulf %82, %80 : vector<16x128xf32>
    %84 = arith.addf %75, %83 : vector<16x128xf32>
    %c105 = arith.constant 105 : index
    %85 = memref.load %arg6[%c105] : memref<196xf32, #tpu.memory_space<smem>>
    %86 = vector.broadcast %85 : f32 to vector<16x128xf32>
    %87 = arith.mulf %86, %80 : vector<16x128xf32>
    %88 = arith.addf %79, %87 : vector<16x128xf32>
    %89 = vector.extract_strided_slice %70 {offsets = [2, 0], sizes = [16, 128], strides = [1, 1]} : vector<22x128xf32> to vector<16x128xf32>
    %c14 = arith.constant 14 : index
    %90 = memref.load %arg6[%c14] : memref<196xf32, #tpu.memory_space<smem>>
    %91 = vector.broadcast %90 : f32 to vector<16x128xf32>
    %92 = arith.mulf %91, %89 : vector<16x128xf32>
    %93 = arith.addf %84, %92 : vector<16x128xf32>
    %c112 = arith.constant 112 : index
    %94 = memref.load %arg6[%c112] : memref<196xf32, #tpu.memory_space<smem>>
    %95 = vector.broadcast %94 : f32 to vector<16x128xf32>
    %96 = arith.mulf %95, %89 : vector<16x128xf32>
    %97 = arith.addf %88, %96 : vector<16x128xf32>
    %98 = vector.extract_strided_slice %70 {offsets = [3, 0], sizes = [16, 128], strides = [1, 1]} : vector<22x128xf32> to vector<16x128xf32>
    %c21 = arith.constant 21 : index
    %99 = memref.load %arg6[%c21] : memref<196xf32, #tpu.memory_space<smem>>
    %100 = vector.broadcast %99 : f32 to vector<16x128xf32>
    %101 = arith.mulf %100, %98 : vector<16x128xf32>
    %102 = arith.addf %93, %101 : vector<16x128xf32>
    %c119 = arith.constant 119 : index
    %103 = memref.load %arg6[%c119] : memref<196xf32, #tpu.memory_space<smem>>
    %104 = vector.broadcast %103 : f32 to vector<16x128xf32>
    %105 = arith.mulf %104, %98 : vector<16x128xf32>
    %106 = arith.addf %97, %105 : vector<16x128xf32>
    %107 = vector.extract_strided_slice %70 {offsets = [4, 0], sizes = [16, 128], strides = [1, 1]} : vector<22x128xf32> to vector<16x128xf32>
    %c28 = arith.constant 28 : index
    %108 = memref.load %arg6[%c28] : memref<196xf32, #tpu.memory_space<smem>>
    %109 = vector.broadcast %108 : f32 to vector<16x128xf32>
    %110 = arith.mulf %109, %107 : vector<16x128xf32>
    %111 = arith.addf %102, %110 : vector<16x128xf32>
    %c126 = arith.constant 126 : index
    %112 = memref.load %arg6[%c126] : memref<196xf32, #tpu.memory_space<smem>>
    %113 = vector.broadcast %112 : f32 to vector<16x128xf32>
    %114 = arith.mulf %113, %107 : vector<16x128xf32>
    %115 = arith.addf %106, %114 : vector<16x128xf32>
    %116 = vector.extract_strided_slice %70 {offsets = [5, 0], sizes = [16, 128], strides = [1, 1]} : vector<22x128xf32> to vector<16x128xf32>
    %c35 = arith.constant 35 : index
    %117 = memref.load %arg6[%c35] : memref<196xf32, #tpu.memory_space<smem>>
    %118 = vector.broadcast %117 : f32 to vector<16x128xf32>
    %119 = arith.mulf %118, %116 : vector<16x128xf32>
    %120 = arith.addf %111, %119 : vector<16x128xf32>
    %c133 = arith.constant 133 : index
    %121 = memref.load %arg6[%c133] : memref<196xf32, #tpu.memory_space<smem>>
    %122 = vector.broadcast %121 : f32 to vector<16x128xf32>
    %123 = arith.mulf %122, %116 : vector<16x128xf32>
    %124 = arith.addf %115, %123 : vector<16x128xf32>
    %125 = vector.extract_strided_slice %70 {offsets = [6, 0], sizes = [16, 128], strides = [1, 1]} : vector<22x128xf32> to vector<16x128xf32>
    %c42 = arith.constant 42 : index
    %126 = memref.load %arg6[%c42] : memref<196xf32, #tpu.memory_space<smem>>
    %127 = vector.broadcast %126 : f32 to vector<16x128xf32>
    %128 = arith.mulf %127, %125 : vector<16x128xf32>
    %129 = arith.addf %120, %128 : vector<16x128xf32>
    %c140 = arith.constant 140 : index
    %130 = memref.load %arg6[%c140] : memref<196xf32, #tpu.memory_space<smem>>
    %131 = vector.broadcast %130 : f32 to vector<16x128xf32>
    %132 = arith.mulf %131, %125 : vector<16x128xf32>
    %133 = arith.addf %124, %132 : vector<16x128xf32>
    %c2_i32 = arith.constant 2 : i32
    %134 = tpu.dynamic_rotate %69 by %c2_i32 dim 1 : vector<22x128xf32>, i32 -> vector<22x128xf32>
    %135 = vector.extract_strided_slice %134 {offsets = [0, 0], sizes = [16, 128], strides = [1, 1]} : vector<22x128xf32> to vector<16x128xf32>
    %c1_35 = arith.constant 1 : index
    %136 = memref.load %arg6[%c1_35] : memref<196xf32, #tpu.memory_space<smem>>
    %137 = vector.broadcast %136 : f32 to vector<16x128xf32>
    %138 = arith.mulf %137, %135 : vector<16x128xf32>
    %139 = arith.addf %129, %138 : vector<16x128xf32>
    %c99 = arith.constant 99 : index
    %140 = memref.load %arg6[%c99] : memref<196xf32, #tpu.memory_space<smem>>
    %141 = vector.broadcast %140 : f32 to vector<16x128xf32>
    %142 = arith.mulf %141, %135 : vector<16x128xf32>
    %143 = arith.addf %133, %142 : vector<16x128xf32>
    %144 = vector.extract_strided_slice %134 {offsets = [1, 0], sizes = [16, 128], strides = [1, 1]} : vector<22x128xf32> to vector<16x128xf32>
    %c8 = arith.constant 8 : index
    %145 = memref.load %arg6[%c8] : memref<196xf32, #tpu.memory_space<smem>>
    %146 = vector.broadcast %145 : f32 to vector<16x128xf32>
    %147 = arith.mulf %146, %144 : vector<16x128xf32>
    %148 = arith.addf %139, %147 : vector<16x128xf32>
    %c106 = arith.constant 106 : index
    %149 = memref.load %arg6[%c106] : memref<196xf32, #tpu.memory_space<smem>>
    %150 = vector.broadcast %149 : f32 to vector<16x128xf32>
    %151 = arith.mulf %150, %144 : vector<16x128xf32>
    %152 = arith.addf %143, %151 : vector<16x128xf32>
    %153 = vector.extract_strided_slice %134 {offsets = [2, 0], sizes = [16, 128], strides = [1, 1]} : vector<22x128xf32> to vector<16x128xf32>
    %c15 = arith.constant 15 : index
    %154 = memref.load %arg6[%c15] : memref<196xf32, #tpu.memory_space<smem>>
    %155 = vector.broadcast %154 : f32 to vector<16x128xf32>
    %156 = arith.mulf %155, %153 : vector<16x128xf32>
    %157 = arith.addf %148, %156 : vector<16x128xf32>
    %c113 = arith.constant 113 : index
    %158 = memref.load %arg6[%c113] : memref<196xf32, #tpu.memory_space<smem>>
    %159 = vector.broadcast %158 : f32 to vector<16x128xf32>
    %160 = arith.mulf %159, %153 : vector<16x128xf32>
    %161 = arith.addf %152, %160 : vector<16x128xf32>
    %162 = vector.extract_strided_slice %134 {offsets = [3, 0], sizes = [16, 128], strides = [1, 1]} : vector<22x128xf32> to vector<16x128xf32>
    %c22 = arith.constant 22 : index
    %163 = memref.load %arg6[%c22] : memref<196xf32, #tpu.memory_space<smem>>
    %164 = vector.broadcast %163 : f32 to vector<16x128xf32>
    %165 = arith.mulf %164, %162 : vector<16x128xf32>
    %166 = arith.addf %157, %165 : vector<16x128xf32>
    %c120 = arith.constant 120 : index
    %167 = memref.load %arg6[%c120] : memref<196xf32, #tpu.memory_space<smem>>
    %168 = vector.broadcast %167 : f32 to vector<16x128xf32>
    %169 = arith.mulf %168, %162 : vector<16x128xf32>
    %170 = arith.addf %161, %169 : vector<16x128xf32>
    %171 = vector.extract_strided_slice %134 {offsets = [4, 0], sizes = [16, 128], strides = [1, 1]} : vector<22x128xf32> to vector<16x128xf32>
    %c29 = arith.constant 29 : index
    %172 = memref.load %arg6[%c29] : memref<196xf32, #tpu.memory_space<smem>>
    %173 = vector.broadcast %172 : f32 to vector<16x128xf32>
    %174 = arith.mulf %173, %171 : vector<16x128xf32>
    %175 = arith.addf %166, %174 : vector<16x128xf32>
    %c127 = arith.constant 127 : index
    %176 = memref.load %arg6[%c127] : memref<196xf32, #tpu.memory_space<smem>>
    %177 = vector.broadcast %176 : f32 to vector<16x128xf32>
    %178 = arith.mulf %177, %171 : vector<16x128xf32>
    %179 = arith.addf %170, %178 : vector<16x128xf32>
    %180 = vector.extract_strided_slice %134 {offsets = [5, 0], sizes = [16, 128], strides = [1, 1]} : vector<22x128xf32> to vector<16x128xf32>
    %c36 = arith.constant 36 : index
    %181 = memref.load %arg6[%c36] : memref<196xf32, #tpu.memory_space<smem>>
    %182 = vector.broadcast %181 : f32 to vector<16x128xf32>
    %183 = arith.mulf %182, %180 : vector<16x128xf32>
    %184 = arith.addf %175, %183 : vector<16x128xf32>
    %c134 = arith.constant 134 : index
    %185 = memref.load %arg6[%c134] : memref<196xf32, #tpu.memory_space<smem>>
    %186 = vector.broadcast %185 : f32 to vector<16x128xf32>
    %187 = arith.mulf %186, %180 : vector<16x128xf32>
    %188 = arith.addf %179, %187 : vector<16x128xf32>
    %189 = vector.extract_strided_slice %134 {offsets = [6, 0], sizes = [16, 128], strides = [1, 1]} : vector<22x128xf32> to vector<16x128xf32>
    %c43 = arith.constant 43 : index
    %190 = memref.load %arg6[%c43] : memref<196xf32, #tpu.memory_space<smem>>
    %191 = vector.broadcast %190 : f32 to vector<16x128xf32>
    %192 = arith.mulf %191, %189 : vector<16x128xf32>
    %193 = arith.addf %184, %192 : vector<16x128xf32>
    %c141 = arith.constant 141 : index
    %194 = memref.load %arg6[%c141] : memref<196xf32, #tpu.memory_space<smem>>
    %195 = vector.broadcast %194 : f32 to vector<16x128xf32>
    %196 = arith.mulf %195, %189 : vector<16x128xf32>
    %197 = arith.addf %188, %196 : vector<16x128xf32>
    %c1_i32 = arith.constant 1 : i32
    %198 = tpu.dynamic_rotate %69 by %c1_i32 dim 1 : vector<22x128xf32>, i32 -> vector<22x128xf32>
    %199 = vector.extract_strided_slice %198 {offsets = [0, 0], sizes = [16, 128], strides = [1, 1]} : vector<22x128xf32> to vector<16x128xf32>
    %c2_36 = arith.constant 2 : index
    %200 = memref.load %arg6[%c2_36] : memref<196xf32, #tpu.memory_space<smem>>
    %201 = vector.broadcast %200 : f32 to vector<16x128xf32>
    %202 = arith.mulf %201, %199 : vector<16x128xf32>
    %203 = arith.addf %193, %202 : vector<16x128xf32>
    %c100 = arith.constant 100 : index
    %204 = memref.load %arg6[%c100] : memref<196xf32, #tpu.memory_space<smem>>
    %205 = vector.broadcast %204 : f32 to vector<16x128xf32>
    %206 = arith.mulf %205, %199 : vector<16x128xf32>
    %207 = arith.addf %197, %206 : vector<16x128xf32>
    %208 = vector.extract_strided_slice %198 {offsets = [1, 0], sizes = [16, 128], strides = [1, 1]} : vector<22x128xf32> to vector<16x128xf32>
    %c9 = arith.constant 9 : index
    %209 = memref.load %arg6[%c9] : memref<196xf32, #tpu.memory_space<smem>>
    %210 = vector.broadcast %209 : f32 to vector<16x128xf32>
    %211 = arith.mulf %210, %208 : vector<16x128xf32>
    %212 = arith.addf %203, %211 : vector<16x128xf32>
    %c107 = arith.constant 107 : index
    %213 = memref.load %arg6[%c107] : memref<196xf32, #tpu.memory_space<smem>>
    %214 = vector.broadcast %213 : f32 to vector<16x128xf32>
    %215 = arith.mulf %214, %208 : vector<16x128xf32>
    %216 = arith.addf %207, %215 : vector<16x128xf32>
    %217 = vector.extract_strided_slice %198 {offsets = [2, 0], sizes = [16, 128], strides = [1, 1]} : vector<22x128xf32> to vector<16x128xf32>
    %c16 = arith.constant 16 : index
    %218 = memref.load %arg6[%c16] : memref<196xf32, #tpu.memory_space<smem>>
    %219 = vector.broadcast %218 : f32 to vector<16x128xf32>
    %220 = arith.mulf %219, %217 : vector<16x128xf32>
    %221 = arith.addf %212, %220 : vector<16x128xf32>
    %c114 = arith.constant 114 : index
    %222 = memref.load %arg6[%c114] : memref<196xf32, #tpu.memory_space<smem>>
    %223 = vector.broadcast %222 : f32 to vector<16x128xf32>
    %224 = arith.mulf %223, %217 : vector<16x128xf32>
    %225 = arith.addf %216, %224 : vector<16x128xf32>
    %226 = vector.extract_strided_slice %198 {offsets = [3, 0], sizes = [16, 128], strides = [1, 1]} : vector<22x128xf32> to vector<16x128xf32>
    %c23 = arith.constant 23 : index
    %227 = memref.load %arg6[%c23] : memref<196xf32, #tpu.memory_space<smem>>
    %228 = vector.broadcast %227 : f32 to vector<16x128xf32>
    %229 = arith.mulf %228, %226 : vector<16x128xf32>
    %230 = arith.addf %221, %229 : vector<16x128xf32>
    %c121 = arith.constant 121 : index
    %231 = memref.load %arg6[%c121] : memref<196xf32, #tpu.memory_space<smem>>
    %232 = vector.broadcast %231 : f32 to vector<16x128xf32>
    %233 = arith.mulf %232, %226 : vector<16x128xf32>
    %234 = arith.addf %225, %233 : vector<16x128xf32>
    %235 = vector.extract_strided_slice %198 {offsets = [4, 0], sizes = [16, 128], strides = [1, 1]} : vector<22x128xf32> to vector<16x128xf32>
    %c30 = arith.constant 30 : index
    %236 = memref.load %arg6[%c30] : memref<196xf32, #tpu.memory_space<smem>>
    %237 = vector.broadcast %236 : f32 to vector<16x128xf32>
    %238 = arith.mulf %237, %235 : vector<16x128xf32>
    %239 = arith.addf %230, %238 : vector<16x128xf32>
    %c128 = arith.constant 128 : index
    %240 = memref.load %arg6[%c128] : memref<196xf32, #tpu.memory_space<smem>>
    %241 = vector.broadcast %240 : f32 to vector<16x128xf32>
    %242 = arith.mulf %241, %235 : vector<16x128xf32>
    %243 = arith.addf %234, %242 : vector<16x128xf32>
    %244 = vector.extract_strided_slice %198 {offsets = [5, 0], sizes = [16, 128], strides = [1, 1]} : vector<22x128xf32> to vector<16x128xf32>
    %c37 = arith.constant 37 : index
    %245 = memref.load %arg6[%c37] : memref<196xf32, #tpu.memory_space<smem>>
    %246 = vector.broadcast %245 : f32 to vector<16x128xf32>
    %247 = arith.mulf %246, %244 : vector<16x128xf32>
    %248 = arith.addf %239, %247 : vector<16x128xf32>
    %c135 = arith.constant 135 : index
    %249 = memref.load %arg6[%c135] : memref<196xf32, #tpu.memory_space<smem>>
    %250 = vector.broadcast %249 : f32 to vector<16x128xf32>
    %251 = arith.mulf %250, %244 : vector<16x128xf32>
    %252 = arith.addf %243, %251 : vector<16x128xf32>
    %253 = vector.extract_strided_slice %198 {offsets = [6, 0], sizes = [16, 128], strides = [1, 1]} : vector<22x128xf32> to vector<16x128xf32>
    %c44 = arith.constant 44 : index
    %254 = memref.load %arg6[%c44] : memref<196xf32, #tpu.memory_space<smem>>
    %255 = vector.broadcast %254 : f32 to vector<16x128xf32>
    %256 = arith.mulf %255, %253 : vector<16x128xf32>
    %257 = arith.addf %248, %256 : vector<16x128xf32>
    %c142 = arith.constant 142 : index
    %258 = memref.load %arg6[%c142] : memref<196xf32, #tpu.memory_space<smem>>
    %259 = vector.broadcast %258 : f32 to vector<16x128xf32>
    %260 = arith.mulf %259, %253 : vector<16x128xf32>
    %261 = arith.addf %252, %260 : vector<16x128xf32>
    %262 = vector.extract_strided_slice %69 {offsets = [0, 0], sizes = [16, 128], strides = [1, 1]} : vector<22x128xf32> to vector<16x128xf32>
    %c3_37 = arith.constant 3 : index
    %263 = memref.load %arg6[%c3_37] : memref<196xf32, #tpu.memory_space<smem>>
    %264 = vector.broadcast %263 : f32 to vector<16x128xf32>
    %265 = arith.mulf %264, %262 : vector<16x128xf32>
    %266 = arith.addf %257, %265 : vector<16x128xf32>
    %c101 = arith.constant 101 : index
    %267 = memref.load %arg6[%c101] : memref<196xf32, #tpu.memory_space<smem>>
    %268 = vector.broadcast %267 : f32 to vector<16x128xf32>
    %269 = arith.mulf %268, %262 : vector<16x128xf32>
    %270 = arith.addf %261, %269 : vector<16x128xf32>
    %271 = vector.extract_strided_slice %69 {offsets = [1, 0], sizes = [16, 128], strides = [1, 1]} : vector<22x128xf32> to vector<16x128xf32>
    %c10 = arith.constant 10 : index
    %272 = memref.load %arg6[%c10] : memref<196xf32, #tpu.memory_space<smem>>
    %273 = vector.broadcast %272 : f32 to vector<16x128xf32>
    %274 = arith.mulf %273, %271 : vector<16x128xf32>
    %275 = arith.addf %266, %274 : vector<16x128xf32>
    %c108 = arith.constant 108 : index
    %276 = memref.load %arg6[%c108] : memref<196xf32, #tpu.memory_space<smem>>
    %277 = vector.broadcast %276 : f32 to vector<16x128xf32>
    %278 = arith.mulf %277, %271 : vector<16x128xf32>
    %279 = arith.addf %270, %278 : vector<16x128xf32>
    %280 = vector.extract_strided_slice %69 {offsets = [2, 0], sizes = [16, 128], strides = [1, 1]} : vector<22x128xf32> to vector<16x128xf32>
    %c17 = arith.constant 17 : index
    %281 = memref.load %arg6[%c17] : memref<196xf32, #tpu.memory_space<smem>>
    %282 = vector.broadcast %281 : f32 to vector<16x128xf32>
    %283 = arith.mulf %282, %280 : vector<16x128xf32>
    %284 = arith.addf %275, %283 : vector<16x128xf32>
    %c115 = arith.constant 115 : index
    %285 = memref.load %arg6[%c115] : memref<196xf32, #tpu.memory_space<smem>>
    %286 = vector.broadcast %285 : f32 to vector<16x128xf32>
    %287 = arith.mulf %286, %280 : vector<16x128xf32>
    %288 = arith.addf %279, %287 : vector<16x128xf32>
    %289 = vector.extract_strided_slice %69 {offsets = [3, 0], sizes = [16, 128], strides = [1, 1]} : vector<22x128xf32> to vector<16x128xf32>
    %c24 = arith.constant 24 : index
    %290 = memref.load %arg6[%c24] : memref<196xf32, #tpu.memory_space<smem>>
    %291 = vector.broadcast %290 : f32 to vector<16x128xf32>
    %292 = arith.mulf %291, %289 : vector<16x128xf32>
    %293 = arith.addf %284, %292 : vector<16x128xf32>
    %c122 = arith.constant 122 : index
    %294 = memref.load %arg6[%c122] : memref<196xf32, #tpu.memory_space<smem>>
    %295 = vector.broadcast %294 : f32 to vector<16x128xf32>
    %296 = arith.mulf %295, %289 : vector<16x128xf32>
    %297 = arith.addf %288, %296 : vector<16x128xf32>
    %298 = vector.extract_strided_slice %69 {offsets = [4, 0], sizes = [16, 128], strides = [1, 1]} : vector<22x128xf32> to vector<16x128xf32>
    %c31 = arith.constant 31 : index
    %299 = memref.load %arg6[%c31] : memref<196xf32, #tpu.memory_space<smem>>
    %300 = vector.broadcast %299 : f32 to vector<16x128xf32>
    %301 = arith.mulf %300, %298 : vector<16x128xf32>
    %302 = arith.addf %293, %301 : vector<16x128xf32>
    %c129 = arith.constant 129 : index
    %303 = memref.load %arg6[%c129] : memref<196xf32, #tpu.memory_space<smem>>
    %304 = vector.broadcast %303 : f32 to vector<16x128xf32>
    %305 = arith.mulf %304, %298 : vector<16x128xf32>
    %306 = arith.addf %297, %305 : vector<16x128xf32>
    %307 = vector.extract_strided_slice %69 {offsets = [5, 0], sizes = [16, 128], strides = [1, 1]} : vector<22x128xf32> to vector<16x128xf32>
    %c38 = arith.constant 38 : index
    %308 = memref.load %arg6[%c38] : memref<196xf32, #tpu.memory_space<smem>>
    %309 = vector.broadcast %308 : f32 to vector<16x128xf32>
    %310 = arith.mulf %309, %307 : vector<16x128xf32>
    %311 = arith.addf %302, %310 : vector<16x128xf32>
    %c136 = arith.constant 136 : index
    %312 = memref.load %arg6[%c136] : memref<196xf32, #tpu.memory_space<smem>>
    %313 = vector.broadcast %312 : f32 to vector<16x128xf32>
    %314 = arith.mulf %313, %307 : vector<16x128xf32>
    %315 = arith.addf %306, %314 : vector<16x128xf32>
    %316 = vector.extract_strided_slice %69 {offsets = [6, 0], sizes = [16, 128], strides = [1, 1]} : vector<22x128xf32> to vector<16x128xf32>
    %c45 = arith.constant 45 : index
    %317 = memref.load %arg6[%c45] : memref<196xf32, #tpu.memory_space<smem>>
    %318 = vector.broadcast %317 : f32 to vector<16x128xf32>
    %319 = arith.mulf %318, %316 : vector<16x128xf32>
    %320 = arith.addf %311, %319 : vector<16x128xf32>
    %c143 = arith.constant 143 : index
    %321 = memref.load %arg6[%c143] : memref<196xf32, #tpu.memory_space<smem>>
    %322 = vector.broadcast %321 : f32 to vector<16x128xf32>
    %323 = arith.mulf %322, %316 : vector<16x128xf32>
    %324 = arith.addf %315, %323 : vector<16x128xf32>
    %c127_i32 = arith.constant 127 : i32
    %325 = tpu.dynamic_rotate %69 by %c127_i32 dim 1 : vector<22x128xf32>, i32 -> vector<22x128xf32>
    %326 = vector.extract_strided_slice %325 {offsets = [0, 0], sizes = [16, 128], strides = [1, 1]} : vector<22x128xf32> to vector<16x128xf32>
    %c4 = arith.constant 4 : index
    %327 = memref.load %arg6[%c4] : memref<196xf32, #tpu.memory_space<smem>>
    %328 = vector.broadcast %327 : f32 to vector<16x128xf32>
    %329 = arith.mulf %328, %326 : vector<16x128xf32>
    %330 = arith.addf %320, %329 : vector<16x128xf32>
    %c102 = arith.constant 102 : index
    %331 = memref.load %arg6[%c102] : memref<196xf32, #tpu.memory_space<smem>>
    %332 = vector.broadcast %331 : f32 to vector<16x128xf32>
    %333 = arith.mulf %332, %326 : vector<16x128xf32>
    %334 = arith.addf %324, %333 : vector<16x128xf32>
    %335 = vector.extract_strided_slice %325 {offsets = [1, 0], sizes = [16, 128], strides = [1, 1]} : vector<22x128xf32> to vector<16x128xf32>
    %c11 = arith.constant 11 : index
    %336 = memref.load %arg6[%c11] : memref<196xf32, #tpu.memory_space<smem>>
    %337 = vector.broadcast %336 : f32 to vector<16x128xf32>
    %338 = arith.mulf %337, %335 : vector<16x128xf32>
    %339 = arith.addf %330, %338 : vector<16x128xf32>
    %c109 = arith.constant 109 : index
    %340 = memref.load %arg6[%c109] : memref<196xf32, #tpu.memory_space<smem>>
    %341 = vector.broadcast %340 : f32 to vector<16x128xf32>
    %342 = arith.mulf %341, %335 : vector<16x128xf32>
    %343 = arith.addf %334, %342 : vector<16x128xf32>
    %344 = vector.extract_strided_slice %325 {offsets = [2, 0], sizes = [16, 128], strides = [1, 1]} : vector<22x128xf32> to vector<16x128xf32>
    %c18 = arith.constant 18 : index
    %345 = memref.load %arg6[%c18] : memref<196xf32, #tpu.memory_space<smem>>
    %346 = vector.broadcast %345 : f32 to vector<16x128xf32>
    %347 = arith.mulf %346, %344 : vector<16x128xf32>
    %348 = arith.addf %339, %347 : vector<16x128xf32>
    %c116 = arith.constant 116 : index
    %349 = memref.load %arg6[%c116] : memref<196xf32, #tpu.memory_space<smem>>
    %350 = vector.broadcast %349 : f32 to vector<16x128xf32>
    %351 = arith.mulf %350, %344 : vector<16x128xf32>
    %352 = arith.addf %343, %351 : vector<16x128xf32>
    %353 = vector.extract_strided_slice %325 {offsets = [3, 0], sizes = [16, 128], strides = [1, 1]} : vector<22x128xf32> to vector<16x128xf32>
    %c25 = arith.constant 25 : index
    %354 = memref.load %arg6[%c25] : memref<196xf32, #tpu.memory_space<smem>>
    %355 = vector.broadcast %354 : f32 to vector<16x128xf32>
    %356 = arith.mulf %355, %353 : vector<16x128xf32>
    %357 = arith.addf %348, %356 : vector<16x128xf32>
    %c123 = arith.constant 123 : index
    %358 = memref.load %arg6[%c123] : memref<196xf32, #tpu.memory_space<smem>>
    %359 = vector.broadcast %358 : f32 to vector<16x128xf32>
    %360 = arith.mulf %359, %353 : vector<16x128xf32>
    %361 = arith.addf %352, %360 : vector<16x128xf32>
    %362 = vector.extract_strided_slice %325 {offsets = [4, 0], sizes = [16, 128], strides = [1, 1]} : vector<22x128xf32> to vector<16x128xf32>
    %c32 = arith.constant 32 : index
    %363 = memref.load %arg6[%c32] : memref<196xf32, #tpu.memory_space<smem>>
    %364 = vector.broadcast %363 : f32 to vector<16x128xf32>
    %365 = arith.mulf %364, %362 : vector<16x128xf32>
    %366 = arith.addf %357, %365 : vector<16x128xf32>
    %c130 = arith.constant 130 : index
    %367 = memref.load %arg6[%c130] : memref<196xf32, #tpu.memory_space<smem>>
    %368 = vector.broadcast %367 : f32 to vector<16x128xf32>
    %369 = arith.mulf %368, %362 : vector<16x128xf32>
    %370 = arith.addf %361, %369 : vector<16x128xf32>
    %371 = vector.extract_strided_slice %325 {offsets = [5, 0], sizes = [16, 128], strides = [1, 1]} : vector<22x128xf32> to vector<16x128xf32>
    %c39 = arith.constant 39 : index
    %372 = memref.load %arg6[%c39] : memref<196xf32, #tpu.memory_space<smem>>
    %373 = vector.broadcast %372 : f32 to vector<16x128xf32>
    %374 = arith.mulf %373, %371 : vector<16x128xf32>
    %375 = arith.addf %366, %374 : vector<16x128xf32>
    %c137 = arith.constant 137 : index
    %376 = memref.load %arg6[%c137] : memref<196xf32, #tpu.memory_space<smem>>
    %377 = vector.broadcast %376 : f32 to vector<16x128xf32>
    %378 = arith.mulf %377, %371 : vector<16x128xf32>
    %379 = arith.addf %370, %378 : vector<16x128xf32>
    %380 = vector.extract_strided_slice %325 {offsets = [6, 0], sizes = [16, 128], strides = [1, 1]} : vector<22x128xf32> to vector<16x128xf32>
    %c46 = arith.constant 46 : index
    %381 = memref.load %arg6[%c46] : memref<196xf32, #tpu.memory_space<smem>>
    %382 = vector.broadcast %381 : f32 to vector<16x128xf32>
    %383 = arith.mulf %382, %380 : vector<16x128xf32>
    %384 = arith.addf %375, %383 : vector<16x128xf32>
    %c144 = arith.constant 144 : index
    %385 = memref.load %arg6[%c144] : memref<196xf32, #tpu.memory_space<smem>>
    %386 = vector.broadcast %385 : f32 to vector<16x128xf32>
    %387 = arith.mulf %386, %380 : vector<16x128xf32>
    %388 = arith.addf %379, %387 : vector<16x128xf32>
    %c126_i32 = arith.constant 126 : i32
    %389 = tpu.dynamic_rotate %69 by %c126_i32 dim 1 : vector<22x128xf32>, i32 -> vector<22x128xf32>
    %390 = vector.extract_strided_slice %389 {offsets = [0, 0], sizes = [16, 128], strides = [1, 1]} : vector<22x128xf32> to vector<16x128xf32>
    %c5 = arith.constant 5 : index
    %391 = memref.load %arg6[%c5] : memref<196xf32, #tpu.memory_space<smem>>
    %392 = vector.broadcast %391 : f32 to vector<16x128xf32>
    %393 = arith.mulf %392, %390 : vector<16x128xf32>
    %394 = arith.addf %384, %393 : vector<16x128xf32>
    %c103 = arith.constant 103 : index
    %395 = memref.load %arg6[%c103] : memref<196xf32, #tpu.memory_space<smem>>
    %396 = vector.broadcast %395 : f32 to vector<16x128xf32>
    %397 = arith.mulf %396, %390 : vector<16x128xf32>
    %398 = arith.addf %388, %397 : vector<16x128xf32>
    %399 = vector.extract_strided_slice %389 {offsets = [1, 0], sizes = [16, 128], strides = [1, 1]} : vector<22x128xf32> to vector<16x128xf32>
    %c12 = arith.constant 12 : index
    %400 = memref.load %arg6[%c12] : memref<196xf32, #tpu.memory_space<smem>>
    %401 = vector.broadcast %400 : f32 to vector<16x128xf32>
    %402 = arith.mulf %401, %399 : vector<16x128xf32>
    %403 = arith.addf %394, %402 : vector<16x128xf32>
    %c110 = arith.constant 110 : index
    %404 = memref.load %arg6[%c110] : memref<196xf32, #tpu.memory_space<smem>>
    %405 = vector.broadcast %404 : f32 to vector<16x128xf32>
    %406 = arith.mulf %405, %399 : vector<16x128xf32>
    %407 = arith.addf %398, %406 : vector<16x128xf32>
    %408 = vector.extract_strided_slice %389 {offsets = [2, 0], sizes = [16, 128], strides = [1, 1]} : vector<22x128xf32> to vector<16x128xf32>
    %c19 = arith.constant 19 : index
    %409 = memref.load %arg6[%c19] : memref<196xf32, #tpu.memory_space<smem>>
    %410 = vector.broadcast %409 : f32 to vector<16x128xf32>
    %411 = arith.mulf %410, %408 : vector<16x128xf32>
    %412 = arith.addf %403, %411 : vector<16x128xf32>
    %c117 = arith.constant 117 : index
    %413 = memref.load %arg6[%c117] : memref<196xf32, #tpu.memory_space<smem>>
    %414 = vector.broadcast %413 : f32 to vector<16x128xf32>
    %415 = arith.mulf %414, %408 : vector<16x128xf32>
    %416 = arith.addf %407, %415 : vector<16x128xf32>
    %417 = vector.extract_strided_slice %389 {offsets = [3, 0], sizes = [16, 128], strides = [1, 1]} : vector<22x128xf32> to vector<16x128xf32>
    %c26 = arith.constant 26 : index
    %418 = memref.load %arg6[%c26] : memref<196xf32, #tpu.memory_space<smem>>
    %419 = vector.broadcast %418 : f32 to vector<16x128xf32>
    %420 = arith.mulf %419, %417 : vector<16x128xf32>
    %421 = arith.addf %412, %420 : vector<16x128xf32>
    %c124 = arith.constant 124 : index
    %422 = memref.load %arg6[%c124] : memref<196xf32, #tpu.memory_space<smem>>
    %423 = vector.broadcast %422 : f32 to vector<16x128xf32>
    %424 = arith.mulf %423, %417 : vector<16x128xf32>
    %425 = arith.addf %416, %424 : vector<16x128xf32>
    %426 = vector.extract_strided_slice %389 {offsets = [4, 0], sizes = [16, 128], strides = [1, 1]} : vector<22x128xf32> to vector<16x128xf32>
    %c33 = arith.constant 33 : index
    %427 = memref.load %arg6[%c33] : memref<196xf32, #tpu.memory_space<smem>>
    %428 = vector.broadcast %427 : f32 to vector<16x128xf32>
    %429 = arith.mulf %428, %426 : vector<16x128xf32>
    %430 = arith.addf %421, %429 : vector<16x128xf32>
    %c131 = arith.constant 131 : index
    %431 = memref.load %arg6[%c131] : memref<196xf32, #tpu.memory_space<smem>>
    %432 = vector.broadcast %431 : f32 to vector<16x128xf32>
    %433 = arith.mulf %432, %426 : vector<16x128xf32>
    %434 = arith.addf %425, %433 : vector<16x128xf32>
    %435 = vector.extract_strided_slice %389 {offsets = [5, 0], sizes = [16, 128], strides = [1, 1]} : vector<22x128xf32> to vector<16x128xf32>
    %c40 = arith.constant 40 : index
    %436 = memref.load %arg6[%c40] : memref<196xf32, #tpu.memory_space<smem>>
    %437 = vector.broadcast %436 : f32 to vector<16x128xf32>
    %438 = arith.mulf %437, %435 : vector<16x128xf32>
    %439 = arith.addf %430, %438 : vector<16x128xf32>
    %c138 = arith.constant 138 : index
    %440 = memref.load %arg6[%c138] : memref<196xf32, #tpu.memory_space<smem>>
    %441 = vector.broadcast %440 : f32 to vector<16x128xf32>
    %442 = arith.mulf %441, %435 : vector<16x128xf32>
    %443 = arith.addf %434, %442 : vector<16x128xf32>
    %444 = vector.extract_strided_slice %389 {offsets = [6, 0], sizes = [16, 128], strides = [1, 1]} : vector<22x128xf32> to vector<16x128xf32>
    %c47 = arith.constant 47 : index
    %445 = memref.load %arg6[%c47] : memref<196xf32, #tpu.memory_space<smem>>
    %446 = vector.broadcast %445 : f32 to vector<16x128xf32>
    %447 = arith.mulf %446, %444 : vector<16x128xf32>
    %448 = arith.addf %439, %447 : vector<16x128xf32>
    %c145 = arith.constant 145 : index
    %449 = memref.load %arg6[%c145] : memref<196xf32, #tpu.memory_space<smem>>
    %450 = vector.broadcast %449 : f32 to vector<16x128xf32>
    %451 = arith.mulf %450, %444 : vector<16x128xf32>
    %452 = arith.addf %443, %451 : vector<16x128xf32>
    %c125_i32 = arith.constant 125 : i32
    %453 = tpu.dynamic_rotate %69 by %c125_i32 dim 1 : vector<22x128xf32>, i32 -> vector<22x128xf32>
    %454 = vector.extract_strided_slice %453 {offsets = [0, 0], sizes = [16, 128], strides = [1, 1]} : vector<22x128xf32> to vector<16x128xf32>
    %c6 = arith.constant 6 : index
    %455 = memref.load %arg6[%c6] : memref<196xf32, #tpu.memory_space<smem>>
    %456 = vector.broadcast %455 : f32 to vector<16x128xf32>
    %457 = arith.mulf %456, %454 : vector<16x128xf32>
    %458 = arith.addf %448, %457 : vector<16x128xf32>
    %c104 = arith.constant 104 : index
    %459 = memref.load %arg6[%c104] : memref<196xf32, #tpu.memory_space<smem>>
    %460 = vector.broadcast %459 : f32 to vector<16x128xf32>
    %461 = arith.mulf %460, %454 : vector<16x128xf32>
    %462 = arith.addf %452, %461 : vector<16x128xf32>
    %463 = vector.extract_strided_slice %453 {offsets = [1, 0], sizes = [16, 128], strides = [1, 1]} : vector<22x128xf32> to vector<16x128xf32>
    %c13 = arith.constant 13 : index
    %464 = memref.load %arg6[%c13] : memref<196xf32, #tpu.memory_space<smem>>
    %465 = vector.broadcast %464 : f32 to vector<16x128xf32>
    %466 = arith.mulf %465, %463 : vector<16x128xf32>
    %467 = arith.addf %458, %466 : vector<16x128xf32>
    %c111 = arith.constant 111 : index
    %468 = memref.load %arg6[%c111] : memref<196xf32, #tpu.memory_space<smem>>
    %469 = vector.broadcast %468 : f32 to vector<16x128xf32>
    %470 = arith.mulf %469, %463 : vector<16x128xf32>
    %471 = arith.addf %462, %470 : vector<16x128xf32>
    %472 = vector.extract_strided_slice %453 {offsets = [2, 0], sizes = [16, 128], strides = [1, 1]} : vector<22x128xf32> to vector<16x128xf32>
    %c20 = arith.constant 20 : index
    %473 = memref.load %arg6[%c20] : memref<196xf32, #tpu.memory_space<smem>>
    %474 = vector.broadcast %473 : f32 to vector<16x128xf32>
    %475 = arith.mulf %474, %472 : vector<16x128xf32>
    %476 = arith.addf %467, %475 : vector<16x128xf32>
    %c118 = arith.constant 118 : index
    %477 = memref.load %arg6[%c118] : memref<196xf32, #tpu.memory_space<smem>>
    %478 = vector.broadcast %477 : f32 to vector<16x128xf32>
    %479 = arith.mulf %478, %472 : vector<16x128xf32>
    %480 = arith.addf %471, %479 : vector<16x128xf32>
    %481 = vector.extract_strided_slice %453 {offsets = [3, 0], sizes = [16, 128], strides = [1, 1]} : vector<22x128xf32> to vector<16x128xf32>
    %c27 = arith.constant 27 : index
    %482 = memref.load %arg6[%c27] : memref<196xf32, #tpu.memory_space<smem>>
    %483 = vector.broadcast %482 : f32 to vector<16x128xf32>
    %484 = arith.mulf %483, %481 : vector<16x128xf32>
    %485 = arith.addf %476, %484 : vector<16x128xf32>
    %c125 = arith.constant 125 : index
    %486 = memref.load %arg6[%c125] : memref<196xf32, #tpu.memory_space<smem>>
    %487 = vector.broadcast %486 : f32 to vector<16x128xf32>
    %488 = arith.mulf %487, %481 : vector<16x128xf32>
    %489 = arith.addf %480, %488 : vector<16x128xf32>
    %490 = vector.extract_strided_slice %453 {offsets = [4, 0], sizes = [16, 128], strides = [1, 1]} : vector<22x128xf32> to vector<16x128xf32>
    %c34 = arith.constant 34 : index
    %491 = memref.load %arg6[%c34] : memref<196xf32, #tpu.memory_space<smem>>
    %492 = vector.broadcast %491 : f32 to vector<16x128xf32>
    %493 = arith.mulf %492, %490 : vector<16x128xf32>
    %494 = arith.addf %485, %493 : vector<16x128xf32>
    %c132 = arith.constant 132 : index
    %495 = memref.load %arg6[%c132] : memref<196xf32, #tpu.memory_space<smem>>
    %496 = vector.broadcast %495 : f32 to vector<16x128xf32>
    %497 = arith.mulf %496, %490 : vector<16x128xf32>
    %498 = arith.addf %489, %497 : vector<16x128xf32>
    %499 = vector.extract_strided_slice %453 {offsets = [5, 0], sizes = [16, 128], strides = [1, 1]} : vector<22x128xf32> to vector<16x128xf32>
    %c41 = arith.constant 41 : index
    %500 = memref.load %arg6[%c41] : memref<196xf32, #tpu.memory_space<smem>>
    %501 = vector.broadcast %500 : f32 to vector<16x128xf32>
    %502 = arith.mulf %501, %499 : vector<16x128xf32>
    %503 = arith.addf %494, %502 : vector<16x128xf32>
    %c139 = arith.constant 139 : index
    %504 = memref.load %arg6[%c139] : memref<196xf32, #tpu.memory_space<smem>>
    %505 = vector.broadcast %504 : f32 to vector<16x128xf32>
    %506 = arith.mulf %505, %499 : vector<16x128xf32>
    %507 = arith.addf %498, %506 : vector<16x128xf32>
    %508 = vector.extract_strided_slice %453 {offsets = [6, 0], sizes = [16, 128], strides = [1, 1]} : vector<22x128xf32> to vector<16x128xf32>
    %c48 = arith.constant 48 : index
    %509 = memref.load %arg6[%c48] : memref<196xf32, #tpu.memory_space<smem>>
    %510 = vector.broadcast %509 : f32 to vector<16x128xf32>
    %511 = arith.mulf %510, %508 : vector<16x128xf32>
    %512 = arith.addf %503, %511 : vector<16x128xf32>
    %c146 = arith.constant 146 : index
    %513 = memref.load %arg6[%c146] : memref<196xf32, #tpu.memory_space<smem>>
    %514 = vector.broadcast %513 : f32 to vector<16x128xf32>
    %515 = arith.mulf %514, %508 : vector<16x128xf32>
    %516 = arith.addf %507, %515 : vector<16x128xf32>
    %c1_38 = arith.constant 1 : index
    %c0_39 = arith.constant 0 : index
    %c0_40 = arith.constant 0 : index
    %517 = vector.load %arg9[%c1_38, %c0_39, %c0_40] : memref<2x22x128xf32, #tpu.memory_space<vmem>>, vector<1x22x128xf32>
    %518 = vector.shape_cast %517 : vector<1x22x128xf32> to vector<22x128xf32>
    %c3_i32_41 = arith.constant 3 : i32
    %519 = tpu.dynamic_rotate %518 by %c3_i32_41 dim 1 : vector<22x128xf32>, i32 -> vector<22x128xf32>
    %520 = vector.extract_strided_slice %519 {offsets = [0, 0], sizes = [16, 128], strides = [1, 1]} : vector<22x128xf32> to vector<16x128xf32>
    %c49 = arith.constant 49 : index
    %521 = memref.load %arg6[%c49] : memref<196xf32, #tpu.memory_space<smem>>
    %522 = vector.broadcast %521 : f32 to vector<16x128xf32>
    %523 = arith.mulf %522, %520 : vector<16x128xf32>
    %524 = arith.addf %512, %523 : vector<16x128xf32>
    %c147 = arith.constant 147 : index
    %525 = memref.load %arg6[%c147] : memref<196xf32, #tpu.memory_space<smem>>
    %526 = vector.broadcast %525 : f32 to vector<16x128xf32>
    %527 = arith.mulf %526, %520 : vector<16x128xf32>
    %528 = arith.addf %516, %527 : vector<16x128xf32>
    %529 = vector.extract_strided_slice %519 {offsets = [1, 0], sizes = [16, 128], strides = [1, 1]} : vector<22x128xf32> to vector<16x128xf32>
    %c56 = arith.constant 56 : index
    %530 = memref.load %arg6[%c56] : memref<196xf32, #tpu.memory_space<smem>>
    %531 = vector.broadcast %530 : f32 to vector<16x128xf32>
    %532 = arith.mulf %531, %529 : vector<16x128xf32>
    %533 = arith.addf %524, %532 : vector<16x128xf32>
    %c154 = arith.constant 154 : index
    %534 = memref.load %arg6[%c154] : memref<196xf32, #tpu.memory_space<smem>>
    %535 = vector.broadcast %534 : f32 to vector<16x128xf32>
    %536 = arith.mulf %535, %529 : vector<16x128xf32>
    %537 = arith.addf %528, %536 : vector<16x128xf32>
    %538 = vector.extract_strided_slice %519 {offsets = [2, 0], sizes = [16, 128], strides = [1, 1]} : vector<22x128xf32> to vector<16x128xf32>
    %c63 = arith.constant 63 : index
    %539 = memref.load %arg6[%c63] : memref<196xf32, #tpu.memory_space<smem>>
    %540 = vector.broadcast %539 : f32 to vector<16x128xf32>
    %541 = arith.mulf %540, %538 : vector<16x128xf32>
    %542 = arith.addf %533, %541 : vector<16x128xf32>
    %c161 = arith.constant 161 : index
    %543 = memref.load %arg6[%c161] : memref<196xf32, #tpu.memory_space<smem>>
    %544 = vector.broadcast %543 : f32 to vector<16x128xf32>
    %545 = arith.mulf %544, %538 : vector<16x128xf32>
    %546 = arith.addf %537, %545 : vector<16x128xf32>
    %547 = vector.extract_strided_slice %519 {offsets = [3, 0], sizes = [16, 128], strides = [1, 1]} : vector<22x128xf32> to vector<16x128xf32>
    %c70 = arith.constant 70 : index
    %548 = memref.load %arg6[%c70] : memref<196xf32, #tpu.memory_space<smem>>
    %549 = vector.broadcast %548 : f32 to vector<16x128xf32>
    %550 = arith.mulf %549, %547 : vector<16x128xf32>
    %551 = arith.addf %542, %550 : vector<16x128xf32>
    %c168 = arith.constant 168 : index
    %552 = memref.load %arg6[%c168] : memref<196xf32, #tpu.memory_space<smem>>
    %553 = vector.broadcast %552 : f32 to vector<16x128xf32>
    %554 = arith.mulf %553, %547 : vector<16x128xf32>
    %555 = arith.addf %546, %554 : vector<16x128xf32>
    %556 = vector.extract_strided_slice %519 {offsets = [4, 0], sizes = [16, 128], strides = [1, 1]} : vector<22x128xf32> to vector<16x128xf32>
    %c77 = arith.constant 77 : index
    %557 = memref.load %arg6[%c77] : memref<196xf32, #tpu.memory_space<smem>>
    %558 = vector.broadcast %557 : f32 to vector<16x128xf32>
    %559 = arith.mulf %558, %556 : vector<16x128xf32>
    %560 = arith.addf %551, %559 : vector<16x128xf32>
    %c175 = arith.constant 175 : index
    %561 = memref.load %arg6[%c175] : memref<196xf32, #tpu.memory_space<smem>>
    %562 = vector.broadcast %561 : f32 to vector<16x128xf32>
    %563 = arith.mulf %562, %556 : vector<16x128xf32>
    %564 = arith.addf %555, %563 : vector<16x128xf32>
    %565 = vector.extract_strided_slice %519 {offsets = [5, 0], sizes = [16, 128], strides = [1, 1]} : vector<22x128xf32> to vector<16x128xf32>
    %c84 = arith.constant 84 : index
    %566 = memref.load %arg6[%c84] : memref<196xf32, #tpu.memory_space<smem>>
    %567 = vector.broadcast %566 : f32 to vector<16x128xf32>
    %568 = arith.mulf %567, %565 : vector<16x128xf32>
    %569 = arith.addf %560, %568 : vector<16x128xf32>
    %c182 = arith.constant 182 : index
    %570 = memref.load %arg6[%c182] : memref<196xf32, #tpu.memory_space<smem>>
    %571 = vector.broadcast %570 : f32 to vector<16x128xf32>
    %572 = arith.mulf %571, %565 : vector<16x128xf32>
    %573 = arith.addf %564, %572 : vector<16x128xf32>
    %574 = vector.extract_strided_slice %519 {offsets = [6, 0], sizes = [16, 128], strides = [1, 1]} : vector<22x128xf32> to vector<16x128xf32>
    %c91 = arith.constant 91 : index
    %575 = memref.load %arg6[%c91] : memref<196xf32, #tpu.memory_space<smem>>
    %576 = vector.broadcast %575 : f32 to vector<16x128xf32>
    %577 = arith.mulf %576, %574 : vector<16x128xf32>
    %578 = arith.addf %569, %577 : vector<16x128xf32>
    %c189 = arith.constant 189 : index
    %579 = memref.load %arg6[%c189] : memref<196xf32, #tpu.memory_space<smem>>
    %580 = vector.broadcast %579 : f32 to vector<16x128xf32>
    %581 = arith.mulf %580, %574 : vector<16x128xf32>
    %582 = arith.addf %573, %581 : vector<16x128xf32>
    %c2_i32_42 = arith.constant 2 : i32
    %583 = tpu.dynamic_rotate %518 by %c2_i32_42 dim 1 : vector<22x128xf32>, i32 -> vector<22x128xf32>
    %584 = vector.extract_strided_slice %583 {offsets = [0, 0], sizes = [16, 128], strides = [1, 1]} : vector<22x128xf32> to vector<16x128xf32>
    %c50 = arith.constant 50 : index
    %585 = memref.load %arg6[%c50] : memref<196xf32, #tpu.memory_space<smem>>
    %586 = vector.broadcast %585 : f32 to vector<16x128xf32>
    %587 = arith.mulf %586, %584 : vector<16x128xf32>
    %588 = arith.addf %578, %587 : vector<16x128xf32>
    %c148 = arith.constant 148 : index
    %589 = memref.load %arg6[%c148] : memref<196xf32, #tpu.memory_space<smem>>
    %590 = vector.broadcast %589 : f32 to vector<16x128xf32>
    %591 = arith.mulf %590, %584 : vector<16x128xf32>
    %592 = arith.addf %582, %591 : vector<16x128xf32>
    %593 = vector.extract_strided_slice %583 {offsets = [1, 0], sizes = [16, 128], strides = [1, 1]} : vector<22x128xf32> to vector<16x128xf32>
    %c57 = arith.constant 57 : index
    %594 = memref.load %arg6[%c57] : memref<196xf32, #tpu.memory_space<smem>>
    %595 = vector.broadcast %594 : f32 to vector<16x128xf32>
    %596 = arith.mulf %595, %593 : vector<16x128xf32>
    %597 = arith.addf %588, %596 : vector<16x128xf32>
    %c155 = arith.constant 155 : index
    %598 = memref.load %arg6[%c155] : memref<196xf32, #tpu.memory_space<smem>>
    %599 = vector.broadcast %598 : f32 to vector<16x128xf32>
    %600 = arith.mulf %599, %593 : vector<16x128xf32>
    %601 = arith.addf %592, %600 : vector<16x128xf32>
    %602 = vector.extract_strided_slice %583 {offsets = [2, 0], sizes = [16, 128], strides = [1, 1]} : vector<22x128xf32> to vector<16x128xf32>
    %c64 = arith.constant 64 : index
    %603 = memref.load %arg6[%c64] : memref<196xf32, #tpu.memory_space<smem>>
    %604 = vector.broadcast %603 : f32 to vector<16x128xf32>
    %605 = arith.mulf %604, %602 : vector<16x128xf32>
    %606 = arith.addf %597, %605 : vector<16x128xf32>
    %c162 = arith.constant 162 : index
    %607 = memref.load %arg6[%c162] : memref<196xf32, #tpu.memory_space<smem>>
    %608 = vector.broadcast %607 : f32 to vector<16x128xf32>
    %609 = arith.mulf %608, %602 : vector<16x128xf32>
    %610 = arith.addf %601, %609 : vector<16x128xf32>
    %611 = vector.extract_strided_slice %583 {offsets = [3, 0], sizes = [16, 128], strides = [1, 1]} : vector<22x128xf32> to vector<16x128xf32>
    %c71 = arith.constant 71 : index
    %612 = memref.load %arg6[%c71] : memref<196xf32, #tpu.memory_space<smem>>
    %613 = vector.broadcast %612 : f32 to vector<16x128xf32>
    %614 = arith.mulf %613, %611 : vector<16x128xf32>
    %615 = arith.addf %606, %614 : vector<16x128xf32>
    %c169 = arith.constant 169 : index
    %616 = memref.load %arg6[%c169] : memref<196xf32, #tpu.memory_space<smem>>
    %617 = vector.broadcast %616 : f32 to vector<16x128xf32>
    %618 = arith.mulf %617, %611 : vector<16x128xf32>
    %619 = arith.addf %610, %618 : vector<16x128xf32>
    %620 = vector.extract_strided_slice %583 {offsets = [4, 0], sizes = [16, 128], strides = [1, 1]} : vector<22x128xf32> to vector<16x128xf32>
    %c78 = arith.constant 78 : index
    %621 = memref.load %arg6[%c78] : memref<196xf32, #tpu.memory_space<smem>>
    %622 = vector.broadcast %621 : f32 to vector<16x128xf32>
    %623 = arith.mulf %622, %620 : vector<16x128xf32>
    %624 = arith.addf %615, %623 : vector<16x128xf32>
    %c176 = arith.constant 176 : index
    %625 = memref.load %arg6[%c176] : memref<196xf32, #tpu.memory_space<smem>>
    %626 = vector.broadcast %625 : f32 to vector<16x128xf32>
    %627 = arith.mulf %626, %620 : vector<16x128xf32>
    %628 = arith.addf %619, %627 : vector<16x128xf32>
    %629 = vector.extract_strided_slice %583 {offsets = [5, 0], sizes = [16, 128], strides = [1, 1]} : vector<22x128xf32> to vector<16x128xf32>
    %c85 = arith.constant 85 : index
    %630 = memref.load %arg6[%c85] : memref<196xf32, #tpu.memory_space<smem>>
    %631 = vector.broadcast %630 : f32 to vector<16x128xf32>
    %632 = arith.mulf %631, %629 : vector<16x128xf32>
    %633 = arith.addf %624, %632 : vector<16x128xf32>
    %c183 = arith.constant 183 : index
    %634 = memref.load %arg6[%c183] : memref<196xf32, #tpu.memory_space<smem>>
    %635 = vector.broadcast %634 : f32 to vector<16x128xf32>
    %636 = arith.mulf %635, %629 : vector<16x128xf32>
    %637 = arith.addf %628, %636 : vector<16x128xf32>
    %638 = vector.extract_strided_slice %583 {offsets = [6, 0], sizes = [16, 128], strides = [1, 1]} : vector<22x128xf32> to vector<16x128xf32>
    %c92 = arith.constant 92 : index
    %639 = memref.load %arg6[%c92] : memref<196xf32, #tpu.memory_space<smem>>
    %640 = vector.broadcast %639 : f32 to vector<16x128xf32>
    %641 = arith.mulf %640, %638 : vector<16x128xf32>
    %642 = arith.addf %633, %641 : vector<16x128xf32>
    %c190 = arith.constant 190 : index
    %643 = memref.load %arg6[%c190] : memref<196xf32, #tpu.memory_space<smem>>
    %644 = vector.broadcast %643 : f32 to vector<16x128xf32>
    %645 = arith.mulf %644, %638 : vector<16x128xf32>
    %646 = arith.addf %637, %645 : vector<16x128xf32>
    %c1_i32_43 = arith.constant 1 : i32
    %647 = tpu.dynamic_rotate %518 by %c1_i32_43 dim 1 : vector<22x128xf32>, i32 -> vector<22x128xf32>
    %648 = vector.extract_strided_slice %647 {offsets = [0, 0], sizes = [16, 128], strides = [1, 1]} : vector<22x128xf32> to vector<16x128xf32>
    %c51 = arith.constant 51 : index
    %649 = memref.load %arg6[%c51] : memref<196xf32, #tpu.memory_space<smem>>
    %650 = vector.broadcast %649 : f32 to vector<16x128xf32>
    %651 = arith.mulf %650, %648 : vector<16x128xf32>
    %652 = arith.addf %642, %651 : vector<16x128xf32>
    %c149 = arith.constant 149 : index
    %653 = memref.load %arg6[%c149] : memref<196xf32, #tpu.memory_space<smem>>
    %654 = vector.broadcast %653 : f32 to vector<16x128xf32>
    %655 = arith.mulf %654, %648 : vector<16x128xf32>
    %656 = arith.addf %646, %655 : vector<16x128xf32>
    %657 = vector.extract_strided_slice %647 {offsets = [1, 0], sizes = [16, 128], strides = [1, 1]} : vector<22x128xf32> to vector<16x128xf32>
    %c58 = arith.constant 58 : index
    %658 = memref.load %arg6[%c58] : memref<196xf32, #tpu.memory_space<smem>>
    %659 = vector.broadcast %658 : f32 to vector<16x128xf32>
    %660 = arith.mulf %659, %657 : vector<16x128xf32>
    %661 = arith.addf %652, %660 : vector<16x128xf32>
    %c156 = arith.constant 156 : index
    %662 = memref.load %arg6[%c156] : memref<196xf32, #tpu.memory_space<smem>>
    %663 = vector.broadcast %662 : f32 to vector<16x128xf32>
    %664 = arith.mulf %663, %657 : vector<16x128xf32>
    %665 = arith.addf %656, %664 : vector<16x128xf32>
    %666 = vector.extract_strided_slice %647 {offsets = [2, 0], sizes = [16, 128], strides = [1, 1]} : vector<22x128xf32> to vector<16x128xf32>
    %c65 = arith.constant 65 : index
    %667 = memref.load %arg6[%c65] : memref<196xf32, #tpu.memory_space<smem>>
    %668 = vector.broadcast %667 : f32 to vector<16x128xf32>
    %669 = arith.mulf %668, %666 : vector<16x128xf32>
    %670 = arith.addf %661, %669 : vector<16x128xf32>
    %c163 = arith.constant 163 : index
    %671 = memref.load %arg6[%c163] : memref<196xf32, #tpu.memory_space<smem>>
    %672 = vector.broadcast %671 : f32 to vector<16x128xf32>
    %673 = arith.mulf %672, %666 : vector<16x128xf32>
    %674 = arith.addf %665, %673 : vector<16x128xf32>
    %675 = vector.extract_strided_slice %647 {offsets = [3, 0], sizes = [16, 128], strides = [1, 1]} : vector<22x128xf32> to vector<16x128xf32>
    %c72 = arith.constant 72 : index
    %676 = memref.load %arg6[%c72] : memref<196xf32, #tpu.memory_space<smem>>
    %677 = vector.broadcast %676 : f32 to vector<16x128xf32>
    %678 = arith.mulf %677, %675 : vector<16x128xf32>
    %679 = arith.addf %670, %678 : vector<16x128xf32>
    %c170 = arith.constant 170 : index
    %680 = memref.load %arg6[%c170] : memref<196xf32, #tpu.memory_space<smem>>
    %681 = vector.broadcast %680 : f32 to vector<16x128xf32>
    %682 = arith.mulf %681, %675 : vector<16x128xf32>
    %683 = arith.addf %674, %682 : vector<16x128xf32>
    %684 = vector.extract_strided_slice %647 {offsets = [4, 0], sizes = [16, 128], strides = [1, 1]} : vector<22x128xf32> to vector<16x128xf32>
    %c79 = arith.constant 79 : index
    %685 = memref.load %arg6[%c79] : memref<196xf32, #tpu.memory_space<smem>>
    %686 = vector.broadcast %685 : f32 to vector<16x128xf32>
    %687 = arith.mulf %686, %684 : vector<16x128xf32>
    %688 = arith.addf %679, %687 : vector<16x128xf32>
    %c177 = arith.constant 177 : index
    %689 = memref.load %arg6[%c177] : memref<196xf32, #tpu.memory_space<smem>>
    %690 = vector.broadcast %689 : f32 to vector<16x128xf32>
    %691 = arith.mulf %690, %684 : vector<16x128xf32>
    %692 = arith.addf %683, %691 : vector<16x128xf32>
    %693 = vector.extract_strided_slice %647 {offsets = [5, 0], sizes = [16, 128], strides = [1, 1]} : vector<22x128xf32> to vector<16x128xf32>
    %c86 = arith.constant 86 : index
    %694 = memref.load %arg6[%c86] : memref<196xf32, #tpu.memory_space<smem>>
    %695 = vector.broadcast %694 : f32 to vector<16x128xf32>
    %696 = arith.mulf %695, %693 : vector<16x128xf32>
    %697 = arith.addf %688, %696 : vector<16x128xf32>
    %c184 = arith.constant 184 : index
    %698 = memref.load %arg6[%c184] : memref<196xf32, #tpu.memory_space<smem>>
    %699 = vector.broadcast %698 : f32 to vector<16x128xf32>
    %700 = arith.mulf %699, %693 : vector<16x128xf32>
    %701 = arith.addf %692, %700 : vector<16x128xf32>
    %702 = vector.extract_strided_slice %647 {offsets = [6, 0], sizes = [16, 128], strides = [1, 1]} : vector<22x128xf32> to vector<16x128xf32>
    %c93 = arith.constant 93 : index
    %703 = memref.load %arg6[%c93] : memref<196xf32, #tpu.memory_space<smem>>
    %704 = vector.broadcast %703 : f32 to vector<16x128xf32>
    %705 = arith.mulf %704, %702 : vector<16x128xf32>
    %706 = arith.addf %697, %705 : vector<16x128xf32>
    %c191 = arith.constant 191 : index
    %707 = memref.load %arg6[%c191] : memref<196xf32, #tpu.memory_space<smem>>
    %708 = vector.broadcast %707 : f32 to vector<16x128xf32>
    %709 = arith.mulf %708, %702 : vector<16x128xf32>
    %710 = arith.addf %701, %709 : vector<16x128xf32>
    %711 = vector.extract_strided_slice %518 {offsets = [0, 0], sizes = [16, 128], strides = [1, 1]} : vector<22x128xf32> to vector<16x128xf32>
    %c52 = arith.constant 52 : index
    %712 = memref.load %arg6[%c52] : memref<196xf32, #tpu.memory_space<smem>>
    %713 = vector.broadcast %712 : f32 to vector<16x128xf32>
    %714 = arith.mulf %713, %711 : vector<16x128xf32>
    %715 = arith.addf %706, %714 : vector<16x128xf32>
    %c150 = arith.constant 150 : index
    %716 = memref.load %arg6[%c150] : memref<196xf32, #tpu.memory_space<smem>>
    %717 = vector.broadcast %716 : f32 to vector<16x128xf32>
    %718 = arith.mulf %717, %711 : vector<16x128xf32>
    %719 = arith.addf %710, %718 : vector<16x128xf32>
    %720 = vector.extract_strided_slice %518 {offsets = [1, 0], sizes = [16, 128], strides = [1, 1]} : vector<22x128xf32> to vector<16x128xf32>
    %c59 = arith.constant 59 : index
    %721 = memref.load %arg6[%c59] : memref<196xf32, #tpu.memory_space<smem>>
    %722 = vector.broadcast %721 : f32 to vector<16x128xf32>
    %723 = arith.mulf %722, %720 : vector<16x128xf32>
    %724 = arith.addf %715, %723 : vector<16x128xf32>
    %c157 = arith.constant 157 : index
    %725 = memref.load %arg6[%c157] : memref<196xf32, #tpu.memory_space<smem>>
    %726 = vector.broadcast %725 : f32 to vector<16x128xf32>
    %727 = arith.mulf %726, %720 : vector<16x128xf32>
    %728 = arith.addf %719, %727 : vector<16x128xf32>
    %729 = vector.extract_strided_slice %518 {offsets = [2, 0], sizes = [16, 128], strides = [1, 1]} : vector<22x128xf32> to vector<16x128xf32>
    %c66 = arith.constant 66 : index
    %730 = memref.load %arg6[%c66] : memref<196xf32, #tpu.memory_space<smem>>
    %731 = vector.broadcast %730 : f32 to vector<16x128xf32>
    %732 = arith.mulf %731, %729 : vector<16x128xf32>
    %733 = arith.addf %724, %732 : vector<16x128xf32>
    %c164 = arith.constant 164 : index
    %734 = memref.load %arg6[%c164] : memref<196xf32, #tpu.memory_space<smem>>
    %735 = vector.broadcast %734 : f32 to vector<16x128xf32>
    %736 = arith.mulf %735, %729 : vector<16x128xf32>
    %737 = arith.addf %728, %736 : vector<16x128xf32>
    %738 = vector.extract_strided_slice %518 {offsets = [3, 0], sizes = [16, 128], strides = [1, 1]} : vector<22x128xf32> to vector<16x128xf32>
    %c73 = arith.constant 73 : index
    %739 = memref.load %arg6[%c73] : memref<196xf32, #tpu.memory_space<smem>>
    %740 = vector.broadcast %739 : f32 to vector<16x128xf32>
    %741 = arith.mulf %740, %738 : vector<16x128xf32>
    %742 = arith.addf %733, %741 : vector<16x128xf32>
    %c171 = arith.constant 171 : index
    %743 = memref.load %arg6[%c171] : memref<196xf32, #tpu.memory_space<smem>>
    %744 = vector.broadcast %743 : f32 to vector<16x128xf32>
    %745 = arith.mulf %744, %738 : vector<16x128xf32>
    %746 = arith.addf %737, %745 : vector<16x128xf32>
    %747 = vector.extract_strided_slice %518 {offsets = [4, 0], sizes = [16, 128], strides = [1, 1]} : vector<22x128xf32> to vector<16x128xf32>
    %c80 = arith.constant 80 : index
    %748 = memref.load %arg6[%c80] : memref<196xf32, #tpu.memory_space<smem>>
    %749 = vector.broadcast %748 : f32 to vector<16x128xf32>
    %750 = arith.mulf %749, %747 : vector<16x128xf32>
    %751 = arith.addf %742, %750 : vector<16x128xf32>
    %c178 = arith.constant 178 : index
    %752 = memref.load %arg6[%c178] : memref<196xf32, #tpu.memory_space<smem>>
    %753 = vector.broadcast %752 : f32 to vector<16x128xf32>
    %754 = arith.mulf %753, %747 : vector<16x128xf32>
    %755 = arith.addf %746, %754 : vector<16x128xf32>
    %756 = vector.extract_strided_slice %518 {offsets = [5, 0], sizes = [16, 128], strides = [1, 1]} : vector<22x128xf32> to vector<16x128xf32>
    %c87 = arith.constant 87 : index
    %757 = memref.load %arg6[%c87] : memref<196xf32, #tpu.memory_space<smem>>
    %758 = vector.broadcast %757 : f32 to vector<16x128xf32>
    %759 = arith.mulf %758, %756 : vector<16x128xf32>
    %760 = arith.addf %751, %759 : vector<16x128xf32>
    %c185 = arith.constant 185 : index
    %761 = memref.load %arg6[%c185] : memref<196xf32, #tpu.memory_space<smem>>
    %762 = vector.broadcast %761 : f32 to vector<16x128xf32>
    %763 = arith.mulf %762, %756 : vector<16x128xf32>
    %764 = arith.addf %755, %763 : vector<16x128xf32>
    %765 = vector.extract_strided_slice %518 {offsets = [6, 0], sizes = [16, 128], strides = [1, 1]} : vector<22x128xf32> to vector<16x128xf32>
    %c94 = arith.constant 94 : index
    %766 = memref.load %arg6[%c94] : memref<196xf32, #tpu.memory_space<smem>>
    %767 = vector.broadcast %766 : f32 to vector<16x128xf32>
    %768 = arith.mulf %767, %765 : vector<16x128xf32>
    %769 = arith.addf %760, %768 : vector<16x128xf32>
    %c192 = arith.constant 192 : index
    %770 = memref.load %arg6[%c192] : memref<196xf32, #tpu.memory_space<smem>>
    %771 = vector.broadcast %770 : f32 to vector<16x128xf32>
    %772 = arith.mulf %771, %765 : vector<16x128xf32>
    %773 = arith.addf %764, %772 : vector<16x128xf32>
    %c127_i32_44 = arith.constant 127 : i32
    %774 = tpu.dynamic_rotate %518 by %c127_i32_44 dim 1 : vector<22x128xf32>, i32 -> vector<22x128xf32>
    %775 = vector.extract_strided_slice %774 {offsets = [0, 0], sizes = [16, 128], strides = [1, 1]} : vector<22x128xf32> to vector<16x128xf32>
    %c53 = arith.constant 53 : index
    %776 = memref.load %arg6[%c53] : memref<196xf32, #tpu.memory_space<smem>>
    %777 = vector.broadcast %776 : f32 to vector<16x128xf32>
    %778 = arith.mulf %777, %775 : vector<16x128xf32>
    %779 = arith.addf %769, %778 : vector<16x128xf32>
    %c151 = arith.constant 151 : index
    %780 = memref.load %arg6[%c151] : memref<196xf32, #tpu.memory_space<smem>>
    %781 = vector.broadcast %780 : f32 to vector<16x128xf32>
    %782 = arith.mulf %781, %775 : vector<16x128xf32>
    %783 = arith.addf %773, %782 : vector<16x128xf32>
    %784 = vector.extract_strided_slice %774 {offsets = [1, 0], sizes = [16, 128], strides = [1, 1]} : vector<22x128xf32> to vector<16x128xf32>
    %c60 = arith.constant 60 : index
    %785 = memref.load %arg6[%c60] : memref<196xf32, #tpu.memory_space<smem>>
    %786 = vector.broadcast %785 : f32 to vector<16x128xf32>
    %787 = arith.mulf %786, %784 : vector<16x128xf32>
    %788 = arith.addf %779, %787 : vector<16x128xf32>
    %c158 = arith.constant 158 : index
    %789 = memref.load %arg6[%c158] : memref<196xf32, #tpu.memory_space<smem>>
    %790 = vector.broadcast %789 : f32 to vector<16x128xf32>
    %791 = arith.mulf %790, %784 : vector<16x128xf32>
    %792 = arith.addf %783, %791 : vector<16x128xf32>
    %793 = vector.extract_strided_slice %774 {offsets = [2, 0], sizes = [16, 128], strides = [1, 1]} : vector<22x128xf32> to vector<16x128xf32>
    %c67 = arith.constant 67 : index
    %794 = memref.load %arg6[%c67] : memref<196xf32, #tpu.memory_space<smem>>
    %795 = vector.broadcast %794 : f32 to vector<16x128xf32>
    %796 = arith.mulf %795, %793 : vector<16x128xf32>
    %797 = arith.addf %788, %796 : vector<16x128xf32>
    %c165 = arith.constant 165 : index
    %798 = memref.load %arg6[%c165] : memref<196xf32, #tpu.memory_space<smem>>
    %799 = vector.broadcast %798 : f32 to vector<16x128xf32>
    %800 = arith.mulf %799, %793 : vector<16x128xf32>
    %801 = arith.addf %792, %800 : vector<16x128xf32>
    %802 = vector.extract_strided_slice %774 {offsets = [3, 0], sizes = [16, 128], strides = [1, 1]} : vector<22x128xf32> to vector<16x128xf32>
    %c74 = arith.constant 74 : index
    %803 = memref.load %arg6[%c74] : memref<196xf32, #tpu.memory_space<smem>>
    %804 = vector.broadcast %803 : f32 to vector<16x128xf32>
    %805 = arith.mulf %804, %802 : vector<16x128xf32>
    %806 = arith.addf %797, %805 : vector<16x128xf32>
    %c172 = arith.constant 172 : index
    %807 = memref.load %arg6[%c172] : memref<196xf32, #tpu.memory_space<smem>>
    %808 = vector.broadcast %807 : f32 to vector<16x128xf32>
    %809 = arith.mulf %808, %802 : vector<16x128xf32>
    %810 = arith.addf %801, %809 : vector<16x128xf32>
    %811 = vector.extract_strided_slice %774 {offsets = [4, 0], sizes = [16, 128], strides = [1, 1]} : vector<22x128xf32> to vector<16x128xf32>
    %c81 = arith.constant 81 : index
    %812 = memref.load %arg6[%c81] : memref<196xf32, #tpu.memory_space<smem>>
    %813 = vector.broadcast %812 : f32 to vector<16x128xf32>
    %814 = arith.mulf %813, %811 : vector<16x128xf32>
    %815 = arith.addf %806, %814 : vector<16x128xf32>
    %c179 = arith.constant 179 : index
    %816 = memref.load %arg6[%c179] : memref<196xf32, #tpu.memory_space<smem>>
    %817 = vector.broadcast %816 : f32 to vector<16x128xf32>
    %818 = arith.mulf %817, %811 : vector<16x128xf32>
    %819 = arith.addf %810, %818 : vector<16x128xf32>
    %820 = vector.extract_strided_slice %774 {offsets = [5, 0], sizes = [16, 128], strides = [1, 1]} : vector<22x128xf32> to vector<16x128xf32>
    %c88 = arith.constant 88 : index
    %821 = memref.load %arg6[%c88] : memref<196xf32, #tpu.memory_space<smem>>
    %822 = vector.broadcast %821 : f32 to vector<16x128xf32>
    %823 = arith.mulf %822, %820 : vector<16x128xf32>
    %824 = arith.addf %815, %823 : vector<16x128xf32>
    %c186 = arith.constant 186 : index
    %825 = memref.load %arg6[%c186] : memref<196xf32, #tpu.memory_space<smem>>
    %826 = vector.broadcast %825 : f32 to vector<16x128xf32>
    %827 = arith.mulf %826, %820 : vector<16x128xf32>
    %828 = arith.addf %819, %827 : vector<16x128xf32>
    %829 = vector.extract_strided_slice %774 {offsets = [6, 0], sizes = [16, 128], strides = [1, 1]} : vector<22x128xf32> to vector<16x128xf32>
    %c95 = arith.constant 95 : index
    %830 = memref.load %arg6[%c95] : memref<196xf32, #tpu.memory_space<smem>>
    %831 = vector.broadcast %830 : f32 to vector<16x128xf32>
    %832 = arith.mulf %831, %829 : vector<16x128xf32>
    %833 = arith.addf %824, %832 : vector<16x128xf32>
    %c193 = arith.constant 193 : index
    %834 = memref.load %arg6[%c193] : memref<196xf32, #tpu.memory_space<smem>>
    %835 = vector.broadcast %834 : f32 to vector<16x128xf32>
    %836 = arith.mulf %835, %829 : vector<16x128xf32>
    %837 = arith.addf %828, %836 : vector<16x128xf32>
    %c126_i32_45 = arith.constant 126 : i32
    %838 = tpu.dynamic_rotate %518 by %c126_i32_45 dim 1 : vector<22x128xf32>, i32 -> vector<22x128xf32>
    %839 = vector.extract_strided_slice %838 {offsets = [0, 0], sizes = [16, 128], strides = [1, 1]} : vector<22x128xf32> to vector<16x128xf32>
    %c54 = arith.constant 54 : index
    %840 = memref.load %arg6[%c54] : memref<196xf32, #tpu.memory_space<smem>>
    %841 = vector.broadcast %840 : f32 to vector<16x128xf32>
    %842 = arith.mulf %841, %839 : vector<16x128xf32>
    %843 = arith.addf %833, %842 : vector<16x128xf32>
    %c152 = arith.constant 152 : index
    %844 = memref.load %arg6[%c152] : memref<196xf32, #tpu.memory_space<smem>>
    %845 = vector.broadcast %844 : f32 to vector<16x128xf32>
    %846 = arith.mulf %845, %839 : vector<16x128xf32>
    %847 = arith.addf %837, %846 : vector<16x128xf32>
    %848 = vector.extract_strided_slice %838 {offsets = [1, 0], sizes = [16, 128], strides = [1, 1]} : vector<22x128xf32> to vector<16x128xf32>
    %c61 = arith.constant 61 : index
    %849 = memref.load %arg6[%c61] : memref<196xf32, #tpu.memory_space<smem>>
    %850 = vector.broadcast %849 : f32 to vector<16x128xf32>
    %851 = arith.mulf %850, %848 : vector<16x128xf32>
    %852 = arith.addf %843, %851 : vector<16x128xf32>
    %c159 = arith.constant 159 : index
    %853 = memref.load %arg6[%c159] : memref<196xf32, #tpu.memory_space<smem>>
    %854 = vector.broadcast %853 : f32 to vector<16x128xf32>
    %855 = arith.mulf %854, %848 : vector<16x128xf32>
    %856 = arith.addf %847, %855 : vector<16x128xf32>
    %857 = vector.extract_strided_slice %838 {offsets = [2, 0], sizes = [16, 128], strides = [1, 1]} : vector<22x128xf32> to vector<16x128xf32>
    %c68 = arith.constant 68 : index
    %858 = memref.load %arg6[%c68] : memref<196xf32, #tpu.memory_space<smem>>
    %859 = vector.broadcast %858 : f32 to vector<16x128xf32>
    %860 = arith.mulf %859, %857 : vector<16x128xf32>
    %861 = arith.addf %852, %860 : vector<16x128xf32>
    %c166 = arith.constant 166 : index
    %862 = memref.load %arg6[%c166] : memref<196xf32, #tpu.memory_space<smem>>
    %863 = vector.broadcast %862 : f32 to vector<16x128xf32>
    %864 = arith.mulf %863, %857 : vector<16x128xf32>
    %865 = arith.addf %856, %864 : vector<16x128xf32>
    %866 = vector.extract_strided_slice %838 {offsets = [3, 0], sizes = [16, 128], strides = [1, 1]} : vector<22x128xf32> to vector<16x128xf32>
    %c75 = arith.constant 75 : index
    %867 = memref.load %arg6[%c75] : memref<196xf32, #tpu.memory_space<smem>>
    %868 = vector.broadcast %867 : f32 to vector<16x128xf32>
    %869 = arith.mulf %868, %866 : vector<16x128xf32>
    %870 = arith.addf %861, %869 : vector<16x128xf32>
    %c173 = arith.constant 173 : index
    %871 = memref.load %arg6[%c173] : memref<196xf32, #tpu.memory_space<smem>>
    %872 = vector.broadcast %871 : f32 to vector<16x128xf32>
    %873 = arith.mulf %872, %866 : vector<16x128xf32>
    %874 = arith.addf %865, %873 : vector<16x128xf32>
    %875 = vector.extract_strided_slice %838 {offsets = [4, 0], sizes = [16, 128], strides = [1, 1]} : vector<22x128xf32> to vector<16x128xf32>
    %c82 = arith.constant 82 : index
    %876 = memref.load %arg6[%c82] : memref<196xf32, #tpu.memory_space<smem>>
    %877 = vector.broadcast %876 : f32 to vector<16x128xf32>
    %878 = arith.mulf %877, %875 : vector<16x128xf32>
    %879 = arith.addf %870, %878 : vector<16x128xf32>
    %c180 = arith.constant 180 : index
    %880 = memref.load %arg6[%c180] : memref<196xf32, #tpu.memory_space<smem>>
    %881 = vector.broadcast %880 : f32 to vector<16x128xf32>
    %882 = arith.mulf %881, %875 : vector<16x128xf32>
    %883 = arith.addf %874, %882 : vector<16x128xf32>
    %884 = vector.extract_strided_slice %838 {offsets = [5, 0], sizes = [16, 128], strides = [1, 1]} : vector<22x128xf32> to vector<16x128xf32>
    %c89 = arith.constant 89 : index
    %885 = memref.load %arg6[%c89] : memref<196xf32, #tpu.memory_space<smem>>
    %886 = vector.broadcast %885 : f32 to vector<16x128xf32>
    %887 = arith.mulf %886, %884 : vector<16x128xf32>
    %888 = arith.addf %879, %887 : vector<16x128xf32>
    %c187 = arith.constant 187 : index
    %889 = memref.load %arg6[%c187] : memref<196xf32, #tpu.memory_space<smem>>
    %890 = vector.broadcast %889 : f32 to vector<16x128xf32>
    %891 = arith.mulf %890, %884 : vector<16x128xf32>
    %892 = arith.addf %883, %891 : vector<16x128xf32>
    %893 = vector.extract_strided_slice %838 {offsets = [6, 0], sizes = [16, 128], strides = [1, 1]} : vector<22x128xf32> to vector<16x128xf32>
    %c96 = arith.constant 96 : index
    %894 = memref.load %arg6[%c96] : memref<196xf32, #tpu.memory_space<smem>>
    %895 = vector.broadcast %894 : f32 to vector<16x128xf32>
    %896 = arith.mulf %895, %893 : vector<16x128xf32>
    %897 = arith.addf %888, %896 : vector<16x128xf32>
    %c194 = arith.constant 194 : index
    %898 = memref.load %arg6[%c194] : memref<196xf32, #tpu.memory_space<smem>>
    %899 = vector.broadcast %898 : f32 to vector<16x128xf32>
    %900 = arith.mulf %899, %893 : vector<16x128xf32>
    %901 = arith.addf %892, %900 : vector<16x128xf32>
    %c125_i32_46 = arith.constant 125 : i32
    %902 = tpu.dynamic_rotate %518 by %c125_i32_46 dim 1 : vector<22x128xf32>, i32 -> vector<22x128xf32>
    %903 = vector.extract_strided_slice %902 {offsets = [0, 0], sizes = [16, 128], strides = [1, 1]} : vector<22x128xf32> to vector<16x128xf32>
    %c55 = arith.constant 55 : index
    %904 = memref.load %arg6[%c55] : memref<196xf32, #tpu.memory_space<smem>>
    %905 = vector.broadcast %904 : f32 to vector<16x128xf32>
    %906 = arith.mulf %905, %903 : vector<16x128xf32>
    %907 = arith.addf %897, %906 : vector<16x128xf32>
    %c153 = arith.constant 153 : index
    %908 = memref.load %arg6[%c153] : memref<196xf32, #tpu.memory_space<smem>>
    %909 = vector.broadcast %908 : f32 to vector<16x128xf32>
    %910 = arith.mulf %909, %903 : vector<16x128xf32>
    %911 = arith.addf %901, %910 : vector<16x128xf32>
    %912 = vector.extract_strided_slice %902 {offsets = [1, 0], sizes = [16, 128], strides = [1, 1]} : vector<22x128xf32> to vector<16x128xf32>
    %c62 = arith.constant 62 : index
    %913 = memref.load %arg6[%c62] : memref<196xf32, #tpu.memory_space<smem>>
    %914 = vector.broadcast %913 : f32 to vector<16x128xf32>
    %915 = arith.mulf %914, %912 : vector<16x128xf32>
    %916 = arith.addf %907, %915 : vector<16x128xf32>
    %c160 = arith.constant 160 : index
    %917 = memref.load %arg6[%c160] : memref<196xf32, #tpu.memory_space<smem>>
    %918 = vector.broadcast %917 : f32 to vector<16x128xf32>
    %919 = arith.mulf %918, %912 : vector<16x128xf32>
    %920 = arith.addf %911, %919 : vector<16x128xf32>
    %921 = vector.extract_strided_slice %902 {offsets = [2, 0], sizes = [16, 128], strides = [1, 1]} : vector<22x128xf32> to vector<16x128xf32>
    %c69 = arith.constant 69 : index
    %922 = memref.load %arg6[%c69] : memref<196xf32, #tpu.memory_space<smem>>
    %923 = vector.broadcast %922 : f32 to vector<16x128xf32>
    %924 = arith.mulf %923, %921 : vector<16x128xf32>
    %925 = arith.addf %916, %924 : vector<16x128xf32>
    %c167 = arith.constant 167 : index
    %926 = memref.load %arg6[%c167] : memref<196xf32, #tpu.memory_space<smem>>
    %927 = vector.broadcast %926 : f32 to vector<16x128xf32>
    %928 = arith.mulf %927, %921 : vector<16x128xf32>
    %929 = arith.addf %920, %928 : vector<16x128xf32>
    %930 = vector.extract_strided_slice %902 {offsets = [3, 0], sizes = [16, 128], strides = [1, 1]} : vector<22x128xf32> to vector<16x128xf32>
    %c76 = arith.constant 76 : index
    %931 = memref.load %arg6[%c76] : memref<196xf32, #tpu.memory_space<smem>>
    %932 = vector.broadcast %931 : f32 to vector<16x128xf32>
    %933 = arith.mulf %932, %930 : vector<16x128xf32>
    %934 = arith.addf %925, %933 : vector<16x128xf32>
    %c174 = arith.constant 174 : index
    %935 = memref.load %arg6[%c174] : memref<196xf32, #tpu.memory_space<smem>>
    %936 = vector.broadcast %935 : f32 to vector<16x128xf32>
    %937 = arith.mulf %936, %930 : vector<16x128xf32>
    %938 = arith.addf %929, %937 : vector<16x128xf32>
    %939 = vector.extract_strided_slice %902 {offsets = [4, 0], sizes = [16, 128], strides = [1, 1]} : vector<22x128xf32> to vector<16x128xf32>
    %c83 = arith.constant 83 : index
    %940 = memref.load %arg6[%c83] : memref<196xf32, #tpu.memory_space<smem>>
    %941 = vector.broadcast %940 : f32 to vector<16x128xf32>
    %942 = arith.mulf %941, %939 : vector<16x128xf32>
    %943 = arith.addf %934, %942 : vector<16x128xf32>
    %c181 = arith.constant 181 : index
    %944 = memref.load %arg6[%c181] : memref<196xf32, #tpu.memory_space<smem>>
    %945 = vector.broadcast %944 : f32 to vector<16x128xf32>
    %946 = arith.mulf %945, %939 : vector<16x128xf32>
    %947 = arith.addf %938, %946 : vector<16x128xf32>
    %948 = vector.extract_strided_slice %902 {offsets = [5, 0], sizes = [16, 128], strides = [1, 1]} : vector<22x128xf32> to vector<16x128xf32>
    %c90 = arith.constant 90 : index
    %949 = memref.load %arg6[%c90] : memref<196xf32, #tpu.memory_space<smem>>
    %950 = vector.broadcast %949 : f32 to vector<16x128xf32>
    %951 = arith.mulf %950, %948 : vector<16x128xf32>
    %952 = arith.addf %943, %951 : vector<16x128xf32>
    %c188 = arith.constant 188 : index
    %953 = memref.load %arg6[%c188] : memref<196xf32, #tpu.memory_space<smem>>
    %954 = vector.broadcast %953 : f32 to vector<16x128xf32>
    %955 = arith.mulf %954, %948 : vector<16x128xf32>
    %956 = arith.addf %947, %955 : vector<16x128xf32>
    %957 = vector.extract_strided_slice %902 {offsets = [6, 0], sizes = [16, 128], strides = [1, 1]} : vector<22x128xf32> to vector<16x128xf32>
    %c97 = arith.constant 97 : index
    %958 = memref.load %arg6[%c97] : memref<196xf32, #tpu.memory_space<smem>>
    %959 = vector.broadcast %958 : f32 to vector<16x128xf32>
    %960 = arith.mulf %959, %957 : vector<16x128xf32>
    %961 = arith.addf %952, %960 : vector<16x128xf32>
    %c195 = arith.constant 195 : index
    %962 = memref.load %arg6[%c195] : memref<196xf32, #tpu.memory_space<smem>>
    %963 = vector.broadcast %962 : f32 to vector<16x128xf32>
    %964 = arith.mulf %963, %957 : vector<16x128xf32>
    %965 = arith.addf %956, %964 : vector<16x128xf32>
    %966 = vector.extract_strided_slice %961 {offsets = [0, 0], sizes = [16, 16], strides = [1, 1]} : vector<16x128xf32> to vector<16x16xf32>
    %c0_47 = arith.constant 0 : index
    %967 = memref.load %arg7[%c0_47] : memref<2xf32, #tpu.memory_space<smem>>
    %968 = vector.broadcast %967 : f32 to vector<16x16xf32>
    %969 = arith.addf %966, %968 : vector<16x16xf32>
    %970 = arith.mulf %969, %42 : vector<16x16xf32>
    %c0_48 = arith.constant 0 : index
    %c0_49 = arith.constant 0 : index
    %c0_50 = arith.constant 0 : index
    %c0_51 = arith.constant 0 : index
    %971 = vector.load %arg8[%c0_48, %c0_49, %c0_50, %c0_51] : memref<1x2x16x16xf32, #tpu.memory_space<vmem>>, vector<1x1x16x16xf32>
    %972 = vector.shape_cast %971 : vector<1x1x16x16xf32> to vector<16x16xf32>
    %973 = vector.shape_cast %970 : vector<16x16xf32> to vector<1x1x16x16xf32>
    tpu.vector_store %arg8[%c0_48, %c0_49, %c0_50, %c0_51], %973 {strides = array<i32>} : memref<1x2x16x16xf32, #tpu.memory_space<vmem>>, vector<1x1x16x16xf32>,
    %974 = vector.extract_strided_slice %965 {offsets = [0, 0], sizes = [16, 16], strides = [1, 1]} : vector<16x128xf32> to vector<16x16xf32>
    %c1_52 = arith.constant 1 : index
    %975 = memref.load %arg7[%c1_52] : memref<2xf32, #tpu.memory_space<smem>>
    %976 = vector.broadcast %975 : f32 to vector<16x16xf32>
    %977 = arith.addf %974, %976 : vector<16x16xf32>
    %978 = arith.mulf %977, %53 : vector<16x16xf32>
    %c0_53 = arith.constant 0 : index
    %c1_54 = arith.constant 1 : index
    %c0_55 = arith.constant 0 : index
    %c0_56 = arith.constant 0 : index
    %979 = vector.load %arg8[%c0_53, %c1_54, %c0_55, %c0_56] : memref<1x2x16x16xf32, #tpu.memory_space<vmem>>, vector<1x1x16x16xf32>
    %980 = vector.shape_cast %979 : vector<1x1x16x16xf32> to vector<16x16xf32>
    %981 = vector.shape_cast %978 : vector<16x16xf32> to vector<1x1x16x16xf32>
    tpu.vector_store %arg8[%c0_53, %c1_54, %c0_55, %c0_56], %981 {strides = array<i32>} : memref<1x2x16x16xf32, #tpu.memory_space<vmem>>, vector<1x1x16x16xf32>,
    return
  }
  func.func @transform_0(%arg0: i32) -> (i32, i32, i32, i32) {
    %c0_i32 = arith.constant 0 : i32
    %c0_i32_0 = arith.constant 0 : i32
    %c0_i32_1 = arith.constant 0 : i32
    %c0_i32_2 = arith.constant 0 : i32
    return %arg0, %c0_i32, %c0_i32_0, %c0_i32_1 : i32, i32, i32, i32
  }
  func.func @transform_1(%arg0: i32) -> i32 {
    %c0_i32 = arith.constant 0 : i32
    %c0_i32_0 = arith.constant 0 : i32
    return %c0_i32 : i32
  }
  func.func @transform_2(%arg0: i32) -> i32 {
    %c0_i32 = arith.constant 0 : i32
    %c0_i32_0 = arith.constant 0 : i32
    return %c0_i32 : i32
  }
  func.func @transform_3(%arg0: i32) -> i32 {
    %c0_i32 = arith.constant 0 : i32
    %c0_i32_0 = arith.constant 0 : i32
    return %c0_i32 : i32
  }
  func.func @transform_4(%arg0: i32) -> i32 {
    %c0_i32 = arith.constant 0 : i32
    %c0_i32_0 = arith.constant 0 : i32
    return %c0_i32 : i32
  }
  func.func @transform_5(%arg0: i32) -> i32 {
    %c0_i32 = arith.constant 0 : i32
    %c0_i32_0 = arith.constant 0 : i32
    return %c0_i32 : i32
  }
  func.func @transform_6(%arg0: i32) -> i32 {
    %c0_i32 = arith.constant 0 : i32
    %c0_i32_0 = arith.constant 0 : i32
    return %c0_i32 : i32
  }
  func.func @transform_7(%arg0: i32) -> (i32, i32, i32, i32) {
    %c0_i32 = arith.constant 0 : i32
    %c0_i32_0 = arith.constant 0 : i32
    %c0_i32_1 = arith.constant 0 : i32
    %c0_i32_2 = arith.constant 0 : i32
    return %arg0, %c0_i32, %c0_i32_0, %c0_i32_1 : i32, i32, i32, i32
  }
}

</mosaic_0001>

<llo_original>
// kernel: tpu_custom_call.1
$region0: #{tpu_custom_call.1}
  #allocation0 [shape = 'u32[]', space=smem, size = 0x4, offset = 0x4, fixed_abs, tag = 'smem constant byte address 0x4 - core index']
  #allocation1 [shape = 'u32[144,128]{1,0:T(1,128)}', space=vmem, size = 0x12000, scoped, tag = 'internal scratch']
  #allocation2 [shape = 'f32[2,22,128]{2,1,0:T(8,128)}', space=vmem, size = 0x6000, scoped, tag = 'scratch operand']
  %s0 = inlined_call_operand.hbm [shape: f32[2,2,16,16], index: 0, kind: input, shape index: {}]
  %s1 = inlined_call_operand.vmem [shape: f32[4], index: 1, kind: input, shape index: {}]
  %s2 = inlined_call_operand.vmem [shape: f32[2], index: 2, kind: input, shape index: {}]
  %s3 = inlined_call_operand.vmem [shape: f32[4], index: 3, kind: input, shape index: {}]
  %s4 = inlined_call_operand.vmem [shape: f32[2], index: 4, kind: input, shape index: {}]
  %s5 = inlined_call_operand.vmem [shape: f32[196], index: 5, kind: input, shape index: {}]
  %s6 = inlined_call_operand.vmem [shape: f32[2], index: 6, kind: input, shape index: {}]
  %s7 = inlined_call_operand.hbm [shape: f32[2,2,16,16], index: 7, kind: output, shape index: {}]
  %s8 = sld [smem:[#allocation0]]
  $region89: #{tpu_custom_call.1} parent=0
    _
  %s10 = ssub.s32 1, %s8
  %s11 = scalar_select 0, %s10, %s8
  $region1: #{tpu_custom_call.1} parent=0
    #allocation3 [shape = 'u8[32768]{0}', space=vmem, size = 0x8000, scoped, tag = 'input window, operand 0']
    #allocation4 [shape = 's32[2]{0}', space=sflag, size = 0x8, scoped, tag = 'scoped memory for tpu_custom_call.1']
    #allocation5 [shape = 's32[2]{0}', space=sflag, size = 0x8, scoped, tag = 'scoped memory for tpu_custom_call.1']
    #allocation6 [shape = 's32[2]{0}', space=sflag, size = 0x8, scoped, tag = 'scoped memory for tpu_custom_call.1']
    #allocation7 [shape = 'u8[512]{0}', space=smem, size = 0x200, scoped, tag = 'input window, operand 1, single buffered']
    #allocation8 [shape = 'u8[512]{0}', space=smem, size = 0x200, scoped, tag = 'input window, operand 2, single buffered']
    #allocation9 [shape = 's32[1]{0}', space=sflag, size = 0x4, scoped, tag = 'scoped memory for tpu_custom_call.1']
    #allocation10 [shape = 'u8[512]{0}', space=smem, size = 0x200, scoped, tag = 'input window, operand 3, single buffered']
    #allocation11 [shape = 'u8[512]{0}', space=smem, size = 0x200, scoped, tag = 'input window, operand 4, single buffered']
    #allocation12 [shape = 's32[1]{0}', space=sflag, size = 0x4, scoped, tag = 'scoped memory for tpu_custom_call.1']
    #allocation13 [shape = 'u8[1024]{0}', space=smem, size = 0x400, scoped, tag = 'input window, operand 5, single buffered']
    #allocation14 [shape = 'u8[512]{0}', space=smem, size = 0x200, scoped, tag = 'input window, operand 6, single buffered']
    #allocation15 [shape = 's32[1]{0}', space=sflag, size = 0x4, scoped, tag = 'scoped memory for tpu_custom_call.1']
    #allocation16 [shape = 'u8[32768]{0}', space=vmem, size = 0x8000, scoped, tag = 'output window, operand 0']
    %12 = vsyncpa [#allocation4], 0
    %s13 = scalar_lea.sflag [#allocation4], 1
    %14 = vsyncpa %s13, 0
    %15 = vsyncpa [#allocation6], 0
    %16 = vsyncpa [#allocation9], 0
    %17 = vsyncpa [#allocation12], 0
    %18 = vsyncpa [#allocation15], 0
    %19 = vsyncpa [#allocation5], 0
    %s20 = scalar_lea.sflag [#allocation5], 1
    %21 = vsyncpa %s20, 0
    loop: start=0, step=1, limit=4
    $region2: #{tpu_custom_call.1} parent=1 // loop_pre_header
      _
    $region3: #{tpu_custom_call.1} parent=1 // loop_header
      %s23 = sphi 0, %s27
      %p24 = scmp.ge.s32.totalorder %s23, 4
      %s33 = sphi 0, %s35
      %s36 = sphi 0, %s33
      %s37 = sphi 0, %s36
      %s53 = sphi 0, %s37
      %s57 = sphi 0, %s57
      %s59 = sphi 0, %s57
      %s60 = sphi 0, %s59
      %s74 = sphi 0, %s60
      %s78 = sphi 0, %s78
      %s80 = sphi 0, %s78
      %s81 = sphi 0, %s80
      %s95 = sphi 0, %s81
      %s99 = sphi 0, %s99
      %s101 = sphi 0, %s99
      %s102 = sphi 0, %s101
      %s116 = sphi 0, %s102
      %s120 = sphi 0, %s120
      %s122 = sphi 0, %s120
      %s123 = sphi 0, %s122
      %s137 = sphi 0, %s123
      %s141 = sphi 0, %s141
      %s143 = sphi 0, %s141
      %s144 = sphi 0, %s143
      %s158 = sphi 0, %s144
      %s162 = sphi 0, %s162
      %s164 = sphi 0, %s162
      %s165 = sphi 0, %s164
      %s179 = sphi 0, %s165
      %s185 = sphi 0, %s187
      %s188 = sphi 0, %s185
      %s189 = sphi 0, %s188
      %s205 = sphi 0, %s189
    $region4: #{tpu_custom_call.1} parent=1 // loop_header_branch
      %26 = sbr.rel (%p24) target = $region8
    $region5: #{tpu_custom_call.1} parent=1 // loop_body
      %s28 = ssub.s32 %s23, 1
      %s29 = ssub.s32 %s23, 2
      %s30 = sadd.s32 %s23, 1
      %s31 = ssub.s32 %s23, %s30
      %p32 = scmp.eq.s32.totalorder %s31, 0
      %s34 = sadd.s32 %s33, 1
      %s35 = scalar_select %p32, %s33, %s34
      %p38 = pneg %p32
      %p39 = scmp.eq.s32.totalorder %s23, 1
      %p40 = por %p38, %p39
      %p41 = scmp.ne.s32.totalorder %s33, %s36
      %p42 = scmp.eq.s32.totalorder %s23, 0
      %p43 = por %p41, %p42
      %p44 = scmp.ne.s32.totalorder %s33, %s36
      %p45 = scmp.eq.s32.totalorder %s28, 1
      %p46 = por %p44, %p45
      %p47 = scmp.ne.s32.totalorder %s36, %s37
      %p48 = scmp.eq.s32.totalorder %s28, 0
      %p49 = por %p47, %p48
      %p50 = scmp.ne.s32.totalorder %s36, %s37
      %p51 = scmp.eq.s32.totalorder %s29, 1
      %p52 = por %p50, %p51
      %p54 = scmp.ne.s32.totalorder %s37, %s53
      %p55 = scmp.eq.s32.totalorder %s29, 0
      %p56 = por %p54, %p55
      %s58 = sadd.s32 %s57, 1
      %p61 = scmp.eq.s32.totalorder %s23, 1
      %p62 = scmp.ne.s32.totalorder %s57, %s59
      %p63 = scmp.eq.s32.totalorder %s23, 0
      %p64 = por %p62, %p63
      %p65 = scmp.ne.s32.totalorder %s57, %s59
      %p66 = scmp.eq.s32.totalorder %s28, 1
      %p67 = por %p65, %p66
      %p68 = scmp.ne.s32.totalorder %s59, %s60
      %p69 = scmp.eq.s32.totalorder %s28, 0
      %p70 = por %p68, %p69
      %p71 = scmp.ne.s32.totalorder %s59, %s60
      %p72 = scmp.eq.s32.totalorder %s29, 1
      %p73 = por %p71, %p72
      %p75 = scmp.ne.s32.totalorder %s60, %s74
      %p76 = scmp.eq.s32.totalorder %s29, 0
      %p77 = por %p75, %p76
      %s79 = sadd.s32 %s78, 1
      %p82 = scmp.eq.s32.totalorder %s23, 1
      %p83 = scmp.ne.s32.totalorder %s78, %s80
      %p84 = scmp.eq.s32.totalorder %s23, 0
      %p85 = por %p83, %p84
      %p86 = scmp.ne.s32.totalorder %s78, %s80
      %p87 = scmp.eq.s32.totalorder %s28, 1
      %p88 = por %p86, %p87
      %p89 = scmp.ne.s32.totalorder %s80, %s81
      %p90 = scmp.eq.s32.totalorder %s28, 0
      %p91 = por %p89, %p90
      %p92 = scmp.ne.s32.totalorder %s80, %s81
      %p93 = scmp.eq.s32.totalorder %s29, 1
      %p94 = por %p92, %p93
      %p96 = scmp.ne.s32.totalorder %s81, %s95
      %p97 = scmp.eq.s32.totalorder %s29, 0
      %p98 = por %p96, %p97
      %s100 = sadd.s32 %s99, 1
      %p103 = scmp.eq.s32.totalorder %s23, 1
      %p104 = scmp.ne.s32.totalorder %s99, %s101
      %p105 = scmp.eq.s32.totalorder %s23, 0
      %p106 = por %p104, %p105
      %p107 = scmp.ne.s32.totalorder %s99, %s101
      %p108 = scmp.eq.s32.totalorder %s28, 1
      %p109 = por %p107, %p108
      %p110 = scmp.ne.s32.totalorder %s101, %s102
      %p111 = scmp.eq.s32.totalorder %s28, 0
      %p112 = por %p110, %p111
      %p113 = scmp.ne.s32.totalorder %s101, %s102
      %p114 = scmp.eq.s32.totalorder %s29, 1
      %p115 = por %p113, %p114
      %p117 = scmp.ne.s32.totalorder %s102, %s116
      %p118 = scmp.eq.s32.totalorder %s29, 0
      %p119 = por %p117, %p118
      %s121 = sadd.s32 %s120, 1
      %p124 = scmp.eq.s32.totalorder %s23, 1
      %p125 = scmp.ne.s32.totalorder %s120, %s122
      %p126 = scmp.eq.s32.totalorder %s23, 0
      %p127 = por %p125, %p126
      %p128 = scmp.ne.s32.totalorder %s120, %s122
      %p129 = scmp.eq.s32.totalorder %s28, 1
      %p130 = por %p128, %p129
      %p131 = scmp.ne.s32.totalorder %s122, %s123
      %p132 = scmp.eq.s32.totalorder %s28, 0
      %p133 = por %p131, %p132
      %p134 = scmp.ne.s32.totalorder %s122, %s123
      %p135 = scmp.eq.s32.totalorder %s29, 1
      %p136 = por %p134, %p135
      %p138 = scmp.ne.s32.totalorder %s123, %s137
      %p139 = scmp.eq.s32.totalorder %s29, 0
      %p140 = por %p138, %p139
      %s142 = sadd.s32 %s141, 1
      %p145 = scmp.eq.s32.totalorder %s23, 1
      %p146 = scmp.ne.s32.totalorder %s141, %s143
      %p147 = scmp.eq.s32.totalorder %s23, 0
      %p148 = por %p146, %p147
      %p149 = scmp.ne.s32.totalorder %s141, %s143
      %p150 = scmp.eq.s32.totalorder %s28, 1
      %p151 = por %p149, %p150
      %p152 = scmp.ne.s32.totalorder %s143, %s144
      %p153 = scmp.eq.s32.totalorder %s28, 0
      %p154 = por %p152, %p153
      %p155 = scmp.ne.s32.totalorder %s143, %s144
      %p156 = scmp.eq.s32.totalorder %s29, 1
      %p157 = por %p155, %p156
      %p159 = scmp.ne.s32.totalorder %s144, %s158
      %p160 = scmp.eq.s32.totalorder %s29, 0
      %p161 = por %p159, %p160
      %s163 = sadd.s32 %s162, 1
      %p166 = scmp.eq.s32.totalorder %s23, 1
      %p167 = scmp.ne.s32.totalorder %s162, %s164
      %p168 = scmp.eq.s32.totalorder %s23, 0
      %p169 = por %p167, %p168
      %p170 = scmp.ne.s32.totalorder %s162, %s164
      %p171 = scmp.eq.s32.totalorder %s28, 1
      %p172 = por %p170, %p171
      %p173 = scmp.ne.s32.totalorder %s164, %s165
      %p174 = scmp.eq.s32.totalorder %s28, 0
      %p175 = por %p173, %p174
      %p176 = scmp.ne.s32.totalorder %s164, %s165
      %p177 = scmp.eq.s32.totalorder %s29, 1
      %p178 = por %p176, %p177
      %p180 = scmp.ne.s32.totalorder %s165, %s179
      %p181 = scmp.eq.s32.totalorder %s29, 0
      %p182 = por %p180, %p181
      %s183 = ssub.s32 %s23, %s30
      %p184 = scmp.eq.s32.totalorder %s183, 0
      %s186 = sadd.s32 %s185, 1
      %s187 = scalar_select %p184, %s185, %s186
      %p190 = pneg %p184
      %p191 = scmp.eq.s32.totalorder %s23, 1
      %p192 = por %p190, %p191
      %p193 = scmp.ne.s32.totalorder %s185, %s188
      %p194 = scmp.eq.s32.totalorder %s23, 0
      %p195 = por %p193, %p194
      %p196 = scmp.ne.s32.totalorder %s185, %s188
      %p197 = scmp.eq.s32.totalorder %s28, 1
      %p198 = por %p196, %p197
      %p199 = scmp.ne.s32.totalorder %s188, %s189
      %p200 = scmp.eq.s32.totalorder %s28, 0
      %p201 = por %p199, %p200
      %p202 = scmp.ne.s32.totalorder %s188, %s189
      %p203 = scmp.eq.s32.totalorder %s29, 1
      %p204 = por %p202, %p203
      %p206 = scmp.ne.s32.totalorder %s189, %s205
      %p207 = scmp.eq.s32.totalorder %s29, 0
      %p208 = por %p206, %p207
      %p209 = scmp.le.s32.totalorder 1, %s23
      %p210 = scmp.lt.s32.totalorder %s23, 3
      %p211 = pnand %p209, %p210
      %p212 = pneg %p211
      // Predicated region
      $region9: #{tpu_custom_call.1} parent=5 // pred_check
        _
      $region10: #{tpu_custom_call.1} parent=5 // pred_check_branch
        %214 = sbr.rel (%p211) target = $region12
      $region11: #{tpu_custom_call.1} parent=5 // pred_region
        %s215 = ssub.s32 %s23, 1
        // Predicated region
        $region13: #{tpu_custom_call.1} parent=11 // pred_check
          %p216 = pneg %p70
        $region14: #{tpu_custom_call.1} parent=11 // pred_check_branch
          %218 = sbr.rel (%p216) target = $region16
        $region15: #{tpu_custom_call.1} parent=11 // pred_region
          %s220 = ssub.s32 16, 16
          %221 = vsyncadd [#allocation6], %s220
          %s223 = sshll.u32 %s1, 4
          %s224 = int_to_ptr.vmem [resolvable:$true] %s223
          %226 = dma.vmem_to_smem %s224, 16, [#allocation7], [#allocation6]
        $region16: #{tpu_custom_call.1} parent=11 // pred_fallthru
          _
        // Predicated region
        $region17: #{tpu_custom_call.1} parent=11 // pred_check
          %p227 = pneg %p91
        $region18: #{tpu_custom_call.1} parent=11 // pred_check_branch
          %229 = sbr.rel (%p227) target = $region20
        $region19: #{tpu_custom_call.1} parent=11 // pred_region
          %s231 = ssub.s32 16, 16
          %232 = vsyncadd [#allocation9], %s231
          %s234 = sshll.u32 %s2, 4
          %s235 = int_to_ptr.vmem [resolvable:$true] %s234
          %237 = dma.vmem_to_smem %s235, 16, [#allocation8], [#allocation9]
        $region20: #{tpu_custom_call.1} parent=11 // pred_fallthru
          _
        // Predicated region
        $region21: #{tpu_custom_call.1} parent=11 // pred_check
          %p238 = pneg %p112
        $region22: #{tpu_custom_call.1} parent=11 // pred_check_branch
          %240 = sbr.rel (%p238) target = $region24
        $region23: #{tpu_custom_call.1} parent=11 // pred_region
          %s242 = ssub.s32 16, 16
          %243 = vsyncadd [#allocation9], %s242
          %s245 = sshll.u32 %s3, 4
          %s246 = int_to_ptr.vmem [resolvable:$true] %s245
          %248 = dma.vmem_to_smem %s246, 16, [#allocation10], [#allocation9]
        $region24: #{tpu_custom_call.1} parent=11 // pred_fallthru
          _
        // Predicated region
        $region25: #{tpu_custom_call.1} parent=11 // pred_check
          %p249 = pneg %p133
        $region26: #{tpu_custom_call.1} parent=11 // pred_check_branch
          %251 = sbr.rel (%p249) target = $region28
        $region27: #{tpu_custom_call.1} parent=11 // pred_region
          %s253 = ssub.s32 16, 16
          %254 = vsyncadd [#allocation12], %s253
          %s256 = sshll.u32 %s4, 4
          %s257 = int_to_ptr.vmem [resolvable:$true] %s256
          %259 = dma.vmem_to_smem %s257, 16, [#allocation11], [#allocation12]
        $region28: #{tpu_custom_call.1} parent=11 // pred_fallthru
          _
        // Predicated region
        $region29: #{tpu_custom_call.1} parent=11 // pred_check
          %p260 = pneg %p154
        $region30: #{tpu_custom_call.1} parent=11 // pred_check_branch
          %262 = sbr.rel (%p260) target = $region32
        $region31: #{tpu_custom_call.1} parent=11 // pred_region
          %s264 = ssub.s32 32, 32
          %265 = vsyncadd [#allocation12], %s264
          %s267 = sshll.u32 %s5, 4
          %s268 = int_to_ptr.vmem [resolvable:$true] %s267
          %270 = dma.vmem_to_smem %s268, 32, [#allocation13], [#allocation12]
        $region32: #{tpu_custom_call.1} parent=11 // pred_fallthru
          _
        // Predicated region
        $region33: #{tpu_custom_call.1} parent=11 // pred_check
          %p271 = pneg %p175
        $region34: #{tpu_custom_call.1} parent=11 // pred_check_branch
          %273 = sbr.rel (%p271) target = $region36
        $region35: #{tpu_custom_call.1} parent=11 // pred_region
          %s275 = ssub.s32 16, 16
          %276 = vsyncadd [#allocation15], %s275
          %s278 = sshll.u32 %s6, 4
          %s279 = int_to_ptr.vmem [resolvable:$true] %s278
          %281 = dma.vmem_to_smem %s279, 16, [#allocation14], [#allocation15]
        $region36: #{tpu_custom_call.1} parent=11 // pred_fallthru
          _
      $region12: #{tpu_custom_call.1} parent=5 // pred_fallthru
        _
      %p282 = scmp.lt.s32.totalorder %s23, 2
      // Predicated region
      $region37: #{tpu_custom_call.1} parent=5 // pred_check
        %p283 = pneg %p282
      $region38: #{tpu_custom_call.1} parent=5 // pred_check_branch
        %285 = sbr.rel (%p283) target = $region40
      $region39: #{tpu_custom_call.1} parent=5 // pred_region
        // Predicated region
        $region41: #{tpu_custom_call.1} parent=39 // pred_check
          %p286 = pneg %p43
        $region42: #{tpu_custom_call.1} parent=39 // pred_check_branch
          %288 = sbr.rel (%p286) target = $region44
        $region43: #{tpu_custom_call.1} parent=39 // pred_region
          %s289 = sand.u32 %s33, 1
          %s290 = scalar_lea.sflag [#allocation4], %s289
          %s291 = sand.u32 %s33, 1
          %s292 = smul.addr %s291, 32
          %s293 = scalar_lea.vmem [#allocation3], %s292
          %s295 = ssub.s32 512, 512
          %296 = vsyncadd %s290, %s295
          %s297 = smul.addr %s23, 4
          %s298 = smul.addr %s297, 128
          %s299 = scalar_lea.hbm %s0, %s298
          %s300 = sshll.u32 %s293, 4
          %s301 = int_to_ptr.vmem [resolvable:$true] %s300
          %306 = dma.hbm_to_vmem [thread:$0]  %s299, 512, %s301, %s290, 128, 128, 8
        $region44: #{tpu_custom_call.1} parent=39 // pred_fallthru
          _
      $region40: #{tpu_custom_call.1} parent=5 // pred_fallthru
        _
      %p307 = scmp.le.s32.totalorder 1, %s23
      %p308 = scmp.lt.s32.totalorder %s23, 3
      %p309 = pnand %p307, %p308
      %p310 = pneg %p309
      // Predicated region
      $region45: #{tpu_custom_call.1} parent=5 // pred_check
        _
      $region46: #{tpu_custom_call.1} parent=5 // pred_check_branch
        %312 = sbr.rel (%p309) target = $region48
      $region47: #{tpu_custom_call.1} parent=5 // pred_region
        %s313 = ssub.s32 %s23, 1
        %s314 = sand.u32 %s36, 1
        %s315 = scalar_lea.sflag [#allocation4], %s314
        %s316 = sand.u32 %s36, 1
        %s317 = smul.addr %s316, 32
        %s318 = scalar_lea.vmem [#allocation3], %s317
        // Predicated region
        $region49: #{tpu_custom_call.1} parent=47 // pred_check
          %p319 = pneg %p49
        $region50: #{tpu_custom_call.1} parent=47 // pred_check_branch
          %321 = sbr.rel (%p319) target = $region52
        $region51: #{tpu_custom_call.1} parent=47 // pred_region
          %322 = dma.done %s315, 512
        $region52: #{tpu_custom_call.1} parent=47 // pred_fallthru
          _
        // Predicated region
        $region53: #{tpu_custom_call.1} parent=47 // pred_check
          %p323 = pneg %p70
        $region54: #{tpu_custom_call.1} parent=47 // pred_check_branch
          %325 = sbr.rel (%p323) target = $region56
        $region55: #{tpu_custom_call.1} parent=47 // pred_region
          %326 = dma.done [#allocation6], 16
        $region56: #{tpu_custom_call.1} parent=47 // pred_fallthru
          _
        // Predicated region
        $region57: #{tpu_custom_call.1} parent=47 // pred_check
          %p327 = pneg %p91
        $region58: #{tpu_custom_call.1} parent=47 // pred_check_branch
          %329 = sbr.rel (%p327) target = $region60
        $region59: #{tpu_custom_call.1} parent=47 // pred_region
          %330 = dma.done [#allocation9], 16
        $region60: #{tpu_custom_call.1} parent=47 // pred_fallthru
          _
        // Predicated region
        $region61: #{tpu_custom_call.1} parent=47 // pred_check
          %p331 = pneg %p112
        $region62: #{tpu_custom_call.1} parent=47 // pred_check_branch
          %333 = sbr.rel (%p331) target = $region64
        $region63: #{tpu_custom_call.1} parent=47 // pred_region
          %334 = dma.done [#allocation9], 16
        $region64: #{tpu_custom_call.1} parent=47 // pred_fallthru
          _
        // Predicated region
        $region65: #{tpu_custom_call.1} parent=47 // pred_check
          %p335 = pneg %p133
        $region66: #{tpu_custom_call.1} parent=47 // pred_check_branch
          %337 = sbr.rel (%p335) target = $region68
        $region67: #{tpu_custom_call.1} parent=47 // pred_region
          %338 = dma.done [#allocation12], 16
        $region68: #{tpu_custom_call.1} parent=47 // pred_fallthru
          _
        // Predicated region
        $region69: #{tpu_custom_call.1} parent=47 // pred_check
          %p339 = pneg %p154
        $region70: #{tpu_custom_call.1} parent=47 // pred_check_branch
          %341 = sbr.rel (%p339) target = $region72
        $region71: #{tpu_custom_call.1} parent=47 // pred_region
          %342 = dma.done [#allocation12], 32
        $region72: #{tpu_custom_call.1} parent=47 // pred_fallthru
          _
        // Predicated region
        $region73: #{tpu_custom_call.1} parent=47 // pred_check
          %p343 = pneg %p175
        $region74: #{tpu_custom_call.1} parent=47 // pred_check_branch
          %345 = sbr.rel (%p343) target = $region76
        $region75: #{tpu_custom_call.1} parent=47 // pred_region
          %346 = dma.done [#allocation15], 16
        $region76: #{tpu_custom_call.1} parent=47 // pred_fallthru
          _
        %347 = sfence
        %s348 = sand.u32 %s36, 1
        %s349 = scalar_lea.sflag [#allocation4], %s348
        %s350 = sand.u32 %s36, 1
        %s351 = smul.addr %s350, 32
        %s352 = scalar_lea.vmem [#allocation3], %s351
        %p353 = pneg %p49
        %p354 = pneg %p46
        %p355 = pneg %p70
        %p356 = pneg %p67
        %p357 = pneg %p91
        %p358 = pneg %p88
        %p359 = pneg %p112
        %p360 = pneg %p109
        %p361 = pneg %p133
        %p362 = pneg %p130
        %p363 = pneg %p154
        %p364 = pneg %p151
        %p365 = pneg %p175
        %p366 = pneg %p172
        %p367 = pneg %p201
        %p368 = pneg %p198
        %s369 = sand.u32 %s188, 1
        %s370 = scalar_lea.sflag [#allocation5], %s369
        %s371 = sand.u32 %s188, 1
        %s372 = smul.addr %s371, 32
        %s373 = scalar_lea.vmem [#allocation16], %s372
        %v374 = vld [vmem:[%s318] sm:$0xff]
        %v375 = vld [vmem:[%s318 + $0x8] sm:$0xff]
        %s376 = scalar_lea.vmem %s318, 16 [#allocation3]
        %v377 = vld [vmem:[%s376] sm:$0xff]
        %v378 = vld [vmem:[%s376 + $0x8] sm:$0xff]
        %v379 = vadd.f32 %v374, %v377
        %v380 = vadd.f32 %v375, %v378
        %v381 = vmul.f32 %v379, 0.5
        %v382 = vmul.f32 %v380, 0.5
        %v383 = vmax.f32 %v374, %v377
        %v384 = vmax.f32 %v375, %v378
        %s385 = sld [smem:[#allocation7]]
        %v386 = vstv %s385
        %v387 = vmul.f32 %v386, %v381
        %v388 = vmul.f32 %v386, %v382
        %s389 = sld [smem:[#allocation7 + $0x1]]
        %v390 = vstv %s389
        %v391 = vmul.f32 %v390, %v383
        %v392 = vmul.f32 %v390, %v384
        %v393 = vadd.f32 %v387, %v391
        %v394 = vadd.f32 %v388, %v392
        %s395 = sld [smem:[#allocation8]]
        %v396 = vstv %s395
        %v397 = vadd.f32 %v393, %v396
        %v398 = vadd.f32 %v394, %v396
        %v399 = vmax.f32 %v397, 0.0
        %v400 = vmax.f32 %v398, 0.0
        %s401 = sld [smem:[#allocation7 + $0x2]]
        %v402 = vstv %s401
        %v403 = vmul.f32 %v402, %v381
        %v404 = vmul.f32 %v402, %v382
        %s405 = sld [smem:[#allocation7 + $0x3]]
        %v406 = vstv %s405
        %v407 = vmul.f32 %v406, %v383
        %v408 = vmul.f32 %v406, %v384
        %v409 = vadd.f32 %v403, %v407
        %v410 = vadd.f32 %v404, %v408
        %s411 = sld [smem:[#allocation8 + $0x1]]
        %v412 = vstv %s411
        %v413 = vadd.f32 %v409, %v412
        %v414 = vadd.f32 %v410, %v412
        %v415 = vmax.f32 %v413, 0.0
        %v416 = vmax.f32 %v414, 0.0
        %s417 = sld [smem:[#allocation10]]
        %v418 = vstv %s417
        %v419 = vmul.f32 %v418, %v399
        %v420 = vmul.f32 %v418, %v400
        %s421 = sld [smem:[#allocation10 + $0x1]]
        %v422 = vstv %s421
        %v423 = vmul.f32 %v422, %v415
        %v424 = vmul.f32 %v422, %v416
        %v425 = vadd.f32 %v419, %v423
        %v426 = vadd.f32 %v420, %v424
        %s427 = sld [smem:[#allocation11]]
        %v428 = vstv %s427
        %v429 = vadd.f32 %v425, %v428
        %v430 = vadd.f32 %v426, %v428
        %v431 = vmul.f32 %v429, %v374
        %v432 = vmul.f32 %v430, %v375
        %s433 = sld [smem:[#allocation10 + $0x2]]
        %v434 = vstv %s433
        %v435 = vmul.f32 %v434, %v399
        %v436 = vmul.f32 %v434, %v400
        %s437 = sld [smem:[#allocation10 + $0x3]]
        %v438 = vstv %s437
        %v439 = vmul.f32 %v438, %v415
        %v440 = vmul.f32 %v438, %v416
        %v441 = vadd.f32 %v435, %v439
        %v442 = vadd.f32 %v436, %v440
        %s443 = sld [smem:[#allocation11 + $0x1]]
        %v444 = vstv %s443
        %v445 = vadd.f32 %v441, %v444
        %v446 = vadd.f32 %v442, %v444
        %v447 = vmul.f32 %v445, %v377
        %v448 = vmul.f32 %v446, %v378
        %449 = vst [vmem:[#allocation2] sm:$0xff] 0.0
        %450 = vst [vmem:[#allocation2 + $0x8] sm:$0xff] 0.0
        %451 = vst [vmem:[#allocation2 + $0x10] sm:$0x3f] 0.0
        %452 = vst [vmem:[#allocation2 + $0x18] sm:$0xff] 0.0
        %453 = vst [vmem:[#allocation2 + $0x20] sm:$0xff] 0.0
        %454 = vst [vmem:[#allocation2 + $0x28] sm:$0x3f] 0.0
        %v455 = vadd.f32 %v431, %v447
        %v456 = vadd.f32 %v432, %v448
        %v457 = vmul.f32 %v455, 0.5
        %v458 = vmul.f32 %v456, 0.5
        %v459 = vmax.f32 %v431, %v447
        %v460 = vmax.f32 %v432, %v448
        %vm461 = vcmask 130048
        %462 = vst.msk [vmem:[#allocation2 + $0x3] sm:$0xff] %vm461, %v457
        %463 = vst.msk [vmem:[#allocation2 + $0xb] sm:$0xff] %vm461, %v458
        %s464 = scalar_lea.vmem [#allocation2], 24
        %465 = vst.msk [vmem:[%s464 + $0x3] sm:$0xff] %vm461, %v459
        %466 = vst.msk [vmem:[%s464 + $0xb] sm:$0xff] %vm461, %v460
        %v467 = vld [vmem:[#allocation2] sm:$0xff]
        %v468 = vld [vmem:[#allocation2 + $0x8] sm:$0xff]
        %v469 = vld [vmem:[#allocation2 + $0x10] sm:$0x3f]
        %470 = vrot.lane.b32.xlu0 %v467, 3
        %v471 = vpop.permute.xlu0 %470
        %472 = vrot.lane.b32.xlu0 %v468, 3
        %v473 = vpop.permute.xlu0 %472
        %474 = vrot.lane.b32.xlu0 %v469, 3
        %v475 = vpop.permute.xlu0 %474
        %s476 = sld [smem:[#allocation13]]
        %v477 = vstv %s476
        %v478 = vmul.f32 %v477, %v471
        %v479 = vmul.f32 %v477, %v473
        %v480 = vadd.f32 %v478, 0.0
        %v481 = vadd.f32 %v479, 0.0
        %s482 = sld [smem:[#allocation13 + $0x62]]
        %v483 = vstv %s482
        %v484 = vmul.f32 %v483, %v471
        %v485 = vmul.f32 %v483, %v473
        %v486 = vadd.f32 %v484, 0.0
        %v487 = vadd.f32 %v485, 0.0
        %s488 = sld [smem:[#allocation13 + $0x7]]
        %v489 = vstv %s488
        %v490 = vmul.f32 %v489, %v471
        %v491 = vmul.f32 %v489, %v473
        %v492 = vmul.f32 %v489, %v475
        %vm496 = vcmask 1046528
        %v497 = vrot.slane %v490, 1
        %v498 = vrot.slane %v491, 1
        %v499 = vsel %vm496, %v497, %v498
        %v500 = vrot.slane %v492, 1
        %v501 = vsel %vm496, %v498, %v500
        %v504 = vadd.f32 %v480, %v499
        %v505 = vadd.f32 %v481, %v501
        %s506 = sld [smem:[#allocation13 + $0x69]]
        %v507 = vstv %s506
        %v508 = vmul.f32 %v507, %v471
        %v509 = vmul.f32 %v507, %v473
        %v510 = vmul.f32 %v507, %v475
        %v514 = vrot.slane %v508, 1
        %v515 = vrot.slane %v509, 1
        %v516 = vsel %vm496, %v514, %v515
        %v517 = vrot.slane %v510, 1
        %v518 = vsel %vm496, %v515, %v517
        %v521 = vadd.f32 %v486, %v516
        %v522 = vadd.f32 %v487, %v518
        %s523 = sld [smem:[#allocation13 + $0xe]]
        %v524 = vstv %s523
        %v525 = vmul.f32 %v524, %v471
        %v526 = vmul.f32 %v524, %v473
        %v527 = vmul.f32 %v524, %v475
        %vm531 = vcmask 1045504
        %v532 = vrot.slane %v525, 2
        %v533 = vrot.slane %v526, 2
        %v534 = vsel %vm531, %v532, %v533
        %v535 = vrot.slane %v527, 2
        %v536 = vsel %vm531, %v533, %v535
        %v539 = vadd.f32 %v504, %v534
        %v540 = vadd.f32 %v505, %v536
        %s541 = sld [smem:[#allocation13 + $0x70]]
        %v542 = vstv %s541
        %v543 = vmul.f32 %v542, %v471
        %v544 = vmul.f32 %v542, %v473
        %v545 = vmul.f32 %v542, %v475
        %v549 = vrot.slane %v543, 2
        %v550 = vrot.slane %v544, 2
        %v551 = vsel %vm531, %v549, %v550
        %v552 = vrot.slane %v545, 2
        %v553 = vsel %vm531, %v550, %v552
        %v556 = vadd.f32 %v521, %v551
        %v557 = vadd.f32 %v522, %v553
        %s558 = sld [smem:[#allocation13 + $0x15]]
        %v559 = vstv %s558
        %v560 = vmul.f32 %v559, %v471
        %v561 = vmul.f32 %v559, %v473
        %v562 = vmul.f32 %v559, %v475
        %vm566 = vcmask 1044480
        %v567 = vrot.slane %v560, 3
        %v568 = vrot.slane %v561, 3
        %v569 = vsel %vm566, %v567, %v568
        %v570 = vrot.slane %v562, 3
        %v571 = vsel %vm566, %v568, %v570
        %v574 = vadd.f32 %v539, %v569
        %v575 = vadd.f32 %v540, %v571
        %s576 = sld [smem:[#allocation13 + $0x77]]
        %v577 = vstv %s576
        %v578 = vmul.f32 %v577, %v471
        %v579 = vmul.f32 %v577, %v473
        %v580 = vmul.f32 %v577, %v475
        %v584 = vrot.slane %v578, 3
        %v585 = vrot.slane %v579, 3
        %v586 = vsel %vm566, %v584, %v585
        %v587 = vrot.slane %v580, 3
        %v588 = vsel %vm566, %v585, %v587
        %v591 = vadd.f32 %v556, %v586
        %v592 = vadd.f32 %v557, %v588
        %s593 = sld [smem:[#allocation13 + $0x1c]]
        %v594 = vstv %s593
        %v595 = vmul.f32 %v594, %v471
        %v596 = vmul.f32 %v594, %v473
        %v597 = vmul.f32 %v594, %v475
        %vm601 = vcmask 1043456
        %v602 = vrot.slane %v595, 4
        %v603 = vrot.slane %v596, 4
        %v604 = vsel %vm601, %v602, %v603
        %v605 = vrot.slane %v597, 4
        %v606 = vsel %vm601, %v603, %v605
        %v609 = vadd.f32 %v574, %v604
        %v610 = vadd.f32 %v575, %v606
        %s611 = sld [smem:[#allocation13 + $0x7e]]
        %v612 = vstv %s611
        %v613 = vmul.f32 %v612, %v471
        %v614 = vmul.f32 %v612, %v473
        %v615 = vmul.f32 %v612, %v475
        %v619 = vrot.slane %v613, 4
        %v620 = vrot.slane %v614, 4
        %v621 = vsel %vm601, %v619, %v620
        %v622 = vrot.slane %v615, 4
        %v623 = vsel %vm601, %v620, %v622
        %v626 = vadd.f32 %v591, %v621
        %v627 = vadd.f32 %v592, %v623
        %s628 = sld [smem:[#allocation13 + $0x23]]
        %v629 = vstv %s628
        %v630 = vmul.f32 %v629, %v471
        %v631 = vmul.f32 %v629, %v473
        %v632 = vmul.f32 %v629, %v475
        %vm636 = vcmask 1042432
        %v637 = vrot.slane %v630, 5
        %v638 = vrot.slane %v631, 5
        %v639 = vsel %vm636, %v637, %v638
        %v640 = vrot.slane %v632, 5
        %v641 = vsel %vm636, %v638, %v640
        %v644 = vadd.f32 %v609, %v639
        %v645 = vadd.f32 %v610, %v641
        %s646 = sld [smem:[#allocation13 + $0x85]]
        %v647 = vstv %s646
        %v648 = vmul.f32 %v647, %v471
        %v649 = vmul.f32 %v647, %v473
        %v650 = vmul.f32 %v647, %v475
        %v654 = vrot.slane %v648, 5
        %v655 = vrot.slane %v649, 5
        %v656 = vsel %vm636, %v654, %v655
        %v657 = vrot.slane %v650, 5
        %v658 = vsel %vm636, %v655, %v657
        %v661 = vadd.f32 %v626, %v656
        %v662 = vadd.f32 %v627, %v658
        %s663 = sld [smem:[#allocation13 + $0x2a]]
        %v664 = vstv %s663
        %v665 = vmul.f32 %v664, %v471
        %v666 = vmul.f32 %v664, %v473
        %v667 = vmul.f32 %v664, %v475
        %vm671 = vcmask 1041408
        %v672 = vrot.slane %v665, 6
        %v673 = vrot.slane %v666, 6
        %v674 = vsel %vm671, %v672, %v673
        %v675 = vrot.slane %v667, 6
        %v676 = vsel %vm671, %v673, %v675
        %v679 = vadd.f32 %v644, %v674
        %v680 = vadd.f32 %v645, %v676
        %s681 = sld [smem:[#allocation13 + $0x8c]]
        %v682 = vstv %s681
        %v683 = vmul.f32 %v682, %v471
        %v684 = vmul.f32 %v682, %v473
        %v685 = vmul.f32 %v682, %v475
        %v689 = vrot.slane %v683, 6
        %v690 = vrot.slane %v684, 6
        %v691 = vsel %vm671, %v689, %v690
        %v692 = vrot.slane %v685, 6
        %v693 = vsel %vm671, %v690, %v692
        %v696 = vadd.f32 %v661, %v691
        %v697 = vadd.f32 %v662, %v693
        %698 = vrot.lane.b32.xlu0 %v467, 2
        %v699 = vpop.permute.xlu0 %698
        %700 = vrot.lane.b32.xlu0 %v468, 2
        %v701 = vpop.permute.xlu0 %700
        %702 = vrot.lane.b32.xlu0 %v469, 2
        %v703 = vpop.permute.xlu0 %702
        %s704 = sld [smem:[#allocation13 + $0x1]]
        %v705 = vstv %s704
        %v706 = vmul.f32 %v705, %v699
        %v707 = vmul.f32 %v705, %v701
        %v708 = vadd.f32 %v679, %v706
        %v709 = vadd.f32 %v680, %v707
        %s710 = sld [smem:[#allocation13 + $0x63]]
        %v711 = vstv %s710
        %v712 = vmul.f32 %v711, %v699
        %v713 = vmul.f32 %v711, %v701
        %v714 = vadd.f32 %v696, %v712
        %v715 = vadd.f32 %v697, %v713
        %s716 = sld [smem:[#allocation13 + $0x8]]
        %v717 = vstv %s716
        %v718 = vmul.f32 %v717, %v699
        %v719 = vmul.f32 %v717, %v701
        %v720 = vmul.f32 %v717, %v703
        %v724 = vrot.slane %v718, 1
        %v725 = vrot.slane %v719, 1
        %v726 = vsel %vm496, %v724, %v725
        %v727 = vrot.slane %v720, 1
        %v728 = vsel %vm496, %v725, %v727
        %v731 = vadd.f32 %v708, %v726
        %v732 = vadd.f32 %v709, %v728
        %s733 = sld [smem:[#allocation13 + $0x6a]]
        %v734 = vstv %s733
        %v735 = vmul.f32 %v734, %v699
        %v736 = vmul.f32 %v734, %v701
        %v737 = vmul.f32 %v734, %v703
        %v741 = vrot.slane %v735, 1
        %v742 = vrot.slane %v736, 1
        %v743 = vsel %vm496, %v741, %v742
        %v744 = vrot.slane %v737, 1
        %v745 = vsel %vm496, %v742, %v744
        %v748 = vadd.f32 %v714, %v743
        %v749 = vadd.f32 %v715, %v745
        %s750 = sld [smem:[#allocation13 + $0xf]]
        %v751 = vstv %s750
        %v752 = vmul.f32 %v751, %v699
        %v753 = vmul.f32 %v751, %v701
        %v754 = vmul.f32 %v751, %v703
        %v758 = vrot.slane %v752, 2
        %v759 = vrot.slane %v753, 2
        %v760 = vsel %vm531, %v758, %v759
        %v761 = vrot.slane %v754, 2
        %v762 = vsel %vm531, %v759, %v761
        %v765 = vadd.f32 %v731, %v760
        %v766 = vadd.f32 %v732, %v762
        %s767 = sld [smem:[#allocation13 + $0x71]]
        %v768 = vstv %s767
        %v769 = vmul.f32 %v768, %v699
        %v770 = vmul.f32 %v768, %v701
        %v771 = vmul.f32 %v768, %v703
        %v775 = vrot.slane %v769, 2
        %v776 = vrot.slane %v770, 2
        %v777 = vsel %vm531, %v775, %v776
        %v778 = vrot.slane %v771, 2
        %v779 = vsel %vm531, %v776, %v778
        %v782 = vadd.f32 %v748, %v777
        %v783 = vadd.f32 %v749, %v779
        %s784 = sld [smem:[#allocation13 + $0x16]]
        %v785 = vstv %s784
        %v786 = vmul.f32 %v785, %v699
        %v787 = vmul.f32 %v785, %v701
        %v788 = vmul.f32 %v785, %v703
        %v792 = vrot.slane %v786, 3
        %v793 = vrot.slane %v787, 3
        %v794 = vsel %vm566, %v792, %v793
        %v795 = vrot.slane %v788, 3
        %v796 = vsel %vm566, %v793, %v795
        %v799 = vadd.f32 %v765, %v794
        %v800 = vadd.f32 %v766, %v796
        %s801 = sld [smem:[#allocation13 + $0x78]]
        %v802 = vstv %s801
        %v803 = vmul.f32 %v802, %v699
        %v804 = vmul.f32 %v802, %v701
        %v805 = vmul.f32 %v802, %v703
        %v809 = vrot.slane %v803, 3
        %v810 = vrot.slane %v804, 3
        %v811 = vsel %vm566, %v809, %v810
        %v812 = vrot.slane %v805, 3
        %v813 = vsel %vm566, %v810, %v812
        %v816 = vadd.f32 %v782, %v811
        %v817 = vadd.f32 %v783, %v813
        %s818 = sld [smem:[#allocation13 + $0x1d]]
        %v819 = vstv %s818
        %v820 = vmul.f32 %v819, %v699
        %v821 = vmul.f32 %v819, %v701
        %v822 = vmul.f32 %v819, %v703
        %v826 = vrot.slane %v820, 4
        %v827 = vrot.slane %v821, 4
        %v828 = vsel %vm601, %v826, %v827
        %v829 = vrot.slane %v822, 4
        %v830 = vsel %vm601, %v827, %v829
        %v833 = vadd.f32 %v799, %v828
        %v834 = vadd.f32 %v800, %v830
        %s835 = sld [smem:[#allocation13 + $0x7f]]
        %v836 = vstv %s835
        %v837 = vmul.f32 %v836, %v699
        %v838 = vmul.f32 %v836, %v701
        %v839 = vmul.f32 %v836, %v703
        %v843 = vrot.slane %v837, 4
        %v844 = vrot.slane %v838, 4
        %v845 = vsel %vm601, %v843, %v844
        %v846 = vrot.slane %v839, 4
        %v847 = vsel %vm601, %v844, %v846
        %v850 = vadd.f32 %v816, %v845
        %v851 = vadd.f32 %v817, %v847
        %s852 = sld [smem:[#allocation13 + $0x24]]
        %v853 = vstv %s852
        %v854 = vmul.f32 %v853, %v699
        %v855 = vmul.f32 %v853, %v701
        %v856 = vmul.f32 %v853, %v703
        %v860 = vrot.slane %v854, 5
        %v861 = vrot.slane %v855, 5
        %v862 = vsel %vm636, %v860, %v861
        %v863 = vrot.slane %v856, 5
        %v864 = vsel %vm636, %v861, %v863
        %v867 = vadd.f32 %v833, %v862
        %v868 = vadd.f32 %v834, %v864
        %s869 = sld [smem:[#allocation13 + $0x86]]
        %v870 = vstv %s869
        %v871 = vmul.f32 %v870, %v699
        %v872 = vmul.f32 %v870, %v701
        %v873 = vmul.f32 %v870, %v703
        %v877 = vrot.slane %v871, 5
        %v878 = vrot.slane %v872, 5
        %v879 = vsel %vm636, %v877, %v878
        %v880 = vrot.slane %v873, 5
        %v881 = vsel %vm636, %v878, %v880
        %v884 = vadd.f32 %v850, %v879
        %v885 = vadd.f32 %v851, %v881
        %s886 = sld [smem:[#allocation13 + $0x2b]]
        %v887 = vstv %s886
        %v888 = vmul.f32 %v887, %v699
        %v889 = vmul.f32 %v887, %v701
        %v890 = vmul.f32 %v887, %v703
        %v894 = vrot.slane %v888, 6
        %v895 = vrot.slane %v889, 6
        %v896 = vsel %vm671, %v894, %v895
        %v897 = vrot.slane %v890, 6
        %v898 = vsel %vm671, %v895, %v897
        %v901 = vadd.f32 %v867, %v896
        %v902 = vadd.f32 %v868, %v898
        %s903 = sld [smem:[#allocation13 + $0x8d]]
        %v904 = vstv %s903
        %v905 = vmul.f32 %v904, %v699
        %v906 = vmul.f32 %v904, %v701
        %v907 = vmul.f32 %v904, %v703
        %v911 = vrot.slane %v905, 6
        %v912 = vrot.slane %v906, 6
        %v913 = vsel %vm671, %v911, %v912
        %v914 = vrot.slane %v907, 6
        %v915 = vsel %vm671, %v912, %v914
        %v918 = vadd.f32 %v884, %v913
        %v919 = vadd.f32 %v885, %v915
        %920 = vrot.lane.b32.xlu0 %v467, 1
        %v921 = vpop.permute.xlu0 %920
        %922 = vrot.lane.b32.xlu0 %v468, 1
        %v923 = vpop.permute.xlu0 %922
        %924 = vrot.lane.b32.xlu0 %v469, 1
        %v925 = vpop.permute.xlu0 %924
        %s926 = sld [smem:[#allocation13 + $0x2]]
        %v927 = vstv %s926
        %v928 = vmul.f32 %v927, %v921
        %v929 = vmul.f32 %v927, %v923
        %v930 = vadd.f32 %v901, %v928
        %v931 = vadd.f32 %v902, %v929
        %s932 = sld [smem:[#allocation13 + $0x64]]
        %v933 = vstv %s932
        %v934 = vmul.f32 %v933, %v921
        %v935 = vmul.f32 %v933, %v923
        %v936 = vadd.f32 %v918, %v934
        %v937 = vadd.f32 %v919, %v935
        %s938 = sld [smem:[#allocation13 + $0x9]]
        %v939 = vstv %s938
        %v940 = vmul.f32 %v939, %v921
        %v941 = vmul.f32 %v939, %v923
        %v942 = vmul.f32 %v939, %v925
        %v946 = vrot.slane %v940, 1
        %v947 = vrot.slane %v941, 1
        %v948 = vsel %vm496, %v946, %v947
        %v949 = vrot.slane %v942, 1
        %v950 = vsel %vm496, %v947, %v949
        %v953 = vadd.f32 %v930, %v948
        %v954 = vadd.f32 %v931, %v950
        %s955 = sld [smem:[#allocation13 + $0x6b]]
        %v956 = vstv %s955
        %v957 = vmul.f32 %v956, %v921
        %v958 = vmul.f32 %v956, %v923
        %v959 = vmul.f32 %v956, %v925
        %v963 = vrot.slane %v957, 1
        %v964 = vrot.slane %v958, 1
        %v965 = vsel %vm496, %v963, %v964
        %v966 = vrot.slane %v959, 1
        %v967 = vsel %vm496, %v964, %v966
        %v970 = vadd.f32 %v936, %v965
        %v971 = vadd.f32 %v937, %v967
        %s972 = sld [smem:[#allocation13 + $0x10]]
        %v973 = vstv %s972
        %v974 = vmul.f32 %v973, %v921
        %v975 = vmul.f32 %v973, %v923
        %v976 = vmul.f32 %v973, %v925
        %v980 = vrot.slane %v974, 2
        %v981 = vrot.slane %v975, 2
        %v982 = vsel %vm531, %v980, %v981
        %v983 = vrot.slane %v976, 2
        %v984 = vsel %vm531, %v981, %v983
        %v987 = vadd.f32 %v953, %v982
        %v988 = vadd.f32 %v954, %v984
        %s989 = sld [smem:[#allocation13 + $0x72]]
        %v990 = vstv %s989
        %v991 = vmul.f32 %v990, %v921
        %v992 = vmul.f32 %v990, %v923
        %v993 = vmul.f32 %v990, %v925
        %v997 = vrot.slane %v991, 2
        %v998 = vrot.slane %v992, 2
        %v999 = vsel %vm531, %v997, %v998
        %v1000 = vrot.slane %v993, 2
        %v1001 = vsel %vm531, %v998, %v1000
        %v1004 = vadd.f32 %v970, %v999
        %v1005 = vadd.f32 %v971, %v1001
        %s1006 = sld [smem:[#allocation13 + $0x17]]
        %v1007 = vstv %s1006
        %v1008 = vmul.f32 %v1007, %v921
        %v1009 = vmul.f32 %v1007, %v923
        %v1010 = vmul.f32 %v1007, %v925
        %v1014 = vrot.slane %v1008, 3
        %v1015 = vrot.slane %v1009, 3
        %v1016 = vsel %vm566, %v1014, %v1015
        %v1017 = vrot.slane %v1010, 3
        %v1018 = vsel %vm566, %v1015, %v1017
        %v1021 = vadd.f32 %v987, %v1016
        %v1022 = vadd.f32 %v988, %v1018
        %s1023 = sld [smem:[#allocation13 + $0x79]]
        %v1024 = vstv %s1023
        %v1025 = vmul.f32 %v1024, %v921
        %v1026 = vmul.f32 %v1024, %v923
        %v1027 = vmul.f32 %v1024, %v925
        %v1031 = vrot.slane %v1025, 3
        %v1032 = vrot.slane %v1026, 3
        %v1033 = vsel %vm566, %v1031, %v1032
        %v1034 = vrot.slane %v1027, 3
        %v1035 = vsel %vm566, %v1032, %v1034
        %v1038 = vadd.f32 %v1004, %v1033
        %v1039 = vadd.f32 %v1005, %v1035
        %s1040 = sld [smem:[#allocation13 + $0x1e]]
        %v1041 = vstv %s1040
        %v1042 = vmul.f32 %v1041, %v921
        %v1043 = vmul.f32 %v1041, %v923
        %v1044 = vmul.f32 %v1041, %v925
        %v1048 = vrot.slane %v1042, 4
        %v1049 = vrot.slane %v1043, 4
        %v1050 = vsel %vm601, %v1048, %v1049
        %v1051 = vrot.slane %v1044, 4
        %v1052 = vsel %vm601, %v1049, %v1051
        %v1055 = vadd.f32 %v1021, %v1050
        %v1056 = vadd.f32 %v1022, %v1052
        %s1057 = sld [smem:[#allocation13 + $0x80]]
        %v1058 = vstv %s1057
        %v1059 = vmul.f32 %v1058, %v921
        %v1060 = vmul.f32 %v1058, %v923
        %v1061 = vmul.f32 %v1058, %v925
        %v1065 = vrot.slane %v1059, 4
        %v1066 = vrot.slane %v1060, 4
        %v1067 = vsel %vm601, %v1065, %v1066
        %v1068 = vrot.slane %v1061, 4
        %v1069 = vsel %vm601, %v1066, %v1068
        %v1072 = vadd.f32 %v1038, %v1067
        %v1073 = vadd.f32 %v1039, %v1069
        %s1074 = sld [smem:[#allocation13 + $0x25]]
        %v1075 = vstv %s1074
        %v1076 = vmul.f32 %v1075, %v921
        %v1077 = vmul.f32 %v1075, %v923
        %v1078 = vmul.f32 %v1075, %v925
        %v1082 = vrot.slane %v1076, 5
        %v1083 = vrot.slane %v1077, 5
        %v1084 = vsel %vm636, %v1082, %v1083
        %v1085 = vrot.slane %v1078, 5
        %v1086 = vsel %vm636, %v1083, %v1085
        %v1089 = vadd.f32 %v1055, %v1084
        %v1090 = vadd.f32 %v1056, %v1086
        %s1091 = sld [smem:[#allocation13 + $0x87]]
        %v1092 = vstv %s1091
        %v1093 = vmul.f32 %v1092, %v921
        %v1094 = vmul.f32 %v1092, %v923
        %v1095 = vmul.f32 %v1092, %v925
        %v1099 = vrot.slane %v1093, 5
        %v1100 = vrot.slane %v1094, 5
        %v1101 = vsel %vm636, %v1099, %v1100
        %v1102 = vrot.slane %v1095, 5
        %v1103 = vsel %vm636, %v1100, %v1102
        %v1106 = vadd.f32 %v1072, %v1101
        %v1107 = vadd.f32 %v1073, %v1103
        %s1108 = sld [smem:[#allocation13 + $0x2c]]
        %v1109 = vstv %s1108
        %v1110 = vmul.f32 %v1109, %v921
        %v1111 = vmul.f32 %v1109, %v923
        %v1112 = vmul.f32 %v1109, %v925
        %v1116 = vrot.slane %v1110, 6
        %v1117 = vrot.slane %v1111, 6
        %v1118 = vsel %vm671, %v1116, %v1117
        %v1119 = vrot.slane %v1112, 6
        %v1120 = vsel %vm671, %v1117, %v1119
        %v1123 = vadd.f32 %v1089, %v1118
        %v1124 = vadd.f32 %v1090, %v1120
        %s1125 = sld [smem:[#allocation13 + $0x8e]]
        %v1126 = vstv %s1125
        %v1127 = vmul.f32 %v1126, %v921
        %v1128 = vmul.f32 %v1126, %v923
        %v1129 = vmul.f32 %v1126, %v925
        %v1133 = vrot.slane %v1127, 6
        %v1134 = vrot.slane %v1128, 6
        %v1135 = vsel %vm671, %v1133, %v1134
        %v1136 = vrot.slane %v1129, 6
        %v1137 = vsel %vm671, %v1134, %v1136
        %v1140 = vadd.f32 %v1106, %v1135
        %v1141 = vadd.f32 %v1107, %v1137
        %s1142 = sld [smem:[#allocation13 + $0x3]]
        %v1143 = vstv %s1142
        %v1144 = vmul.f32 %v1143, %v467
        %v1145 = vmul.f32 %v1143, %v468
        %v1146 = vadd.f32 %v1123, %v1144
        %v1147 = vadd.f32 %v1124, %v1145
        %s1148 = sld [smem:[#allocation13 + $0x65]]
        %v1149 = vstv %s1148
        %v1150 = vmul.f32 %v1149, %v467
        %v1151 = vmul.f32 %v1149, %v468
        %v1152 = vadd.f32 %v1140, %v1150
        %v1153 = vadd.f32 %v1141, %v1151
        %s1154 = sld [smem:[#allocation13 + $0xa]]
        %v1155 = vstv %s1154
        %v1156 = vmul.f32 %v1155, %v467
        %v1157 = vmul.f32 %v1155, %v468
        %v1158 = vmul.f32 %v1155, %v469
        %v1162 = vrot.slane %v1156, 1
        %v1163 = vrot.slane %v1157, 1
        %v1164 = vsel %vm496, %v1162, %v1163
        %v1165 = vrot.slane %v1158, 1
        %v1166 = vsel %vm496, %v1163, %v1165
        %v1169 = vadd.f32 %v1146, %v1164
        %v1170 = vadd.f32 %v1147, %v1166
        %s1171 = sld [smem:[#allocation13 + $0x6c]]
        %v1172 = vstv %s1171
        %v1173 = vmul.f32 %v1172, %v467
        %v1174 = vmul.f32 %v1172, %v468
        %v1175 = vmul.f32 %v1172, %v469
        %v1179 = vrot.slane %v1173, 1
        %v1180 = vrot.slane %v1174, 1
        %v1181 = vsel %vm496, %v1179, %v1180
        %v1182 = vrot.slane %v1175, 1
        %v1183 = vsel %vm496, %v1180, %v1182
        %v1186 = vadd.f32 %v1152, %v1181
        %v1187 = vadd.f32 %v1153, %v1183
        %s1188 = sld [smem:[#allocation13 + $0x11]]
        %v1189 = vstv %s1188
        %v1190 = vmul.f32 %v1189, %v467
        %v1191 = vmul.f32 %v1189, %v468
        %v1192 = vmul.f32 %v1189, %v469
        %v1196 = vrot.slane %v1190, 2
        %v1197 = vrot.slane %v1191, 2
        %v1198 = vsel %vm531, %v1196, %v1197
        %v1199 = vrot.slane %v1192, 2
        %v1200 = vsel %vm531, %v1197, %v1199
        %v1203 = vadd.f32 %v1169, %v1198
        %v1204 = vadd.f32 %v1170, %v1200
        %s1205 = sld [smem:[#allocation13 + $0x73]]
        %v1206 = vstv %s1205
        %v1207 = vmul.f32 %v1206, %v467
        %v1208 = vmul.f32 %v1206, %v468
        %v1209 = vmul.f32 %v1206, %v469
        %v1213 = vrot.slane %v1207, 2
        %v1214 = vrot.slane %v1208, 2
        %v1215 = vsel %vm531, %v1213, %v1214
        %v1216 = vrot.slane %v1209, 2
        %v1217 = vsel %vm531, %v1214, %v1216
        %v1220 = vadd.f32 %v1186, %v1215
        %v1221 = vadd.f32 %v1187, %v1217
        %s1222 = sld [smem:[#allocation13 + $0x18]]
        %v1223 = vstv %s1222
        %v1224 = vmul.f32 %v1223, %v467
        %v1225 = vmul.f32 %v1223, %v468
        %v1226 = vmul.f32 %v1223, %v469
        %v1230 = vrot.slane %v1224, 3
        %v1231 = vrot.slane %v1225, 3
        %v1232 = vsel %vm566, %v1230, %v1231
        %v1233 = vrot.slane %v1226, 3
        %v1234 = vsel %vm566, %v1231, %v1233
        %v1237 = vadd.f32 %v1203, %v1232
        %v1238 = vadd.f32 %v1204, %v1234
        %s1239 = sld [smem:[#allocation13 + $0x7a]]
        %v1240 = vstv %s1239
        %v1241 = vmul.f32 %v1240, %v467
        %v1242 = vmul.f32 %v1240, %v468
        %v1243 = vmul.f32 %v1240, %v469
        %v1247 = vrot.slane %v1241, 3
        %v1248 = vrot.slane %v1242, 3
        %v1249 = vsel %vm566, %v1247, %v1248
        %v1250 = vrot.slane %v1243, 3
        %v1251 = vsel %vm566, %v1248, %v1250
        %v1254 = vadd.f32 %v1220, %v1249
        %v1255 = vadd.f32 %v1221, %v1251
        %s1256 = sld [smem:[#allocation13 + $0x1f]]
        %v1257 = vstv %s1256
        %v1258 = vmul.f32 %v1257, %v467
        %v1259 = vmul.f32 %v1257, %v468
        %v1260 = vmul.f32 %v1257, %v469
        %v1264 = vrot.slane %v1258, 4
        %v1265 = vrot.slane %v1259, 4
        %v1266 = vsel %vm601, %v1264, %v1265
        %v1267 = vrot.slane %v1260, 4
        %v1268 = vsel %vm601, %v1265, %v1267
        %v1271 = vadd.f32 %v1237, %v1266
        %v1272 = vadd.f32 %v1238, %v1268
        %s1273 = sld [smem:[#allocation13 + $0x81]]
        %v1274 = vstv %s1273
        %v1275 = vmul.f32 %v1274, %v467
        %v1276 = vmul.f32 %v1274, %v468
        %v1277 = vmul.f32 %v1274, %v469
        %v1281 = vrot.slane %v1275, 4
        %v1282 = vrot.slane %v1276, 4
        %v1283 = vsel %vm601, %v1281, %v1282
        %v1284 = vrot.slane %v1277, 4
        %v1285 = vsel %vm601, %v1282, %v1284
        %v1288 = vadd.f32 %v1254, %v1283
        %v1289 = vadd.f32 %v1255, %v1285
        %s1290 = sld [smem:[#allocation13 + $0x26]]
        %v1291 = vstv %s1290
        %v1292 = vmul.f32 %v1291, %v467
        %v1293 = vmul.f32 %v1291, %v468
        %v1294 = vmul.f32 %v1291, %v469
        %v1298 = vrot.slane %v1292, 5
        %v1299 = vrot.slane %v1293, 5
        %v1300 = vsel %vm636, %v1298, %v1299
        %v1301 = vrot.slane %v1294, 5
        %v1302 = vsel %vm636, %v1299, %v1301
        %v1305 = vadd.f32 %v1271, %v1300
        %v1306 = vadd.f32 %v1272, %v1302
        %s1307 = sld [smem:[#allocation13 + $0x88]]
        %v1308 = vstv %s1307
        %v1309 = vmul.f32 %v1308, %v467
        %v1310 = vmul.f32 %v1308, %v468
        %v1311 = vmul.f32 %v1308, %v469
        %v1315 = vrot.slane %v1309, 5
        %v1316 = vrot.slane %v1310, 5
        %v1317 = vsel %vm636, %v1315, %v1316
        %v1318 = vrot.slane %v1311, 5
        %v1319 = vsel %vm636, %v1316, %v1318
        %v1322 = vadd.f32 %v1288, %v1317
        %v1323 = vadd.f32 %v1289, %v1319
        %s1324 = sld [smem:[#allocation13 + $0x2d]]
        %v1325 = vstv %s1324
        %v1326 = vmul.f32 %v1325, %v467
        %v1327 = vmul.f32 %v1325, %v468
        %v1328 = vmul.f32 %v1325, %v469
        %v1332 = vrot.slane %v1326, 6
        %v1333 = vrot.slane %v1327, 6
        %v1334 = vsel %vm671, %v1332, %v1333
        %v1335 = vrot.slane %v1328, 6
        %v1336 = vsel %vm671, %v1333, %v1335
        %v1339 = vadd.f32 %v1305, %v1334
        %v1340 = vadd.f32 %v1306, %v1336
        %s1341 = sld [smem:[#allocation13 + $0x8f]]
        %v1342 = vstv %s1341
        %v1343 = vmul.f32 %v1342, %v467
        %v1344 = vmul.f32 %v1342, %v468
        %v1345 = vmul.f32 %v1342, %v469
        %v1349 = vrot.slane %v1343, 6
        %v1350 = vrot.slane %v1344, 6
        %v1351 = vsel %vm671, %v1349, %v1350
        %v1352 = vrot.slane %v1345, 6
        %v1353 = vsel %vm671, %v1350, %v1352
        %v1356 = vadd.f32 %v1322, %v1351
        %v1357 = vadd.f32 %v1323, %v1353
        %1358 = vrot.lane.b32.xlu0 %v467, 127
        %v1359 = vpop.permute.xlu0 %1358
        %1360 = vrot.lane.b32.xlu0 %v468, 127
        %v1361 = vpop.permute.xlu0 %1360
        %1362 = vrot.lane.b32.xlu0 %v469, 127
        %v1363 = vpop.permute.xlu0 %1362
        %s1364 = sld [smem:[#allocation13 + $0x4]]
        %v1365 = vstv %s1364
        %v1366 = vmul.f32 %v1365, %v1359
        %v1367 = vmul.f32 %v1365, %v1361
        %v1368 = vadd.f32 %v1339, %v1366
        %v1369 = vadd.f32 %v1340, %v1367
        %s1370 = sld [smem:[#allocation13 + $0x66]]
        %v1371 = vstv %s1370
        %v1372 = vmul.f32 %v1371, %v1359
        %v1373 = vmul.f32 %v1371, %v1361
        %v1374 = vadd.f32 %v1356, %v1372
        %v1375 = vadd.f32 %v1357, %v1373
        %s1376 = sld [smem:[#allocation13 + $0xb]]
        %v1377 = vstv %s1376
        %v1378 = vmul.f32 %v1377, %v1359
        %v1379 = vmul.f32 %v1377, %v1361
        %v1380 = vmul.f32 %v1377, %v1363
        %v1384 = vrot.slane %v1378, 1
        %v1385 = vrot.slane %v1379, 1
        %v1386 = vsel %vm496, %v1384, %v1385
        %v1387 = vrot.slane %v1380, 1
        %v1388 = vsel %vm496, %v1385, %v1387
        %v1391 = vadd.f32 %v1368, %v1386
        %v1392 = vadd.f32 %v1369, %v1388
        %s1393 = sld [smem:[#allocation13 + $0x6d]]
        %v1394 = vstv %s1393
        %v1395 = vmul.f32 %v1394, %v1359
        %v1396 = vmul.f32 %v1394, %v1361
        %v1397 = vmul.f32 %v1394, %v1363
        %v1401 = vrot.slane %v1395, 1
        %v1402 = vrot.slane %v1396, 1
        %v1403 = vsel %vm496, %v1401, %v1402
        %v1404 = vrot.slane %v1397, 1
        %v1405 = vsel %vm496, %v1402, %v1404
        %v1408 = vadd.f32 %v1374, %v1403
        %v1409 = vadd.f32 %v1375, %v1405
        %s1410 = sld [smem:[#allocation13 + $0x12]]
        %v1411 = vstv %s1410
        %v1412 = vmul.f32 %v1411, %v1359
        %v1413 = vmul.f32 %v1411, %v1361
        %v1414 = vmul.f32 %v1411, %v1363
        %v1418 = vrot.slane %v1412, 2
        %v1419 = vrot.slane %v1413, 2
        %v1420 = vsel %vm531, %v1418, %v1419
        %v1421 = vrot.slane %v1414, 2
        %v1422 = vsel %vm531, %v1419, %v1421
        %v1425 = vadd.f32 %v1391, %v1420
        %v1426 = vadd.f32 %v1392, %v1422
        %s1427 = sld [smem:[#allocation13 + $0x74]]
        %v1428 = vstv %s1427
        %v1429 = vmul.f32 %v1428, %v1359
        %v1430 = vmul.f32 %v1428, %v1361
        %v1431 = vmul.f32 %v1428, %v1363
        %v1435 = vrot.slane %v1429, 2
        %v1436 = vrot.slane %v1430, 2
        %v1437 = vsel %vm531, %v1435, %v1436
        %v1438 = vrot.slane %v1431, 2
        %v1439 = vsel %vm531, %v1436, %v1438
        %v1442 = vadd.f32 %v1408, %v1437
        %v1443 = vadd.f32 %v1409, %v1439
        %s1444 = sld [smem:[#allocation13 + $0x19]]
        %v1445 = vstv %s1444
        %v1446 = vmul.f32 %v1445, %v1359
        %v1447 = vmul.f32 %v1445, %v1361
        %v1448 = vmul.f32 %v1445, %v1363
        %v1452 = vrot.slane %v1446, 3
        %v1453 = vrot.slane %v1447, 3
        %v1454 = vsel %vm566, %v1452, %v1453
        %v1455 = vrot.slane %v1448, 3
        %v1456 = vsel %vm566, %v1453, %v1455
        %v1459 = vadd.f32 %v1425, %v1454
        %v1460 = vadd.f32 %v1426, %v1456
        %s1461 = sld [smem:[#allocation13 + $0x7b]]
        %v1462 = vstv %s1461
        %v1463 = vmul.f32 %v1462, %v1359
        %v1464 = vmul.f32 %v1462, %v1361
        %v1465 = vmul.f32 %v1462, %v1363
        %v1469 = vrot.slane %v1463, 3
        %v1470 = vrot.slane %v1464, 3
        %v1471 = vsel %vm566, %v1469, %v1470
        %v1472 = vrot.slane %v1465, 3
        %v1473 = vsel %vm566, %v1470, %v1472
        %v1476 = vadd.f32 %v1442, %v1471
        %v1477 = vadd.f32 %v1443, %v1473
        %s1478 = sld [smem:[#allocation13 + $0x20]]
        %v1479 = vstv %s1478
        %v1480 = vmul.f32 %v1479, %v1359
        %v1481 = vmul.f32 %v1479, %v1361
        %v1482 = vmul.f32 %v1479, %v1363
        %v1486 = vrot.slane %v1480, 4
        %v1487 = vrot.slane %v1481, 4
        %v1488 = vsel %vm601, %v1486, %v1487
        %v1489 = vrot.slane %v1482, 4
        %v1490 = vsel %vm601, %v1487, %v1489
        %v1493 = vadd.f32 %v1459, %v1488
        %v1494 = vadd.f32 %v1460, %v1490
        %s1495 = sld [smem:[#allocation13 + $0x82]]
        %v1496 = vstv %s1495
        %v1497 = vmul.f32 %v1496, %v1359
        %v1498 = vmul.f32 %v1496, %v1361
        %v1499 = vmul.f32 %v1496, %v1363
        %v1503 = vrot.slane %v1497, 4
        %v1504 = vrot.slane %v1498, 4
        %v1505 = vsel %vm601, %v1503, %v1504
        %v1506 = vrot.slane %v1499, 4
        %v1507 = vsel %vm601, %v1504, %v1506
        %v1510 = vadd.f32 %v1476, %v1505
        %v1511 = vadd.f32 %v1477, %v1507
        %s1512 = sld [smem:[#allocation13 + $0x27]]
        %v1513 = vstv %s1512
        %v1514 = vmul.f32 %v1513, %v1359
        %v1515 = vmul.f32 %v1513, %v1361
        %v1516 = vmul.f32 %v1513, %v1363
        %v1520 = vrot.slane %v1514, 5
        %v1521 = vrot.slane %v1515, 5
        %v1522 = vsel %vm636, %v1520, %v1521
        %v1523 = vrot.slane %v1516, 5
        %v1524 = vsel %vm636, %v1521, %v1523
        %v1527 = vadd.f32 %v1493, %v1522
        %v1528 = vadd.f32 %v1494, %v1524
        %s1529 = sld [smem:[#allocation13 + $0x89]]
        %v1530 = vstv %s1529
        %v1531 = vmul.f32 %v1530, %v1359
        %v1532 = vmul.f32 %v1530, %v1361
        %v1533 = vmul.f32 %v1530, %v1363
        %v1537 = vrot.slane %v1531, 5
        %v1538 = vrot.slane %v1532, 5
        %v1539 = vsel %vm636, %v1537, %v1538
        %v1540 = vrot.slane %v1533, 5
        %v1541 = vsel %vm636, %v1538, %v1540
        %v1544 = vadd.f32 %v1510, %v1539
        %v1545 = vadd.f32 %v1511, %v1541
        %s1546 = sld [smem:[#allocation13 + $0x2e]]
        %v1547 = vstv %s1546
        %v1548 = vmul.f32 %v1547, %v1359
        %v1549 = vmul.f32 %v1547, %v1361
        %v1550 = vmul.f32 %v1547, %v1363
        %v1554 = vrot.slane %v1548, 6
        %v1555 = vrot.slane %v1549, 6
        %v1556 = vsel %vm671, %v1554, %v1555
        %v1557 = vrot.slane %v1550, 6
        %v1558 = vsel %vm671, %v1555, %v1557
        %v1561 = vadd.f32 %v1527, %v1556
        %v1562 = vadd.f32 %v1528, %v1558
        %s1563 = sld [smem:[#allocation13 + $0x90]]
        %v1564 = vstv %s1563
        %v1565 = vmul.f32 %v1564, %v1359
        %v1566 = vmul.f32 %v1564, %v1361
        %v1567 = vmul.f32 %v1564, %v1363
        %v1571 = vrot.slane %v1565, 6
        %v1572 = vrot.slane %v1566, 6
        %v1573 = vsel %vm671, %v1571, %v1572
        %v1574 = vrot.slane %v1567, 6
        %v1575 = vsel %vm671, %v1572, %v1574
        %v1578 = vadd.f32 %v1544, %v1573
        %v1579 = vadd.f32 %v1545, %v1575
        %1580 = vrot.lane.b32.xlu0 %v467, 126
        %v1581 = vpop.permute.xlu0 %1580
        %1582 = vrot.lane.b32.xlu0 %v468, 126
        %v1583 = vpop.permute.xlu0 %1582
        %1584 = vrot.lane.b32.xlu0 %v469, 126
        %v1585 = vpop.permute.xlu0 %1584
        %s1586 = sld [smem:[#allocation13 + $0x5]]
        %v1587 = vstv %s1586
        %v1588 = vmul.f32 %v1587, %v1581
        %v1589 = vmul.f32 %v1587, %v1583
        %v1590 = vadd.f32 %v1561, %v1588
        %v1591 = vadd.f32 %v1562, %v1589
        %s1592 = sld [smem:[#allocation13 + $0x67]]
        %v1593 = vstv %s1592
        %v1594 = vmul.f32 %v1593, %v1581
        %v1595 = vmul.f32 %v1593, %v1583
        %v1596 = vadd.f32 %v1578, %v1594
        %v1597 = vadd.f32 %v1579, %v1595
        %s1598 = sld [smem:[#allocation13 + $0xc]]
        %v1599 = vstv %s1598
        %v1600 = vmul.f32 %v1599, %v1581
        %v1601 = vmul.f32 %v1599, %v1583
        %v1602 = vmul.f32 %v1599, %v1585
        %v1606 = vrot.slane %v1600, 1
        %v1607 = vrot.slane %v1601, 1
        %v1608 = vsel %vm496, %v1606, %v1607
        %v1609 = vrot.slane %v1602, 1
        %v1610 = vsel %vm496, %v1607, %v1609
        %v1613 = vadd.f32 %v1590, %v1608
        %v1614 = vadd.f32 %v1591, %v1610
        %s1615 = sld [smem:[#allocation13 + $0x6e]]
        %v1616 = vstv %s1615
        %v1617 = vmul.f32 %v1616, %v1581
        %v1618 = vmul.f32 %v1616, %v1583
        %v1619 = vmul.f32 %v1616, %v1585
        %v1623 = vrot.slane %v1617, 1
        %v1624 = vrot.slane %v1618, 1
        %v1625 = vsel %vm496, %v1623, %v1624
        %v1626 = vrot.slane %v1619, 1
        %v1627 = vsel %vm496, %v1624, %v1626
        %v1630 = vadd.f32 %v1596, %v1625
        %v1631 = vadd.f32 %v1597, %v1627
        %s1632 = sld [smem:[#allocation13 + $0x13]]
        %v1633 = vstv %s1632
        %v1634 = vmul.f32 %v1633, %v1581
        %v1635 = vmul.f32 %v1633, %v1583
        %v1636 = vmul.f32 %v1633, %v1585
        %v1640 = vrot.slane %v1634, 2
        %v1641 = vrot.slane %v1635, 2
        %v1642 = vsel %vm531, %v1640, %v1641
        %v1643 = vrot.slane %v1636, 2
        %v1644 = vsel %vm531, %v1641, %v1643
        %v1647 = vadd.f32 %v1613, %v1642
        %v1648 = vadd.f32 %v1614, %v1644
        %s1649 = sld [smem:[#allocation13 + $0x75]]
        %v1650 = vstv %s1649
        %v1651 = vmul.f32 %v1650, %v1581
        %v1652 = vmul.f32 %v1650, %v1583
        %v1653 = vmul.f32 %v1650, %v1585
        %v1657 = vrot.slane %v1651, 2
        %v1658 = vrot.slane %v1652, 2
        %v1659 = vsel %vm531, %v1657, %v1658
        %v1660 = vrot.slane %v1653, 2
        %v1661 = vsel %vm531, %v1658, %v1660
        %v1664 = vadd.f32 %v1630, %v1659
        %v1665 = vadd.f32 %v1631, %v1661
        %s1666 = sld [smem:[#allocation13 + $0x1a]]
        %v1667 = vstv %s1666
        %v1668 = vmul.f32 %v1667, %v1581
        %v1669 = vmul.f32 %v1667, %v1583
        %v1670 = vmul.f32 %v1667, %v1585
        %v1674 = vrot.slane %v1668, 3
        %v1675 = vrot.slane %v1669, 3
        %v1676 = vsel %vm566, %v1674, %v1675
        %v1677 = vrot.slane %v1670, 3
        %v1678 = vsel %vm566, %v1675, %v1677
        %v1681 = vadd.f32 %v1647, %v1676
        %v1682 = vadd.f32 %v1648, %v1678
        %s1683 = sld [smem:[#allocation13 + $0x7c]]
        %v1684 = vstv %s1683
        %v1685 = vmul.f32 %v1684, %v1581
        %v1686 = vmul.f32 %v1684, %v1583
        %v1687 = vmul.f32 %v1684, %v1585
        %v1691 = vrot.slane %v1685, 3
        %v1692 = vrot.slane %v1686, 3
        %v1693 = vsel %vm566, %v1691, %v1692
        %v1694 = vrot.slane %v1687, 3
        %v1695 = vsel %vm566, %v1692, %v1694
        %v1698 = vadd.f32 %v1664, %v1693
        %v1699 = vadd.f32 %v1665, %v1695
        %s1700 = sld [smem:[#allocation13 + $0x21]]
        %v1701 = vstv %s1700
        %v1702 = vmul.f32 %v1701, %v1581
        %v1703 = vmul.f32 %v1701, %v1583
        %v1704 = vmul.f32 %v1701, %v1585
        %v1708 = vrot.slane %v1702, 4
        %v1709 = vrot.slane %v1703, 4
        %v1710 = vsel %vm601, %v1708, %v1709
        %v1711 = vrot.slane %v1704, 4
        %v1712 = vsel %vm601, %v1709, %v1711
        %v1715 = vadd.f32 %v1681, %v1710
        %v1716 = vadd.f32 %v1682, %v1712
        %s1717 = sld [smem:[#allocation13 + $0x83]]
        %v1718 = vstv %s1717
        %v1719 = vmul.f32 %v1718, %v1581
        %v1720 = vmul.f32 %v1718, %v1583
        %v1721 = vmul.f32 %v1718, %v1585
        %v1725 = vrot.slane %v1719, 4
        %v1726 = vrot.slane %v1720, 4
        %v1727 = vsel %vm601, %v1725, %v1726
        %v1728 = vrot.slane %v1721, 4
        %v1729 = vsel %vm601, %v1726, %v1728
        %v1732 = vadd.f32 %v1698, %v1727
        %v1733 = vadd.f32 %v1699, %v1729
        %s1734 = sld [smem:[#allocation13 + $0x28]]
        %v1735 = vstv %s1734
        %v1736 = vmul.f32 %v1735, %v1581
        %v1737 = vmul.f32 %v1735, %v1583
        %v1738 = vmul.f32 %v1735, %v1585
        %v1742 = vrot.slane %v1736, 5
        %v1743 = vrot.slane %v1737, 5
        %v1744 = vsel %vm636, %v1742, %v1743
        %v1745 = vrot.slane %v1738, 5
        %v1746 = vsel %vm636, %v1743, %v1745
        %v1749 = vadd.f32 %v1715, %v1744
        %v1750 = vadd.f32 %v1716, %v1746
        %s1751 = sld [smem:[#allocation13 + $0x8a]]
        %v1752 = vstv %s1751
        %v1753 = vmul.f32 %v1752, %v1581
        %v1754 = vmul.f32 %v1752, %v1583
        %v1755 = vmul.f32 %v1752, %v1585
        %v1759 = vrot.slane %v1753, 5
        %v1760 = vrot.slane %v1754, 5
        %v1761 = vsel %vm636, %v1759, %v1760
        %v1762 = vrot.slane %v1755, 5
        %v1763 = vsel %vm636, %v1760, %v1762
        %v1766 = vadd.f32 %v1732, %v1761
        %v1767 = vadd.f32 %v1733, %v1763
        %s1768 = sld [smem:[#allocation13 + $0x2f]]
        %v1769 = vstv %s1768
        %v1770 = vmul.f32 %v1769, %v1581
        %v1771 = vmul.f32 %v1769, %v1583
        %v1772 = vmul.f32 %v1769, %v1585
        %v1776 = vrot.slane %v1770, 6
        %v1777 = vrot.slane %v1771, 6
        %v1778 = vsel %vm671, %v1776, %v1777
        %v1779 = vrot.slane %v1772, 6
        %v1780 = vsel %vm671, %v1777, %v1779
        %v1783 = vadd.f32 %v1749, %v1778
        %v1784 = vadd.f32 %v1750, %v1780
        %s1785 = sld [smem:[#allocation13 + $0x91]]
        %v1786 = vstv %s1785
        %v1787 = vmul.f32 %v1786, %v1581
        %v1788 = vmul.f32 %v1786, %v1583
        %v1789 = vmul.f32 %v1786, %v1585
        %v1793 = vrot.slane %v1787, 6
        %v1794 = vrot.slane %v1788, 6
        %v1795 = vsel %vm671, %v1793, %v1794
        %v1796 = vrot.slane %v1789, 6
        %v1797 = vsel %vm671, %v1794, %v1796
        %v1800 = vadd.f32 %v1766, %v1795
        %v1801 = vadd.f32 %v1767, %v1797
        %1802 = vrot.lane.b32.xlu0 %v467, 125
        %v1803 = vpop.permute.xlu0 %1802
        %1804 = vrot.lane.b32.xlu0 %v468, 125
        %v1805 = vpop.permute.xlu0 %1804
        %1806 = vrot.lane.b32.xlu0 %v469, 125
        %v1807 = vpop.permute.xlu0 %1806
        %s1808 = sld [smem:[#allocation13 + $0x6]]
        %v1809 = vstv %s1808
        %v1810 = vmul.f32 %v1809, %v1803
        %v1811 = vmul.f32 %v1809, %v1805
        %v1812 = vadd.f32 %v1783, %v1810
        %v1813 = vadd.f32 %v1784, %v1811
        %s1814 = sld [smem:[#allocation13 + $0x68]]
        %v1815 = vstv %s1814
        %v1816 = vmul.f32 %v1815, %v1803
        %v1817 = vmul.f32 %v1815, %v1805
        %v1818 = vadd.f32 %v1800, %v1816
        %v1819 = vadd.f32 %v1801, %v1817
        %s1820 = sld [smem:[#allocation13 + $0xd]]
        %v1821 = vstv %s1820
        %v1822 = vmul.f32 %v1821, %v1803
        %v1823 = vmul.f32 %v1821, %v1805
        %v1824 = vmul.f32 %v1821, %v1807
        %v1828 = vrot.slane %v1822, 1
        %v1829 = vrot.slane %v1823, 1
        %v1830 = vsel %vm496, %v1828, %v1829
        %v1831 = vrot.slane %v1824, 1
        %v1832 = vsel %vm496, %v1829, %v1831
        %v1835 = vadd.f32 %v1812, %v1830
        %v1836 = vadd.f32 %v1813, %v1832
        %s1837 = sld [smem:[#allocation13 + $0x6f]]
        %v1838 = vstv %s1837
        %v1839 = vmul.f32 %v1838, %v1803
        %v1840 = vmul.f32 %v1838, %v1805
        %v1841 = vmul.f32 %v1838, %v1807
        %v1845 = vrot.slane %v1839, 1
        %v1846 = vrot.slane %v1840, 1
        %v1847 = vsel %vm496, %v1845, %v1846
        %v1848 = vrot.slane %v1841, 1
        %v1849 = vsel %vm496, %v1846, %v1848
        %v1852 = vadd.f32 %v1818, %v1847
        %v1853 = vadd.f32 %v1819, %v1849
        %s1854 = sld [smem:[#allocation13 + $0x14]]
        %v1855 = vstv %s1854
        %v1856 = vmul.f32 %v1855, %v1803
        %v1857 = vmul.f32 %v1855, %v1805
        %v1858 = vmul.f32 %v1855, %v1807
        %v1862 = vrot.slane %v1856, 2
        %v1863 = vrot.slane %v1857, 2
        %v1864 = vsel %vm531, %v1862, %v1863
        %v1865 = vrot.slane %v1858, 2
        %v1866 = vsel %vm531, %v1863, %v1865
        %v1869 = vadd.f32 %v1835, %v1864
        %v1870 = vadd.f32 %v1836, %v1866
        %s1871 = sld [smem:[#allocation13 + $0x76]]
        %v1872 = vstv %s1871
        %v1873 = vmul.f32 %v1872, %v1803
        %v1874 = vmul.f32 %v1872, %v1805
        %v1875 = vmul.f32 %v1872, %v1807
        %v1879 = vrot.slane %v1873, 2
        %v1880 = vrot.slane %v1874, 2
        %v1881 = vsel %vm531, %v1879, %v1880
        %v1882 = vrot.slane %v1875, 2
        %v1883 = vsel %vm531, %v1880, %v1882
        %v1886 = vadd.f32 %v1852, %v1881
        %v1887 = vadd.f32 %v1853, %v1883
        %s1888 = sld [smem:[#allocation13 + $0x1b]]
        %v1889 = vstv %s1888
        %v1890 = vmul.f32 %v1889, %v1803
        %v1891 = vmul.f32 %v1889, %v1805
        %v1892 = vmul.f32 %v1889, %v1807
        %v1896 = vrot.slane %v1890, 3
        %v1897 = vrot.slane %v1891, 3
        %v1898 = vsel %vm566, %v1896, %v1897
        %v1899 = vrot.slane %v1892, 3
        %v1900 = vsel %vm566, %v1897, %v1899
        %v1903 = vadd.f32 %v1869, %v1898
        %v1904 = vadd.f32 %v1870, %v1900
        %s1905 = sld [smem:[#allocation13 + $0x7d]]
        %v1906 = vstv %s1905
        %v1907 = vmul.f32 %v1906, %v1803
        %v1908 = vmul.f32 %v1906, %v1805
        %v1909 = vmul.f32 %v1906, %v1807
        %v1913 = vrot.slane %v1907, 3
        %v1914 = vrot.slane %v1908, 3
        %v1915 = vsel %vm566, %v1913, %v1914
        %v1916 = vrot.slane %v1909, 3
        %v1917 = vsel %vm566, %v1914, %v1916
        %v1920 = vadd.f32 %v1886, %v1915
        %v1921 = vadd.f32 %v1887, %v1917
        %s1922 = sld [smem:[#allocation13 + $0x22]]
        %v1923 = vstv %s1922
        %v1924 = vmul.f32 %v1923, %v1803
        %v1925 = vmul.f32 %v1923, %v1805
        %v1926 = vmul.f32 %v1923, %v1807
        %v1930 = vrot.slane %v1924, 4
        %v1931 = vrot.slane %v1925, 4
        %v1932 = vsel %vm601, %v1930, %v1931
        %v1933 = vrot.slane %v1926, 4
        %v1934 = vsel %vm601, %v1931, %v1933
        %v1937 = vadd.f32 %v1903, %v1932
        %v1938 = vadd.f32 %v1904, %v1934
        %s1939 = sld [smem:[#allocation13 + $0x84]]
        %v1940 = vstv %s1939
        %v1941 = vmul.f32 %v1940, %v1803
        %v1942 = vmul.f32 %v1940, %v1805
        %v1943 = vmul.f32 %v1940, %v1807
        %v1947 = vrot.slane %v1941, 4
        %v1948 = vrot.slane %v1942, 4
        %v1949 = vsel %vm601, %v1947, %v1948
        %v1950 = vrot.slane %v1943, 4
        %v1951 = vsel %vm601, %v1948, %v1950
        %v1954 = vadd.f32 %v1920, %v1949
        %v1955 = vadd.f32 %v1921, %v1951
        %s1956 = sld [smem:[#allocation13 + $0x29]]
        %v1957 = vstv %s1956
        %v1958 = vmul.f32 %v1957, %v1803
        %v1959 = vmul.f32 %v1957, %v1805
        %v1960 = vmul.f32 %v1957, %v1807
        %v1964 = vrot.slane %v1958, 5
        %v1965 = vrot.slane %v1959, 5
        %v1966 = vsel %vm636, %v1964, %v1965
        %v1967 = vrot.slane %v1960, 5
        %v1968 = vsel %vm636, %v1965, %v1967
        %v1971 = vadd.f32 %v1937, %v1966
        %v1972 = vadd.f32 %v1938, %v1968
        %s1973 = sld [smem:[#allocation13 + $0x8b]]
        %v1974 = vstv %s1973
        %v1975 = vmul.f32 %v1974, %v1803
        %v1976 = vmul.f32 %v1974, %v1805
        %v1977 = vmul.f32 %v1974, %v1807
        %v1981 = vrot.slane %v1975, 5
        %v1982 = vrot.slane %v1976, 5
        %v1983 = vsel %vm636, %v1981, %v1982
        %v1984 = vrot.slane %v1977, 5
        %v1985 = vsel %vm636, %v1982, %v1984
        %v1988 = vadd.f32 %v1954, %v1983
        %v1989 = vadd.f32 %v1955, %v1985
        %s1990 = sld [smem:[#allocation13 + $0x30]]
        %v1991 = vstv %s1990
        %v1992 = vmul.f32 %v1991, %v1803
        %v1993 = vmul.f32 %v1991, %v1805
        %v1994 = vmul.f32 %v1991, %v1807
        %v1998 = vrot.slane %v1992, 6
        %v1999 = vrot.slane %v1993, 6
        %v2000 = vsel %vm671, %v1998, %v1999
        %v2001 = vrot.slane %v1994, 6
        %v2002 = vsel %vm671, %v1999, %v2001
        %v2005 = vadd.f32 %v1971, %v2000
        %v2006 = vadd.f32 %v1972, %v2002
        %s2007 = sld [smem:[#allocation13 + $0x92]]
        %v2008 = vstv %s2007
        %v2009 = vmul.f32 %v2008, %v1803
        %v2010 = vmul.f32 %v2008, %v1805
        %v2011 = vmul.f32 %v2008, %v1807
        %v2015 = vrot.slane %v2009, 6
        %v2016 = vrot.slane %v2010, 6
        %v2017 = vsel %vm671, %v2015, %v2016
        %v2018 = vrot.slane %v2011, 6
        %v2019 = vsel %vm671, %v2016, %v2018
        %v2022 = vadd.f32 %v1988, %v2017
        %v2023 = vadd.f32 %v1989, %v2019
        %v2024 = vld [vmem:[%s464] sm:$0xff]
        %v2025 = vld [vmem:[%s464 + $0x8] sm:$0xff]
        %v2026 = vld [vmem:[%s464 + $0x10] sm:$0x3f]
        %2027 = vrot.lane.b32.xlu0 %v2024, 3
        %v2028 = vpop.permute.xlu0 %2027
        %2029 = vrot.lane.b32.xlu0 %v2025, 3
        %v2030 = vpop.permute.xlu0 %2029
        %2031 = vrot.lane.b32.xlu0 %v2026, 3
        %v2032 = vpop.permute.xlu0 %2031
        %s2033 = sld [smem:[#allocation13 + $0x31]]
        %v2034 = vstv %s2033
        %v2035 = vmul.f32 %v2034, %v2028
        %v2036 = vmul.f32 %v2034, %v2030
        %v2037 = vadd.f32 %v2005, %v2035
        %v2038 = vadd.f32 %v2006, %v2036
        %s2039 = sld [smem:[#allocation13 + $0x93]]
        %v2040 = vstv %s2039
        %v2041 = vmul.f32 %v2040, %v2028
        %v2042 = vmul.f32 %v2040, %v2030
        %v2043 = vadd.f32 %v2022, %v2041
        %v2044 = vadd.f32 %v2023, %v2042
        %s2045 = sld [smem:[#allocation13 + $0x38]]
        %v2046 = vstv %s2045
        %v2047 = vmul.f32 %v2046, %v2028
        %v2048 = vmul.f32 %v2046, %v2030
        %v2049 = vmul.f32 %v2046, %v2032
        %v2053 = vrot.slane %v2047, 1
        %v2054 = vrot.slane %v2048, 1
        %v2055 = vsel %vm496, %v2053, %v2054
        %v2056 = vrot.slane %v2049, 1
        %v2057 = vsel %vm496, %v2054, %v2056
        %v2060 = vadd.f32 %v2037, %v2055
        %v2061 = vadd.f32 %v2038, %v2057
        %s2062 = sld [smem:[#allocation13 + $0x9a]]
        %v2063 = vstv %s2062
        %v2064 = vmul.f32 %v2063, %v2028
        %v2065 = vmul.f32 %v2063, %v2030
        %v2066 = vmul.f32 %v2063, %v2032
        %v2070 = vrot.slane %v2064, 1
        %v2071 = vrot.slane %v2065, 1
        %v2072 = vsel %vm496, %v2070, %v2071
        %v2073 = vrot.slane %v2066, 1
        %v2074 = vsel %vm496, %v2071, %v2073
        %v2077 = vadd.f32 %v2043, %v2072
        %v2078 = vadd.f32 %v2044, %v2074
        %s2079 = sld [smem:[#allocation13 + $0x3f]]
        %v2080 = vstv %s2079
        %v2081 = vmul.f32 %v2080, %v2028
        %v2082 = vmul.f32 %v2080, %v2030
        %v2083 = vmul.f32 %v2080, %v2032
        %v2087 = vrot.slane %v2081, 2
        %v2088 = vrot.slane %v2082, 2
        %v2089 = vsel %vm531, %v2087, %v2088
        %v2090 = vrot.slane %v2083, 2
        %v2091 = vsel %vm531, %v2088, %v2090
        %v2094 = vadd.f32 %v2060, %v2089
        %v2095 = vadd.f32 %v2061, %v2091
        %s2096 = sld [smem:[#allocation13 + $0xa1]]
        %v2097 = vstv %s2096
        %v2098 = vmul.f32 %v2097, %v2028
        %v2099 = vmul.f32 %v2097, %v2030
        %v2100 = vmul.f32 %v2097, %v2032
        %v2104 = vrot.slane %v2098, 2
        %v2105 = vrot.slane %v2099, 2
        %v2106 = vsel %vm531, %v2104, %v2105
        %v2107 = vrot.slane %v2100, 2
        %v2108 = vsel %vm531, %v2105, %v2107
        %v2111 = vadd.f32 %v2077, %v2106
        %v2112 = vadd.f32 %v2078, %v2108
        %s2113 = sld [smem:[#allocation13 + $0x46]]
        %v2114 = vstv %s2113
        %v2115 = vmul.f32 %v2114, %v2028
        %v2116 = vmul.f32 %v2114, %v2030
        %v2117 = vmul.f32 %v2114, %v2032
        %v2121 = vrot.slane %v2115, 3
        %v2122 = vrot.slane %v2116, 3
        %v2123 = vsel %vm566, %v2121, %v2122
        %v2124 = vrot.slane %v2117, 3
        %v2125 = vsel %vm566, %v2122, %v2124
        %v2128 = vadd.f32 %v2094, %v2123
        %v2129 = vadd.f32 %v2095, %v2125
        %s2130 = sld [smem:[#allocation13 + $0xa8]]
        %v2131 = vstv %s2130
        %v2132 = vmul.f32 %v2131, %v2028
        %v2133 = vmul.f32 %v2131, %v2030
        %v2134 = vmul.f32 %v2131, %v2032
        %v2138 = vrot.slane %v2132, 3
        %v2139 = vrot.slane %v2133, 3
        %v2140 = vsel %vm566, %v2138, %v2139
        %v2141 = vrot.slane %v2134, 3
        %v2142 = vsel %vm566, %v2139, %v2141
        %v2145 = vadd.f32 %v2111, %v2140
        %v2146 = vadd.f32 %v2112, %v2142
        %s2147 = sld [smem:[#allocation13 + $0x4d]]
        %v2148 = vstv %s2147
        %v2149 = vmul.f32 %v2148, %v2028
        %v2150 = vmul.f32 %v2148, %v2030
        %v2151 = vmul.f32 %v2148, %v2032
        %v2155 = vrot.slane %v2149, 4
        %v2156 = vrot.slane %v2150, 4
        %v2157 = vsel %vm601, %v2155, %v2156
        %v2158 = vrot.slane %v2151, 4
        %v2159 = vsel %vm601, %v2156, %v2158
        %v2162 = vadd.f32 %v2128, %v2157
        %v2163 = vadd.f32 %v2129, %v2159
        %s2164 = sld [smem:[#allocation13 + $0xaf]]
        %v2165 = vstv %s2164
        %v2166 = vmul.f32 %v2165, %v2028
        %v2167 = vmul.f32 %v2165, %v2030
        %v2168 = vmul.f32 %v2165, %v2032
        %v2172 = vrot.slane %v2166, 4
        %v2173 = vrot.slane %v2167, 4
        %v2174 = vsel %vm601, %v2172, %v2173
        %v2175 = vrot.slane %v2168, 4
        %v2176 = vsel %vm601, %v2173, %v2175
        %v2179 = vadd.f32 %v2145, %v2174
        %v2180 = vadd.f32 %v2146, %v2176
        %s2181 = sld [smem:[#allocation13 + $0x54]]
        %v2182 = vstv %s2181
        %v2183 = vmul.f32 %v2182, %v2028
        %v2184 = vmul.f32 %v2182, %v2030
        %v2185 = vmul.f32 %v2182, %v2032
        %v2189 = vrot.slane %v2183, 5
        %v2190 = vrot.slane %v2184, 5
        %v2191 = vsel %vm636, %v2189, %v2190
        %v2192 = vrot.slane %v2185, 5
        %v2193 = vsel %vm636, %v2190, %v2192
        %v2196 = vadd.f32 %v2162, %v2191
        %v2197 = vadd.f32 %v2163, %v2193
        %s2198 = sld [smem:[#allocation13 + $0xb6]]
        %v2199 = vstv %s2198
        %v2200 = vmul.f32 %v2199, %v2028
        %v2201 = vmul.f32 %v2199, %v2030
        %v2202 = vmul.f32 %v2199, %v2032
        %v2206 = vrot.slane %v2200, 5
        %v2207 = vrot.slane %v2201, 5
        %v2208 = vsel %vm636, %v2206, %v2207
        %v2209 = vrot.slane %v2202, 5
        %v2210 = vsel %vm636, %v2207, %v2209
        %v2213 = vadd.f32 %v2179, %v2208
        %v2214 = vadd.f32 %v2180, %v2210
        %s2215 = sld [smem:[#allocation13 + $0x5b]]
        %v2216 = vstv %s2215
        %v2217 = vmul.f32 %v2216, %v2028
        %v2218 = vmul.f32 %v2216, %v2030
        %v2219 = vmul.f32 %v2216, %v2032
        %v2223 = vrot.slane %v2217, 6
        %v2224 = vrot.slane %v2218, 6
        %v2225 = vsel %vm671, %v2223, %v2224
        %v2226 = vrot.slane %v2219, 6
        %v2227 = vsel %vm671, %v2224, %v2226
        %v2230 = vadd.f32 %v2196, %v2225
        %v2231 = vadd.f32 %v2197, %v2227
        %s2232 = sld [smem:[#allocation13 + $0xbd]]
        %v2233 = vstv %s2232
        %v2234 = vmul.f32 %v2233, %v2028
        %v2235 = vmul.f32 %v2233, %v2030
        %v2236 = vmul.f32 %v2233, %v2032
        %v2240 = vrot.slane %v2234, 6
        %v2241 = vrot.slane %v2235, 6
        %v2242 = vsel %vm671, %v2240, %v2241
        %v2243 = vrot.slane %v2236, 6
        %v2244 = vsel %vm671, %v2241, %v2243
        %v2247 = vadd.f32 %v2213, %v2242
        %v2248 = vadd.f32 %v2214, %v2244
        %2249 = vrot.lane.b32.xlu0 %v2024, 2
        %v2250 = vpop.permute.xlu0 %2249
        %2251 = vrot.lane.b32.xlu0 %v2025, 2
        %v2252 = vpop.permute.xlu0 %2251
        %2253 = vrot.lane.b32.xlu0 %v2026, 2
        %v2254 = vpop.permute.xlu0 %2253
        %s2255 = sld [smem:[#allocation13 + $0x32]]
        %v2256 = vstv %s2255
        %v2257 = vmul.f32 %v2256, %v2250
        %v2258 = vmul.f32 %v2256, %v2252
        %v2259 = vadd.f32 %v2230, %v2257
        %v2260 = vadd.f32 %v2231, %v2258
        %s2261 = sld [smem:[#allocation13 + $0x94]]
        %v2262 = vstv %s2261
        %v2263 = vmul.f32 %v2262, %v2250
        %v2264 = vmul.f32 %v2262, %v2252
        %v2265 = vadd.f32 %v2247, %v2263
        %v2266 = vadd.f32 %v2248, %v2264
        %s2267 = sld [smem:[#allocation13 + $0x39]]
        %v2268 = vstv %s2267
        %v2269 = vmul.f32 %v2268, %v2250
        %v2270 = vmul.f32 %v2268, %v2252
        %v2271 = vmul.f32 %v2268, %v2254
        %v2275 = vrot.slane %v2269, 1
        %v2276 = vrot.slane %v2270, 1
        %v2277 = vsel %vm496, %v2275, %v2276
        %v2278 = vrot.slane %v2271, 1
        %v2279 = vsel %vm496, %v2276, %v2278
        %v2282 = vadd.f32 %v2259, %v2277
        %v2283 = vadd.f32 %v2260, %v2279
        %s2284 = sld [smem:[#allocation13 + $0x9b]]
        %v2285 = vstv %s2284
        %v2286 = vmul.f32 %v2285, %v2250
        %v2287 = vmul.f32 %v2285, %v2252
        %v2288 = vmul.f32 %v2285, %v2254
        %v2292 = vrot.slane %v2286, 1
        %v2293 = vrot.slane %v2287, 1
        %v2294 = vsel %vm496, %v2292, %v2293
        %v2295 = vrot.slane %v2288, 1
        %v2296 = vsel %vm496, %v2293, %v2295
        %v2299 = vadd.f32 %v2265, %v2294
        %v2300 = vadd.f32 %v2266, %v2296
        %s2301 = sld [smem:[#allocation13 + $0x40]]
        %v2302 = vstv %s2301
        %v2303 = vmul.f32 %v2302, %v2250
        %v2304 = vmul.f32 %v2302, %v2252
        %v2305 = vmul.f32 %v2302, %v2254
        %v2309 = vrot.slane %v2303, 2
        %v2310 = vrot.slane %v2304, 2
        %v2311 = vsel %vm531, %v2309, %v2310
        %v2312 = vrot.slane %v2305, 2
        %v2313 = vsel %vm531, %v2310, %v2312
        %v2316 = vadd.f32 %v2282, %v2311
        %v2317 = vadd.f32 %v2283, %v2313
        %s2318 = sld [smem:[#allocation13 + $0xa2]]
        %v2319 = vstv %s2318
        %v2320 = vmul.f32 %v2319, %v2250
        %v2321 = vmul.f32 %v2319, %v2252
        %v2322 = vmul.f32 %v2319, %v2254
        %v2326 = vrot.slane %v2320, 2
        %v2327 = vrot.slane %v2321, 2
        %v2328 = vsel %vm531, %v2326, %v2327
        %v2329 = vrot.slane %v2322, 2
        %v2330 = vsel %vm531, %v2327, %v2329
        %v2333 = vadd.f32 %v2299, %v2328
        %v2334 = vadd.f32 %v2300, %v2330
        %s2335 = sld [smem:[#allocation13 + $0x47]]
        %v2336 = vstv %s2335
        %v2337 = vmul.f32 %v2336, %v2250
        %v2338 = vmul.f32 %v2336, %v2252
        %v2339 = vmul.f32 %v2336, %v2254
        %v2343 = vrot.slane %v2337, 3
        %v2344 = vrot.slane %v2338, 3
        %v2345 = vsel %vm566, %v2343, %v2344
        %v2346 = vrot.slane %v2339, 3
        %v2347 = vsel %vm566, %v2344, %v2346
        %v2350 = vadd.f32 %v2316, %v2345
        %v2351 = vadd.f32 %v2317, %v2347
        %s2352 = sld [smem:[#allocation13 + $0xa9]]
        %v2353 = vstv %s2352
        %v2354 = vmul.f32 %v2353, %v2250
        %v2355 = vmul.f32 %v2353, %v2252
        %v2356 = vmul.f32 %v2353, %v2254
        %v2360 = vrot.slane %v2354, 3
        %v2361 = vrot.slane %v2355, 3
        %v2362 = vsel %vm566, %v2360, %v2361
        %v2363 = vrot.slane %v2356, 3
        %v2364 = vsel %vm566, %v2361, %v2363
        %v2367 = vadd.f32 %v2333, %v2362
        %v2368 = vadd.f32 %v2334, %v2364
        %s2369 = sld [smem:[#allocation13 + $0x4e]]
        %v2370 = vstv %s2369
        %v2371 = vmul.f32 %v2370, %v2250
        %v2372 = vmul.f32 %v2370, %v2252
        %v2373 = vmul.f32 %v2370, %v2254
        %v2377 = vrot.slane %v2371, 4
        %v2378 = vrot.slane %v2372, 4
        %v2379 = vsel %vm601, %v2377, %v2378
        %v2380 = vrot.slane %v2373, 4
        %v2381 = vsel %vm601, %v2378, %v2380
        %v2384 = vadd.f32 %v2350, %v2379
        %v2385 = vadd.f32 %v2351, %v2381
        %s2386 = sld [smem:[#allocation13 + $0xb0]]
        %v2387 = vstv %s2386
        %v2388 = vmul.f32 %v2387, %v2250
        %v2389 = vmul.f32 %v2387, %v2252
        %v2390 = vmul.f32 %v2387, %v2254
        %v2394 = vrot.slane %v2388, 4
        %v2395 = vrot.slane %v2389, 4
        %v2396 = vsel %vm601, %v2394, %v2395
        %v2397 = vrot.slane %v2390, 4
        %v2398 = vsel %vm601, %v2395, %v2397
        %v2401 = vadd.f32 %v2367, %v2396
        %v2402 = vadd.f32 %v2368, %v2398
        %s2403 = sld [smem:[#allocation13 + $0x55]]
        %v2404 = vstv %s2403
        %v2405 = vmul.f32 %v2404, %v2250
        %v2406 = vmul.f32 %v2404, %v2252
        %v2407 = vmul.f32 %v2404, %v2254
        %v2411 = vrot.slane %v2405, 5
        %v2412 = vrot.slane %v2406, 5
        %v2413 = vsel %vm636, %v2411, %v2412
        %v2414 = vrot.slane %v2407, 5
        %v2415 = vsel %vm636, %v2412, %v2414
        %v2418 = vadd.f32 %v2384, %v2413
        %v2419 = vadd.f32 %v2385, %v2415
        %s2420 = sld [smem:[#allocation13 + $0xb7]]
        %v2421 = vstv %s2420
        %v2422 = vmul.f32 %v2421, %v2250
        %v2423 = vmul.f32 %v2421, %v2252
        %v2424 = vmul.f32 %v2421, %v2254
        %v2428 = vrot.slane %v2422, 5
        %v2429 = vrot.slane %v2423, 5
        %v2430 = vsel %vm636, %v2428, %v2429
        %v2431 = vrot.slane %v2424, 5
        %v2432 = vsel %vm636, %v2429, %v2431
        %v2435 = vadd.f32 %v2401, %v2430
        %v2436 = vadd.f32 %v2402, %v2432
        %s2437 = sld [smem:[#allocation13 + $0x5c]]
        %v2438 = vstv %s2437
        %v2439 = vmul.f32 %v2438, %v2250
        %v2440 = vmul.f32 %v2438, %v2252
        %v2441 = vmul.f32 %v2438, %v2254
        %v2445 = vrot.slane %v2439, 6
        %v2446 = vrot.slane %v2440, 6
        %v2447 = vsel %vm671, %v2445, %v2446
        %v2448 = vrot.slane %v2441, 6
        %v2449 = vsel %vm671, %v2446, %v2448
        %v2452 = vadd.f32 %v2418, %v2447
        %v2453 = vadd.f32 %v2419, %v2449
        %s2454 = sld [smem:[#allocation13 + $0xbe]]
        %v2455 = vstv %s2454
        %v2456 = vmul.f32 %v2455, %v2250
        %v2457 = vmul.f32 %v2455, %v2252
        %v2458 = vmul.f32 %v2455, %v2254
        %v2462 = vrot.slane %v2456, 6
        %v2463 = vrot.slane %v2457, 6
        %v2464 = vsel %vm671, %v2462, %v2463
        %v2465 = vrot.slane %v2458, 6
        %v2466 = vsel %vm671, %v2463, %v2465
        %v2469 = vadd.f32 %v2435, %v2464
        %v2470 = vadd.f32 %v2436, %v2466
        %2471 = vrot.lane.b32.xlu0 %v2024, 1
        %v2472 = vpop.permute.xlu0 %2471
        %2473 = vrot.lane.b32.xlu0 %v2025, 1
        %v2474 = vpop.permute.xlu0 %2473
        %2475 = vrot.lane.b32.xlu0 %v2026, 1
        %v2476 = vpop.permute.xlu0 %2475
        %s2477 = sld [smem:[#allocation13 + $0x33]]
        %v2478 = vstv %s2477
        %v2479 = vmul.f32 %v2478, %v2472
        %v2480 = vmul.f32 %v2478, %v2474
        %v2481 = vadd.f32 %v2452, %v2479
        %v2482 = vadd.f32 %v2453, %v2480
        %s2483 = sld [smem:[#allocation13 + $0x95]]
        %v2484 = vstv %s2483
        %v2485 = vmul.f32 %v2484, %v2472
        %v2486 = vmul.f32 %v2484, %v2474
        %v2487 = vadd.f32 %v2469, %v2485
        %v2488 = vadd.f32 %v2470, %v2486
        %s2489 = sld [smem:[#allocation13 + $0x3a]]
        %v2490 = vstv %s2489
        %v2491 = vmul.f32 %v2490, %v2472
        %v2492 = vmul.f32 %v2490, %v2474
        %v2493 = vmul.f32 %v2490, %v2476
        %v2497 = vrot.slane %v2491, 1
        %v2498 = vrot.slane %v2492, 1
        %v2499 = vsel %vm496, %v2497, %v2498
        %v2500 = vrot.slane %v2493, 1
        %v2501 = vsel %vm496, %v2498, %v2500
        %v2504 = vadd.f32 %v2481, %v2499
        %v2505 = vadd.f32 %v2482, %v2501
        %s2506 = sld [smem:[#allocation13 + $0x9c]]
        %v2507 = vstv %s2506
        %v2508 = vmul.f32 %v2507, %v2472
        %v2509 = vmul.f32 %v2507, %v2474
        %v2510 = vmul.f32 %v2507, %v2476
        %v2514 = vrot.slane %v2508, 1
        %v2515 = vrot.slane %v2509, 1
        %v2516 = vsel %vm496, %v2514, %v2515
        %v2517 = vrot.slane %v2510, 1
        %v2518 = vsel %vm496, %v2515, %v2517
        %v2521 = vadd.f32 %v2487, %v2516
        %v2522 = vadd.f32 %v2488, %v2518
        %s2523 = sld [smem:[#allocation13 + $0x41]]
        %v2524 = vstv %s2523
        %v2525 = vmul.f32 %v2524, %v2472
        %v2526 = vmul.f32 %v2524, %v2474
        %v2527 = vmul.f32 %v2524, %v2476
        %v2531 = vrot.slane %v2525, 2
        %v2532 = vrot.slane %v2526, 2
        %v2533 = vsel %vm531, %v2531, %v2532
        %v2534 = vrot.slane %v2527, 2
        %v2535 = vsel %vm531, %v2532, %v2534
        %v2538 = vadd.f32 %v2504, %v2533
        %v2539 = vadd.f32 %v2505, %v2535
        %s2540 = sld [smem:[#allocation13 + $0xa3]]
        %v2541 = vstv %s2540
        %v2542 = vmul.f32 %v2541, %v2472
        %v2543 = vmul.f32 %v2541, %v2474
        %v2544 = vmul.f32 %v2541, %v2476
        %v2548 = vrot.slane %v2542, 2
        %v2549 = vrot.slane %v2543, 2
        %v2550 = vsel %vm531, %v2548, %v2549
        %v2551 = vrot.slane %v2544, 2
        %v2552 = vsel %vm531, %v2549, %v2551
        %v2555 = vadd.f32 %v2521, %v2550
        %v2556 = vadd.f32 %v2522, %v2552
        %s2557 = sld [smem:[#allocation13 + $0x48]]
        %v2558 = vstv %s2557
        %v2559 = vmul.f32 %v2558, %v2472
        %v2560 = vmul.f32 %v2558, %v2474
        %v2561 = vmul.f32 %v2558, %v2476
        %v2565 = vrot.slane %v2559, 3
        %v2566 = vrot.slane %v2560, 3
        %v2567 = vsel %vm566, %v2565, %v2566
        %v2568 = vrot.slane %v2561, 3
        %v2569 = vsel %vm566, %v2566, %v2568
        %v2572 = vadd.f32 %v2538, %v2567
        %v2573 = vadd.f32 %v2539, %v2569
        %s2574 = sld [smem:[#allocation13 + $0xaa]]
        %v2575 = vstv %s2574
        %v2576 = vmul.f32 %v2575, %v2472
        %v2577 = vmul.f32 %v2575, %v2474
        %v2578 = vmul.f32 %v2575, %v2476
        %v2582 = vrot.slane %v2576, 3
        %v2583 = vrot.slane %v2577, 3
        %v2584 = vsel %vm566, %v2582, %v2583
        %v2585 = vrot.slane %v2578, 3
        %v2586 = vsel %vm566, %v2583, %v2585
        %v2589 = vadd.f32 %v2555, %v2584
        %v2590 = vadd.f32 %v2556, %v2586
        %s2591 = sld [smem:[#allocation13 + $0x4f]]
        %v2592 = vstv %s2591
        %v2593 = vmul.f32 %v2592, %v2472
        %v2594 = vmul.f32 %v2592, %v2474
        %v2595 = vmul.f32 %v2592, %v2476
        %v2599 = vrot.slane %v2593, 4
        %v2600 = vrot.slane %v2594, 4
        %v2601 = vsel %vm601, %v2599, %v2600
        %v2602 = vrot.slane %v2595, 4
        %v2603 = vsel %vm601, %v2600, %v2602
        %v2606 = vadd.f32 %v2572, %v2601
        %v2607 = vadd.f32 %v2573, %v2603
        %s2608 = sld [smem:[#allocation13 + $0xb1]]
        %v2609 = vstv %s2608
        %v2610 = vmul.f32 %v2609, %v2472
        %v2611 = vmul.f32 %v2609, %v2474
        %v2612 = vmul.f32 %v2609, %v2476
        %v2616 = vrot.slane %v2610, 4
        %v2617 = vrot.slane %v2611, 4
        %v2618 = vsel %vm601, %v2616, %v2617
        %v2619 = vrot.slane %v2612, 4
        %v2620 = vsel %vm601, %v2617, %v2619
        %v2623 = vadd.f32 %v2589, %v2618
        %v2624 = vadd.f32 %v2590, %v2620
        %s2625 = sld [smem:[#allocation13 + $0x56]]
        %v2626 = vstv %s2625
        %v2627 = vmul.f32 %v2626, %v2472
        %v2628 = vmul.f32 %v2626, %v2474
        %v2629 = vmul.f32 %v2626, %v2476
        %v2633 = vrot.slane %v2627, 5
        %v2634 = vrot.slane %v2628, 5
        %v2635 = vsel %vm636, %v2633, %v2634
        %v2636 = vrot.slane %v2629, 5
        %v2637 = vsel %vm636, %v2634, %v2636
        %v2640 = vadd.f32 %v2606, %v2635
        %v2641 = vadd.f32 %v2607, %v2637
        %s2642 = sld [smem:[#allocation13 + $0xb8]]
        %v2643 = vstv %s2642
        %v2644 = vmul.f32 %v2643, %v2472
        %v2645 = vmul.f32 %v2643, %v2474
        %v2646 = vmul.f32 %v2643, %v2476
        %v2650 = vrot.slane %v2644, 5
        %v2651 = vrot.slane %v2645, 5
        %v2652 = vsel %vm636, %v2650, %v2651
        %v2653 = vrot.slane %v2646, 5
        %v2654 = vsel %vm636, %v2651, %v2653
        %v2657 = vadd.f32 %v2623, %v2652
        %v2658 = vadd.f32 %v2624, %v2654
        %s2659 = sld [smem:[#allocation13 + $0x5d]]
        %v2660 = vstv %s2659
        %v2661 = vmul.f32 %v2660, %v2472
        %v2662 = vmul.f32 %v2660, %v2474
        %v2663 = vmul.f32 %v2660, %v2476
        %v2667 = vrot.slane %v2661, 6
        %v2668 = vrot.slane %v2662, 6
        %v2669 = vsel %vm671, %v2667, %v2668
        %v2670 = vrot.slane %v2663, 6
        %v2671 = vsel %vm671, %v2668, %v2670
        %v2674 = vadd.f32 %v2640, %v2669
        %v2675 = vadd.f32 %v2641, %v2671
        %s2676 = sld [smem:[#allocation13 + $0xbf]]
        %v2677 = vstv %s2676
        %v2678 = vmul.f32 %v2677, %v2472
        %v2679 = vmul.f32 %v2677, %v2474
        %v2680 = vmul.f32 %v2677, %v2476
        %v2684 = vrot.slane %v2678, 6
        %v2685 = vrot.slane %v2679, 6
        %v2686 = vsel %vm671, %v2684, %v2685
        %v2687 = vrot.slane %v2680, 6
        %v2688 = vsel %vm671, %v2685, %v2687
        %v2691 = vadd.f32 %v2657, %v2686
        %v2692 = vadd.f32 %v2658, %v2688
        %s2693 = sld [smem:[#allocation13 + $0x34]]
        %v2694 = vstv %s2693
        %v2695 = vmul.f32 %v2694, %v2024
        %v2696 = vmul.f32 %v2694, %v2025
        %v2697 = vadd.f32 %v2674, %v2695
        %v2698 = vadd.f32 %v2675, %v2696
        %s2699 = sld [smem:[#allocation13 + $0x96]]
        %v2700 = vstv %s2699
        %v2701 = vmul.f32 %v2700, %v2024
        %v2702 = vmul.f32 %v2700, %v2025
        %v2703 = vadd.f32 %v2691, %v2701
        %v2704 = vadd.f32 %v2692, %v2702
        %s2705 = sld [smem:[#allocation13 + $0x3b]]
        %v2706 = vstv %s2705
        %v2707 = vmul.f32 %v2706, %v2024
        %v2708 = vmul.f32 %v2706, %v2025
        %v2709 = vmul.f32 %v2706, %v2026
        %v2713 = vrot.slane %v2707, 1
        %v2714 = vrot.slane %v2708, 1
        %v2715 = vsel %vm496, %v2713, %v2714
        %v2716 = vrot.slane %v2709, 1
        %v2717 = vsel %vm496, %v2714, %v2716
        %v2720 = vadd.f32 %v2697, %v2715
        %v2721 = vadd.f32 %v2698, %v2717
        %s2722 = sld [smem:[#allocation13 + $0x9d]]
        %v2723 = vstv %s2722
        %v2724 = vmul.f32 %v2723, %v2024
        %v2725 = vmul.f32 %v2723, %v2025
        %v2726 = vmul.f32 %v2723, %v2026
        %v2730 = vrot.slane %v2724, 1
        %v2731 = vrot.slane %v2725, 1
        %v2732 = vsel %vm496, %v2730, %v2731
        %v2733 = vrot.slane %v2726, 1
        %v2734 = vsel %vm496, %v2731, %v2733
        %v2737 = vadd.f32 %v2703, %v2732
        %v2738 = vadd.f32 %v2704, %v2734
        %s2739 = sld [smem:[#allocation13 + $0x42]]
        %v2740 = vstv %s2739
        %v2741 = vmul.f32 %v2740, %v2024
        %v2742 = vmul.f32 %v2740, %v2025
        %v2743 = vmul.f32 %v2740, %v2026
        %v2747 = vrot.slane %v2741, 2
        %v2748 = vrot.slane %v2742, 2
        %v2749 = vsel %vm531, %v2747, %v2748
        %v2750 = vrot.slane %v2743, 2
        %v2751 = vsel %vm531, %v2748, %v2750
        %v2754 = vadd.f32 %v2720, %v2749
        %v2755 = vadd.f32 %v2721, %v2751
        %s2756 = sld [smem:[#allocation13 + $0xa4]]
        %v2757 = vstv %s2756
        %v2758 = vmul.f32 %v2757, %v2024
        %v2759 = vmul.f32 %v2757, %v2025
        %v2760 = vmul.f32 %v2757, %v2026
        %v2764 = vrot.slane %v2758, 2
        %v2765 = vrot.slane %v2759, 2
        %v2766 = vsel %vm531, %v2764, %v2765
        %v2767 = vrot.slane %v2760, 2
        %v2768 = vsel %vm531, %v2765, %v2767
        %v2771 = vadd.f32 %v2737, %v2766
        %v2772 = vadd.f32 %v2738, %v2768
        %s2773 = sld [smem:[#allocation13 + $0x49]]
        %v2774 = vstv %s2773
        %v2775 = vmul.f32 %v2774, %v2024
        %v2776 = vmul.f32 %v2774, %v2025
        %v2777 = vmul.f32 %v2774, %v2026
        %v2781 = vrot.slane %v2775, 3
        %v2782 = vrot.slane %v2776, 3
        %v2783 = vsel %vm566, %v2781, %v2782
        %v2784 = vrot.slane %v2777, 3
        %v2785 = vsel %vm566, %v2782, %v2784
        %v2788 = vadd.f32 %v2754, %v2783
        %v2789 = vadd.f32 %v2755, %v2785
        %s2790 = sld [smem:[#allocation13 + $0xab]]
        %v2791 = vstv %s2790
        %v2792 = vmul.f32 %v2791, %v2024
        %v2793 = vmul.f32 %v2791, %v2025
        %v2794 = vmul.f32 %v2791, %v2026
        %v2798 = vrot.slane %v2792, 3
        %v2799 = vrot.slane %v2793, 3
        %v2800 = vsel %vm566, %v2798, %v2799
        %v2801 = vrot.slane %v2794, 3
        %v2802 = vsel %vm566, %v2799, %v2801
        %v2805 = vadd.f32 %v2771, %v2800
        %v2806 = vadd.f32 %v2772, %v2802
        %s2807 = sld [smem:[#allocation13 + $0x50]]
        %v2808 = vstv %s2807
        %v2809 = vmul.f32 %v2808, %v2024
        %v2810 = vmul.f32 %v2808, %v2025
        %v2811 = vmul.f32 %v2808, %v2026
        %v2815 = vrot.slane %v2809, 4
        %v2816 = vrot.slane %v2810, 4
        %v2817 = vsel %vm601, %v2815, %v2816
        %v2818 = vrot.slane %v2811, 4
        %v2819 = vsel %vm601, %v2816, %v2818
        %v2822 = vadd.f32 %v2788, %v2817
        %v2823 = vadd.f32 %v2789, %v2819
        %s2824 = sld [smem:[#allocation13 + $0xb2]]
        %v2825 = vstv %s2824
        %v2826 = vmul.f32 %v2825, %v2024
        %v2827 = vmul.f32 %v2825, %v2025
        %v2828 = vmul.f32 %v2825, %v2026
        %v2832 = vrot.slane %v2826, 4
        %v2833 = vrot.slane %v2827, 4
        %v2834 = vsel %vm601, %v2832, %v2833
        %v2835 = vrot.slane %v2828, 4
        %v2836 = vsel %vm601, %v2833, %v2835
        %v2839 = vadd.f32 %v2805, %v2834
        %v2840 = vadd.f32 %v2806, %v2836
        %s2841 = sld [smem:[#allocation13 + $0x57]]
        %v2842 = vstv %s2841
        %v2843 = vmul.f32 %v2842, %v2024
        %v2844 = vmul.f32 %v2842, %v2025
        %v2845 = vmul.f32 %v2842, %v2026
        %v2849 = vrot.slane %v2843, 5
        %v2850 = vrot.slane %v2844, 5
        %v2851 = vsel %vm636, %v2849, %v2850
        %v2852 = vrot.slane %v2845, 5
        %v2853 = vsel %vm636, %v2850, %v2852
        %v2856 = vadd.f32 %v2822, %v2851
        %v2857 = vadd.f32 %v2823, %v2853
        %s2858 = sld [smem:[#allocation13 + $0xb9]]
        %v2859 = vstv %s2858
        %v2860 = vmul.f32 %v2859, %v2024
        %v2861 = vmul.f32 %v2859, %v2025
        %v2862 = vmul.f32 %v2859, %v2026
        %v2866 = vrot.slane %v2860, 5
        %v2867 = vrot.slane %v2861, 5
        %v2868 = vsel %vm636, %v2866, %v2867
        %v2869 = vrot.slane %v2862, 5
        %v2870 = vsel %vm636, %v2867, %v2869
        %v2873 = vadd.f32 %v2839, %v2868
        %v2874 = vadd.f32 %v2840, %v2870
        %s2875 = sld [smem:[#allocation13 + $0x5e]]
        %v2876 = vstv %s2875
        %v2877 = vmul.f32 %v2876, %v2024
        %v2878 = vmul.f32 %v2876, %v2025
        %v2879 = vmul.f32 %v2876, %v2026
        %v2883 = vrot.slane %v2877, 6
        %v2884 = vrot.slane %v2878, 6
        %v2885 = vsel %vm671, %v2883, %v2884
        %v2886 = vrot.slane %v2879, 6
        %v2887 = vsel %vm671, %v2884, %v2886
        %v2890 = vadd.f32 %v2856, %v2885
        %v2891 = vadd.f32 %v2857, %v2887
        %s2892 = sld [smem:[#allocation13 + $0xc0]]
        %v2893 = vstv %s2892
        %v2894 = vmul.f32 %v2893, %v2024
        %v2895 = vmul.f32 %v2893, %v2025
        %v2896 = vmul.f32 %v2893, %v2026
        %v2900 = vrot.slane %v2894, 6
        %v2901 = vrot.slane %v2895, 6
        %v2902 = vsel %vm671, %v2900, %v2901
        %v2903 = vrot.slane %v2896, 6
        %v2904 = vsel %vm671, %v2901, %v2903
        %v2907 = vadd.f32 %v2873, %v2902
        %v2908 = vadd.f32 %v2874, %v2904
        %2909 = vrot.lane.b32.xlu0 %v2024, 127
        %v2910 = vpop.permute.xlu0 %2909
        %2911 = vrot.lane.b32.xlu0 %v2025, 127
        %v2912 = vpop.permute.xlu0 %2911
        %2913 = vrot.lane.b32.xlu0 %v2026, 127
        %v2914 = vpop.permute.xlu0 %2913
        %s2915 = sld [smem:[#allocation13 + $0x35]]
        %v2916 = vstv %s2915
        %v2917 = vmul.f32 %v2916, %v2910
        %v2918 = vmul.f32 %v2916, %v2912
        %v2919 = vadd.f32 %v2890, %v2917
        %v2920 = vadd.f32 %v2891, %v2918
        %s2921 = sld [smem:[#allocation13 + $0x97]]
        %v2922 = vstv %s2921
        %v2923 = vmul.f32 %v2922, %v2910
        %v2924 = vmul.f32 %v2922, %v2912
        %v2925 = vadd.f32 %v2907, %v2923
        %v2926 = vadd.f32 %v2908, %v2924
        %s2927 = sld [smem:[#allocation13 + $0x3c]]
        %v2928 = vstv %s2927
        %v2929 = vmul.f32 %v2928, %v2910
        %v2930 = vmul.f32 %v2928, %v2912
        %v2931 = vmul.f32 %v2928, %v2914
        %v2935 = vrot.slane %v2929, 1
        %v2936 = vrot.slane %v2930, 1
        %v2937 = vsel %vm496, %v2935, %v2936
        %v2938 = vrot.slane %v2931, 1
        %v2939 = vsel %vm496, %v2936, %v2938
        %v2942 = vadd.f32 %v2919, %v2937
        %v2943 = vadd.f32 %v2920, %v2939
        %s2944 = sld [smem:[#allocation13 + $0x9e]]
        %v2945 = vstv %s2944
        %v2946 = vmul.f32 %v2945, %v2910
        %v2947 = vmul.f32 %v2945, %v2912
        %v2948 = vmul.f32 %v2945, %v2914
        %v2952 = vrot.slane %v2946, 1
        %v2953 = vrot.slane %v2947, 1
        %v2954 = vsel %vm496, %v2952, %v2953
        %v2955 = vrot.slane %v2948, 1
        %v2956 = vsel %vm496, %v2953, %v2955
        %v2959 = vadd.f32 %v2925, %v2954
        %v2960 = vadd.f32 %v2926, %v2956
        %s2961 = sld [smem:[#allocation13 + $0x43]]
        %v2962 = vstv %s2961
        %v2963 = vmul.f32 %v2962, %v2910
        %v2964 = vmul.f32 %v2962, %v2912
        %v2965 = vmul.f32 %v2962, %v2914
        %v2969 = vrot.slane %v2963, 2
        %v2970 = vrot.slane %v2964, 2
        %v2971 = vsel %vm531, %v2969, %v2970
        %v2972 = vrot.slane %v2965, 2
        %v2973 = vsel %vm531, %v2970, %v2972
        %v2976 = vadd.f32 %v2942, %v2971
        %v2977 = vadd.f32 %v2943, %v2973
        %s2978 = sld [smem:[#allocation13 + $0xa5]]
        %v2979 = vstv %s2978
        %v2980 = vmul.f32 %v2979, %v2910
        %v2981 = vmul.f32 %v2979, %v2912
        %v2982 = vmul.f32 %v2979, %v2914
        %v2986 = vrot.slane %v2980, 2
        %v2987 = vrot.slane %v2981, 2
        %v2988 = vsel %vm531, %v2986, %v2987
        %v2989 = vrot.slane %v2982, 2
        %v2990 = vsel %vm531, %v2987, %v2989
        %v2993 = vadd.f32 %v2959, %v2988
        %v2994 = vadd.f32 %v2960, %v2990
        %s2995 = sld [smem:[#allocation13 + $0x4a]]
        %v2996 = vstv %s2995
        %v2997 = vmul.f32 %v2996, %v2910
        %v2998 = vmul.f32 %v2996, %v2912
        %v2999 = vmul.f32 %v2996, %v2914
        %v3003 = vrot.slane %v2997, 3
        %v3004 = vrot.slane %v2998, 3
        %v3005 = vsel %vm566, %v3003, %v3004
        %v3006 = vrot.slane %v2999, 3
        %v3007 = vsel %vm566, %v3004, %v3006
        %v3010 = vadd.f32 %v2976, %v3005
        %v3011 = vadd.f32 %v2977, %v3007
        %s3012 = sld [smem:[#allocation13 + $0xac]]
        %v3013 = vstv %s3012
        %v3014 = vmul.f32 %v3013, %v2910
        %v3015 = vmul.f32 %v3013, %v2912
        %v3016 = vmul.f32 %v3013, %v2914
        %v3020 = vrot.slane %v3014, 3
        %v3021 = vrot.slane %v3015, 3
        %v3022 = vsel %vm566, %v3020, %v3021
        %v3023 = vrot.slane %v3016, 3
        %v3024 = vsel %vm566, %v3021, %v3023
        %v3027 = vadd.f32 %v2993, %v3022
        %v3028 = vadd.f32 %v2994, %v3024
        %s3029 = sld [smem:[#allocation13 + $0x51]]
        %v3030 = vstv %s3029
        %v3031 = vmul.f32 %v3030, %v2910
        %v3032 = vmul.f32 %v3030, %v2912
        %v3033 = vmul.f32 %v3030, %v2914
        %v3037 = vrot.slane %v3031, 4
        %v3038 = vrot.slane %v3032, 4
        %v3039 = vsel %vm601, %v3037, %v3038
        %v3040 = vrot.slane %v3033, 4
        %v3041 = vsel %vm601, %v3038, %v3040
        %v3044 = vadd.f32 %v3010, %v3039
        %v3045 = vadd.f32 %v3011, %v3041
        %s3046 = sld [smem:[#allocation13 + $0xb3]]
        %v3047 = vstv %s3046
        %v3048 = vmul.f32 %v3047, %v2910
        %v3049 = vmul.f32 %v3047, %v2912
        %v3050 = vmul.f32 %v3047, %v2914
        %v3054 = vrot.slane %v3048, 4
        %v3055 = vrot.slane %v3049, 4
        %v3056 = vsel %vm601, %v3054, %v3055
        %v3057 = vrot.slane %v3050, 4
        %v3058 = vsel %vm601, %v3055, %v3057
        %v3061 = vadd.f32 %v3027, %v3056
        %v3062 = vadd.f32 %v3028, %v3058
        %s3063 = sld [smem:[#allocation13 + $0x58]]
        %v3064 = vstv %s3063
        %v3065 = vmul.f32 %v3064, %v2910
        %v3066 = vmul.f32 %v3064, %v2912
        %v3067 = vmul.f32 %v3064, %v2914
        %v3071 = vrot.slane %v3065, 5
        %v3072 = vrot.slane %v3066, 5
        %v3073 = vsel %vm636, %v3071, %v3072
        %v3074 = vrot.slane %v3067, 5
        %v3075 = vsel %vm636, %v3072, %v3074
        %v3078 = vadd.f32 %v3044, %v3073
        %v3079 = vadd.f32 %v3045, %v3075
        %s3080 = sld [smem:[#allocation13 + $0xba]]
        %v3081 = vstv %s3080
        %v3082 = vmul.f32 %v3081, %v2910
        %v3083 = vmul.f32 %v3081, %v2912
        %v3084 = vmul.f32 %v3081, %v2914
        %v3088 = vrot.slane %v3082, 5
        %v3089 = vrot.slane %v3083, 5
        %v3090 = vsel %vm636, %v3088, %v3089
        %v3091 = vrot.slane %v3084, 5
        %v3092 = vsel %vm636, %v3089, %v3091
        %v3095 = vadd.f32 %v3061, %v3090
        %v3096 = vadd.f32 %v3062, %v3092
        %s3097 = sld [smem:[#allocation13 + $0x5f]]
        %v3098 = vstv %s3097
        %v3099 = vmul.f32 %v3098, %v2910
        %v3100 = vmul.f32 %v3098, %v2912
        %v3101 = vmul.f32 %v3098, %v2914
        %v3105 = vrot.slane %v3099, 6
        %v3106 = vrot.slane %v3100, 6
        %v3107 = vsel %vm671, %v3105, %v3106
        %v3108 = vrot.slane %v3101, 6
        %v3109 = vsel %vm671, %v3106, %v3108
        %v3112 = vadd.f32 %v3078, %v3107
        %v3113 = vadd.f32 %v3079, %v3109
        %s3114 = sld [smem:[#allocation13 + $0xc1]]
        %v3115 = vstv %s3114
        %v3116 = vmul.f32 %v3115, %v2910
        %v3117 = vmul.f32 %v3115, %v2912
        %v3118 = vmul.f32 %v3115, %v2914
        %v3122 = vrot.slane %v3116, 6
        %v3123 = vrot.slane %v3117, 6
        %v3124 = vsel %vm671, %v3122, %v3123
        %v3125 = vrot.slane %v3118, 6
        %v3126 = vsel %vm671, %v3123, %v3125
        %v3129 = vadd.f32 %v3095, %v3124
        %v3130 = vadd.f32 %v3096, %v3126
        %3131 = vrot.lane.b32.xlu0 %v2024, 126
        %v3132 = vpop.permute.xlu0 %3131
        %3133 = vrot.lane.b32.xlu0 %v2025, 126
        %v3134 = vpop.permute.xlu0 %3133
        %3135 = vrot.lane.b32.xlu0 %v2026, 126
        %v3136 = vpop.permute.xlu0 %3135
        %s3137 = sld [smem:[#allocation13 + $0x36]]
        %v3138 = vstv %s3137
        %v3139 = vmul.f32 %v3138, %v3132
        %v3140 = vmul.f32 %v3138, %v3134
        %v3141 = vadd.f32 %v3112, %v3139
        %v3142 = vadd.f32 %v3113, %v3140
        %s3143 = sld [smem:[#allocation13 + $0x98]]
        %v3144 = vstv %s3143
        %v3145 = vmul.f32 %v3144, %v3132
        %v3146 = vmul.f32 %v3144, %v3134
        %v3147 = vadd.f32 %v3129, %v3145
        %v3148 = vadd.f32 %v3130, %v3146
        %s3149 = sld [smem:[#allocation13 + $0x3d]]
        %v3150 = vstv %s3149
        %v3151 = vmul.f32 %v3150, %v3132
        %v3152 = vmul.f32 %v3150, %v3134
        %v3153 = vmul.f32 %v3150, %v3136
        %v3157 = vrot.slane %v3151, 1
        %v3158 = vrot.slane %v3152, 1
        %v3159 = vsel %vm496, %v3157, %v3158
        %v3160 = vrot.slane %v3153, 1
        %v3161 = vsel %vm496, %v3158, %v3160
        %v3164 = vadd.f32 %v3141, %v3159
        %v3165 = vadd.f32 %v3142, %v3161
        %s3166 = sld [smem:[#allocation13 + $0x9f]]
        %v3167 = vstv %s3166
        %v3168 = vmul.f32 %v3167, %v3132
        %v3169 = vmul.f32 %v3167, %v3134
        %v3170 = vmul.f32 %v3167, %v3136
        %v3174 = vrot.slane %v3168, 1
        %v3175 = vrot.slane %v3169, 1
        %v3176 = vsel %vm496, %v3174, %v3175
        %v3177 = vrot.slane %v3170, 1
        %v3178 = vsel %vm496, %v3175, %v3177
        %v3181 = vadd.f32 %v3147, %v3176
        %v3182 = vadd.f32 %v3148, %v3178
        %s3183 = sld [smem:[#allocation13 + $0x44]]
        %v3184 = vstv %s3183
        %v3185 = vmul.f32 %v3184, %v3132
        %v3186 = vmul.f32 %v3184, %v3134
        %v3187 = vmul.f32 %v3184, %v3136
        %v3191 = vrot.slane %v3185, 2
        %v3192 = vrot.slane %v3186, 2
        %v3193 = vsel %vm531, %v3191, %v3192
        %v3194 = vrot.slane %v3187, 2
        %v3195 = vsel %vm531, %v3192, %v3194
        %v3198 = vadd.f32 %v3164, %v3193
        %v3199 = vadd.f32 %v3165, %v3195
        %s3200 = sld [smem:[#allocation13 + $0xa6]]
        %v3201 = vstv %s3200
        %v3202 = vmul.f32 %v3201, %v3132
        %v3203 = vmul.f32 %v3201, %v3134
        %v3204 = vmul.f32 %v3201, %v3136
        %v3208 = vrot.slane %v3202, 2
        %v3209 = vrot.slane %v3203, 2
        %v3210 = vsel %vm531, %v3208, %v3209
        %v3211 = vrot.slane %v3204, 2
        %v3212 = vsel %vm531, %v3209, %v3211
        %v3215 = vadd.f32 %v3181, %v3210
        %v3216 = vadd.f32 %v3182, %v3212
        %s3217 = sld [smem:[#allocation13 + $0x4b]]
        %v3218 = vstv %s3217
        %v3219 = vmul.f32 %v3218, %v3132
        %v3220 = vmul.f32 %v3218, %v3134
        %v3221 = vmul.f32 %v3218, %v3136
        %v3225 = vrot.slane %v3219, 3
        %v3226 = vrot.slane %v3220, 3
        %v3227 = vsel %vm566, %v3225, %v3226
        %v3228 = vrot.slane %v3221, 3
        %v3229 = vsel %vm566, %v3226, %v3228
        %v3232 = vadd.f32 %v3198, %v3227
        %v3233 = vadd.f32 %v3199, %v3229
        %s3234 = sld [smem:[#allocation13 + $0xad]]
        %v3235 = vstv %s3234
        %v3236 = vmul.f32 %v3235, %v3132
        %v3237 = vmul.f32 %v3235, %v3134
        %v3238 = vmul.f32 %v3235, %v3136
        %v3242 = vrot.slane %v3236, 3
        %v3243 = vrot.slane %v3237, 3
        %v3244 = vsel %vm566, %v3242, %v3243
        %v3245 = vrot.slane %v3238, 3
        %v3246 = vsel %vm566, %v3243, %v3245
        %v3249 = vadd.f32 %v3215, %v3244
        %v3250 = vadd.f32 %v3216, %v3246
        %s3251 = sld [smem:[#allocation13 + $0x52]]
        %v3252 = vstv %s3251
        %v3253 = vmul.f32 %v3252, %v3132
        %v3254 = vmul.f32 %v3252, %v3134
        %v3255 = vmul.f32 %v3252, %v3136
        %v3259 = vrot.slane %v3253, 4
        %v3260 = vrot.slane %v3254, 4
        %v3261 = vsel %vm601, %v3259, %v3260
        %v3262 = vrot.slane %v3255, 4
        %v3263 = vsel %vm601, %v3260, %v3262
        %v3266 = vadd.f32 %v3232, %v3261
        %v3267 = vadd.f32 %v3233, %v3263
        %s3268 = sld [smem:[#allocation13 + $0xb4]]
        %v3269 = vstv %s3268
        %v3270 = vmul.f32 %v3269, %v3132
        %v3271 = vmul.f32 %v3269, %v3134
        %v3272 = vmul.f32 %v3269, %v3136
        %v3276 = vrot.slane %v3270, 4
        %v3277 = vrot.slane %v3271, 4
        %v3278 = vsel %vm601, %v3276, %v3277
        %v3279 = vrot.slane %v3272, 4
        %v3280 = vsel %vm601, %v3277, %v3279
        %v3283 = vadd.f32 %v3249, %v3278
        %v3284 = vadd.f32 %v3250, %v3280
        %s3285 = sld [smem:[#allocation13 + $0x59]]
        %v3286 = vstv %s3285
        %v3287 = vmul.f32 %v3286, %v3132
        %v3288 = vmul.f32 %v3286, %v3134
        %v3289 = vmul.f32 %v3286, %v3136
        %v3293 = vrot.slane %v3287, 5
        %v3294 = vrot.slane %v3288, 5
        %v3295 = vsel %vm636, %v3293, %v3294
        %v3296 = vrot.slane %v3289, 5
        %v3297 = vsel %vm636, %v3294, %v3296
        %v3300 = vadd.f32 %v3266, %v3295
        %v3301 = vadd.f32 %v3267, %v3297
        %s3302 = sld [smem:[#allocation13 + $0xbb]]
        %v3303 = vstv %s3302
        %v3304 = vmul.f32 %v3303, %v3132
        %v3305 = vmul.f32 %v3303, %v3134
        %v3306 = vmul.f32 %v3303, %v3136
        %v3310 = vrot.slane %v3304, 5
        %v3311 = vrot.slane %v3305, 5
        %v3312 = vsel %vm636, %v3310, %v3311
        %v3313 = vrot.slane %v3306, 5
        %v3314 = vsel %vm636, %v3311, %v3313
        %v3317 = vadd.f32 %v3283, %v3312
        %v3318 = vadd.f32 %v3284, %v3314
        %s3319 = sld [smem:[#allocation13 + $0x60]]
        %v3320 = vstv %s3319
        %v3321 = vmul.f32 %v3320, %v3132
        %v3322 = vmul.f32 %v3320, %v3134
        %v3323 = vmul.f32 %v3320, %v3136
        %v3327 = vrot.slane %v3321, 6
        %v3328 = vrot.slane %v3322, 6
        %v3329 = vsel %vm671, %v3327, %v3328
        %v3330 = vrot.slane %v3323, 6
        %v3331 = vsel %vm671, %v3328, %v3330
        %v3334 = vadd.f32 %v3300, %v3329
        %v3335 = vadd.f32 %v3301, %v3331
        %s3336 = sld [smem:[#allocation13 + $0xc2]]
        %v3337 = vstv %s3336
        %v3338 = vmul.f32 %v3337, %v3132
        %v3339 = vmul.f32 %v3337, %v3134
        %v3340 = vmul.f32 %v3337, %v3136
        %v3344 = vrot.slane %v3338, 6
        %v3345 = vrot.slane %v3339, 6
        %v3346 = vsel %vm671, %v3344, %v3345
        %v3347 = vrot.slane %v3340, 6
        %v3348 = vsel %vm671, %v3345, %v3347
        %v3351 = vadd.f32 %v3317, %v3346
        %v3352 = vadd.f32 %v3318, %v3348
        %3353 = vrot.lane.b32.xlu0 %v2024, 125
        %v3354 = vpop.permute.xlu0 %3353
        %3355 = vrot.lane.b32.xlu0 %v2025, 125
        %v3356 = vpop.permute.xlu0 %3355
        %3357 = vrot.lane.b32.xlu0 %v2026, 125
        %v3358 = vpop.permute.xlu0 %3357
        %s3359 = sld [smem:[#allocation13 + $0x37]]
        %v3360 = vstv %s3359
        %v3361 = vmul.f32 %v3360, %v3354
        %v3362 = vmul.f32 %v3360, %v3356
        %v3363 = vadd.f32 %v3334, %v3361
        %v3364 = vadd.f32 %v3335, %v3362
        %s3365 = sld [smem:[#allocation13 + $0x99]]
        %v3366 = vstv %s3365
        %v3367 = vmul.f32 %v3366, %v3354
        %v3368 = vmul.f32 %v3366, %v3356
        %v3369 = vadd.f32 %v3351, %v3367
        %v3370 = vadd.f32 %v3352, %v3368
        %s3371 = sld [smem:[#allocation13 + $0x3e]]
        %v3372 = vstv %s3371
        %v3373 = vmul.f32 %v3372, %v3354
        %v3374 = vmul.f32 %v3372, %v3356
        %v3375 = vmul.f32 %v3372, %v3358
        %v3379 = vrot.slane %v3373, 1
        %v3380 = vrot.slane %v3374, 1
        %v3381 = vsel %vm496, %v3379, %v3380
        %v3382 = vrot.slane %v3375, 1
        %v3383 = vsel %vm496, %v3380, %v3382
        %v3386 = vadd.f32 %v3363, %v3381
        %v3387 = vadd.f32 %v3364, %v3383
        %s3388 = sld [smem:[#allocation13 + $0xa0]]
        %v3389 = vstv %s3388
        %v3390 = vmul.f32 %v3389, %v3354
        %v3391 = vmul.f32 %v3389, %v3356
        %v3392 = vmul.f32 %v3389, %v3358
        %v3396 = vrot.slane %v3390, 1
        %v3397 = vrot.slane %v3391, 1
        %v3398 = vsel %vm496, %v3396, %v3397
        %v3399 = vrot.slane %v3392, 1
        %v3400 = vsel %vm496, %v3397, %v3399
        %v3403 = vadd.f32 %v3369, %v3398
        %v3404 = vadd.f32 %v3370, %v3400
        %s3405 = sld [smem:[#allocation13 + $0x45]]
        %v3406 = vstv %s3405
        %v3407 = vmul.f32 %v3406, %v3354
        %v3408 = vmul.f32 %v3406, %v3356
        %v3409 = vmul.f32 %v3406, %v3358
        %v3413 = vrot.slane %v3407, 2
        %v3414 = vrot.slane %v3408, 2
        %v3415 = vsel %vm531, %v3413, %v3414
        %v3416 = vrot.slane %v3409, 2
        %v3417 = vsel %vm531, %v3414, %v3416
        %v3420 = vadd.f32 %v3386, %v3415
        %v3421 = vadd.f32 %v3387, %v3417
        %s3422 = sld [smem:[#allocation13 + $0xa7]]
        %v3423 = vstv %s3422
        %v3424 = vmul.f32 %v3423, %v3354
        %v3425 = vmul.f32 %v3423, %v3356
        %v3426 = vmul.f32 %v3423, %v3358
        %v3430 = vrot.slane %v3424, 2
        %v3431 = vrot.slane %v3425, 2
        %v3432 = vsel %vm531, %v3430, %v3431
        %v3433 = vrot.slane %v3426, 2
        %v3434 = vsel %vm531, %v3431, %v3433
        %v3437 = vadd.f32 %v3403, %v3432
        %v3438 = vadd.f32 %v3404, %v3434
        %s3439 = sld [smem:[#allocation13 + $0x4c]]
        %v3440 = vstv %s3439
        %v3441 = vmul.f32 %v3440, %v3354
        %v3442 = vmul.f32 %v3440, %v3356
        %v3443 = vmul.f32 %v3440, %v3358
        %v3447 = vrot.slane %v3441, 3
        %v3448 = vrot.slane %v3442, 3
        %v3449 = vsel %vm566, %v3447, %v3448
        %v3450 = vrot.slane %v3443, 3
        %v3451 = vsel %vm566, %v3448, %v3450
        %v3454 = vadd.f32 %v3420, %v3449
        %v3455 = vadd.f32 %v3421, %v3451
        %s3456 = sld [smem:[#allocation13 + $0xae]]
        %v3457 = vstv %s3456
        %v3458 = vmul.f32 %v3457, %v3354
        %v3459 = vmul.f32 %v3457, %v3356
        %v3460 = vmul.f32 %v3457, %v3358
        %v3464 = vrot.slane %v3458, 3
        %v3465 = vrot.slane %v3459, 3
        %v3466 = vsel %vm566, %v3464, %v3465
        %v3467 = vrot.slane %v3460, 3
        %v3468 = vsel %vm566, %v3465, %v3467
        %v3471 = vadd.f32 %v3437, %v3466
        %v3472 = vadd.f32 %v3438, %v3468
        %s3473 = sld [smem:[#allocation13 + $0x53]]
        %v3474 = vstv %s3473
        %v3475 = vmul.f32 %v3474, %v3354
        %v3476 = vmul.f32 %v3474, %v3356
        %v3477 = vmul.f32 %v3474, %v3358
        %v3481 = vrot.slane %v3475, 4
        %v3482 = vrot.slane %v3476, 4
        %v3483 = vsel %vm601, %v3481, %v3482
        %v3484 = vrot.slane %v3477, 4
        %v3485 = vsel %vm601, %v3482, %v3484
        %v3488 = vadd.f32 %v3454, %v3483
        %v3489 = vadd.f32 %v3455, %v3485
        %s3490 = sld [smem:[#allocation13 + $0xb5]]
        %v3491 = vstv %s3490
        %v3492 = vmul.f32 %v3491, %v3354
        %v3493 = vmul.f32 %v3491, %v3356
        %v3494 = vmul.f32 %v3491, %v3358
        %v3498 = vrot.slane %v3492, 4
        %v3499 = vrot.slane %v3493, 4
        %v3500 = vsel %vm601, %v3498, %v3499
        %v3501 = vrot.slane %v3494, 4
        %v3502 = vsel %vm601, %v3499, %v3501
        %v3505 = vadd.f32 %v3471, %v3500
        %v3506 = vadd.f32 %v3472, %v3502
        %s3507 = sld [smem:[#allocation13 + $0x5a]]
        %v3508 = vstv %s3507
        %v3509 = vmul.f32 %v3508, %v3354
        %v3510 = vmul.f32 %v3508, %v3356
        %v3511 = vmul.f32 %v3508, %v3358
        %v3515 = vrot.slane %v3509, 5
        %v3516 = vrot.slane %v3510, 5
        %v3517 = vsel %vm636, %v3515, %v3516
        %v3518 = vrot.slane %v3511, 5
        %v3519 = vsel %vm636, %v3516, %v3518
        %v3522 = vadd.f32 %v3488, %v3517
        %v3523 = vadd.f32 %v3489, %v3519
        %s3524 = sld [smem:[#allocation13 + $0xbc]]
        %v3525 = vstv %s3524
        %v3526 = vmul.f32 %v3525, %v3354
        %v3527 = vmul.f32 %v3525, %v3356
        %v3528 = vmul.f32 %v3525, %v3358
        %v3532 = vrot.slane %v3526, 5
        %v3533 = vrot.slane %v3527, 5
        %v3534 = vsel %vm636, %v3532, %v3533
        %v3535 = vrot.slane %v3528, 5
        %v3536 = vsel %vm636, %v3533, %v3535
        %v3539 = vadd.f32 %v3505, %v3534
        %v3540 = vadd.f32 %v3506, %v3536
        %s3541 = sld [smem:[#allocation13 + $0x61]]
        %v3542 = vstv %s3541
        %v3543 = vmul.f32 %v3542, %v3354
        %v3544 = vmul.f32 %v3542, %v3356
        %v3545 = vmul.f32 %v3542, %v3358
        %v3549 = vrot.slane %v3543, 6
        %v3550 = vrot.slane %v3544, 6
        %v3551 = vsel %vm671, %v3549, %v3550
        %v3552 = vrot.slane %v3545, 6
        %v3553 = vsel %vm671, %v3550, %v3552
        %v3556 = vadd.f32 %v3522, %v3551
        %v3557 = vadd.f32 %v3523, %v3553
        %s3558 = sld [smem:[#allocation13 + $0xc3]]
        %v3559 = vstv %s3558
        %v3560 = vmul.f32 %v3559, %v3354
        %v3561 = vmul.f32 %v3559, %v3356
        %v3562 = vmul.f32 %v3559, %v3358
        %v3566 = vrot.slane %v3560, 6
        %v3567 = vrot.slane %v3561, 6
        %v3568 = vsel %vm671, %v3566, %v3567
        %v3569 = vrot.slane %v3562, 6
        %v3570 = vsel %vm671, %v3567, %v3569
        %v3573 = vadd.f32 %v3539, %v3568
        %v3574 = vadd.f32 %v3540, %v3570
        %s3575 = sld [smem:[#allocation14]]
        %v3576 = vstv %s3575
        %v3577 = vadd.f32 %v3556, %v3576
        %v3578 = vadd.f32 %v3557, %v3576
        %v3579 = vmul.f32 %v3577, %v431
        %v3580 = vmul.f32 %v3578, %v432
        %3581 = vst.msk [vmem:[%s373] sm:$0xff] %vm461, %v3579
        %3582 = vst.msk [vmem:[%s373 + $0x8] sm:$0xff] %vm461, %v3580
        %s3583 = sld [smem:[#allocation14 + $0x1]]
        %v3584 = vstv %s3583
        %v3585 = vadd.f32 %v3573, %v3584
        %v3586 = vadd.f32 %v3574, %v3584
        %v3587 = vmul.f32 %v3585, %v447
        %v3588 = vmul.f32 %v3586, %v448
        %s3589 = scalar_lea.vmem %s373, 16 [#allocation16]
        %3590 = vst.msk [vmem:[%s3589] sm:$0xff] %vm461, %v3587
        %3591 = vst.msk [vmem:[%s3589 + $0x8] sm:$0xff] %vm461, %v3588
        %s3592 = sand.u32 %s188, 1
        %s3593 = scalar_lea.sflag [#allocation5], %s3592
        %s3594 = sand.u32 %s188, 1
        %s3595 = smul.addr %s3594, 32
        %s3596 = scalar_lea.vmem [#allocation16], %s3595
        // Predicated region
        $region77: #{tpu_custom_call.1} parent=47 // pred_check
          %p3597 = pneg %p198
        $region78: #{tpu_custom_call.1} parent=47 // pred_check_branch
          %3599 = sbr.rel (%p3597) target = $region80
        $region79: #{tpu_custom_call.1} parent=47 // pred_region
          %s3601 = ssub.s32 512, 512
          %3602 = vsyncadd %s3593, %s3601
          %s3603 = smul.addr %s28, 4
          %s3604 = smul.addr %s3603, 128
          %s3605 = scalar_lea.hbm %s7, %s3604
          %s3606 = sshll.u32 %s3596, 4
          %s3607 = int_to_ptr.vmem [resolvable:$true] %s3606
          %3612 = dma.vmem_to_hbm [thread:$0]  %s3607, 512, %s3605, %s3593, 128, 128, 8
        $region80: #{tpu_custom_call.1} parent=47 // pred_fallthru
          _
      $region48: #{tpu_custom_call.1} parent=5 // pred_fallthru
        _
      %p3613 = scmp.le.s32.totalorder 2, %s23
      // Predicated region
      $region81: #{tpu_custom_call.1} parent=5 // pred_check
        %p3614 = pneg %p3613
      $region82: #{tpu_custom_call.1} parent=5 // pred_check_branch
        %3616 = sbr.rel (%p3614) target = $region84
      $region83: #{tpu_custom_call.1} parent=5 // pred_region
        %s3617 = ssub.s32 %s23, 2
        // Predicated region
        $region85: #{tpu_custom_call.1} parent=83 // pred_check
          %p3618 = pneg %p204
        $region86: #{tpu_custom_call.1} parent=83 // pred_check_branch
          %3620 = sbr.rel (%p3618) target = $region88
        $region87: #{tpu_custom_call.1} parent=83 // pred_region
          %s3621 = sand.u32 %s189, 1
          %s3622 = scalar_lea.sflag [#allocation5], %s3621
          %s3623 = sand.u32 %s189, 1
          %s3624 = smul.addr %s3623, 32
          %s3625 = scalar_lea.vmem [#allocation16], %s3624
          %3626 = dma.done %s3622, 512
        $region88: #{tpu_custom_call.1} parent=83 // pred_fallthru
          _
      $region84: #{tpu_custom_call.1} parent=5 // pred_fallthru
        _
    $region6: #{tpu_custom_call.1} parent=1 // loop_footer
      %s27 = sadd.s32 1, %s23
    $region7: #{tpu_custom_call.1} parent=1 // loop_footer_branch
      %22 = sbr.rel target = $region3
    $region8: #{tpu_custom_call.1} parent=1 // loop_exit
      _
    %3627 = vsyncpa [#allocation4], 1
    %s3628 = scalar_lea.sflag [#allocation4], 1
    %3629 = vsyncpa %s3628, 1
    %3630 = vsyncpa [#allocation5], 1
    %s3631 = scalar_lea.sflag [#allocation5], 1
    %3632 = vsyncpa %s3631, 1
    %3633 = vsyncpa [#allocation6], 1
    %s3634 = scalar_lea.sflag [#allocation6], 1
    %3635 = vsyncpa %s3634, 1
    %3636 = vsyncpa [#allocation9], 1
    %3637 = vsyncpa [#allocation12], 1
    %3638 = vsyncpa [#allocation15], 1

</llo_original>
